<compile_context>
chip_gen: v7x
topology: tpu7x:2x2x1
jax: 0.10.0
libtpu: 0.0.40
codegen_flags: <defaults>
</compile_context>

<pallas_src>
import functools
import math

import jax
import jax.numpy as jnp
from jax import lax
from jax.experimental import pallas as pl
from jax.experimental.pallas import tpu as pltpu

NHEAD = 8           # nn.TransformerEncoderLayer(nhead=8)
FFN_DIM = 2048      # PyTorch default dim_feedforward
EPS = 1e-5          # PyTorch default layer_norm_eps


def _layernorm(x, gamma, beta):
    mu = jnp.mean(x, axis=-1, keepdims=True)
    var = jnp.mean(jnp.square(x - mu), axis=-1, keepdims=True)
    return (x - mu) * lax.rsqrt(var + EPS) * gamma + beta


def encoder_kernel(x_ref, wqkv_ref, bqkv_ref, wo_ref, w1_ref, b1_ref, w2_ref,
                   vec_ref, fn_ref, o_ref, *, tb, seq, nhead):
    """grid = (batch_tile, layer); one post-norm encoder layer per grid step.

    The running activation lives in the output block `o_ref` (its block index
    is constant across the layer axis, so it stays resident in VMEM); the
    final nn.LayerNorm is fused into the last layer step.
    """
    layer = pl.program_id(1)
    n_layers = pl.num_programs(1)

    @pl.when(layer == 0)
    def _():
        o_ref[...] = x_ref[...]          # seed the resident activation

    x = o_ref[...].astype(jnp.float32)   # (M, E) f32, M = tb*seq
    M, E = x.shape
    Dh = E // nhead
    scale = 1.0 / math.sqrt(Dh)

    vecs = vec_ref[...]                  # (6, E) f32: bo, b2, g1, be1, g2, be2
    bo, b2 = vecs[0:1, :], vecs[1:2, :]
    g1, be1 = vecs[2:3, :], vecs[3:4, :]
    g2, be2 = vecs[4:5, :], vecs[5:6, :]

    # ---- fused QKV projection (bf16 MXU operands, f32 accumulate) ----------
    xb = x.astype(jnp.bfloat16)
    qkv = jnp.dot(xb, wqkv_ref[...],
                  preferred_element_type=jnp.float32) + bqkv_ref[...]   # (M, 3E)
    q3 = qkv[:, 0:E].astype(jnp.bfloat16).reshape(tb, seq, E)
    k3 = qkv[:, E:2 * E].astype(jnp.bfloat16).reshape(tb, seq, E)
    v3 = qkv[:, 2 * E:3 * E].astype(jnp.bfloat16).reshape(tb, seq, E)

    # ---- multi-head self-attention, batched over the TB batch elements -----
    # Per-head output projection is accumulated (no lane-wise concat).
    wo = wo_ref[...]                     # (E, E) bf16, natural (out, in) layout
    attn = jnp.zeros((M, E), jnp.float32)
    for h in range(nhead):
        sl = slice(h * Dh, (h + 1) * Dh)
        s = jnp.einsum('bqd,bkd->bqk', q3[:, :, sl], k3[:, :, sl],
                       preferred_element_type=jnp.float32) * scale      # (tb,S,S)
        s = s - jnp.max(s, axis=-1, keepdims=True)                      # stable softmax
        p = jnp.exp(s)
        p = p * pl.reciprocal(jnp.sum(p, axis=-1, keepdims=True), approx=True)
        ctx = jnp.einsum('bqk,bkd->bqd', p.astype(jnp.bfloat16), v3[:, :, sl],
                         preferred_element_type=jnp.float32)            # (tb,S,Dh)
        attn = attn + lax.dot_general(
            ctx.reshape(M, Dh).astype(jnp.bfloat16), wo[:, sl],
            (((1,), (1,)), ((), ())),
            preferred_element_type=jnp.float32)                         # (M, E)
    attn = attn + bo

    # residual + LayerNorm 1 (post-norm), f32 on the VPU
    x1 = _layernorm(x + attn, g1, be1)

    # ---- feed-forward -------------------------------------------------------
    h1 = jnp.dot(x1.astype(jnp.bfloat16), w1_ref[...],
                 preferred_element_type=jnp.float32) + b1_ref[...]       # (M, F)
    h1 = jnp.maximum(h1, 0.0)                                            # ReLU
    ff = lax.dot_general(h1.astype(jnp.bfloat16), w2_ref[...],           # w2 (E,F)
                         (((1,), (1,)), ((), ())),
                         preferred_element_type=jnp.float32) + b2        # (M, E)

    x2 = _layernorm(x1 + ff, g2, be2)

    @pl.when(layer < n_layers - 1)
    def _():
        o_ref[...] = x2.astype(o_ref.dtype)

    @pl.when(layer == n_layers - 1)
    def _():
        fn = fn_ref[...]                 # (2, E): final norm gamma, beta
        o_ref[...] = _layernorm(x2, fn[0:1, :], fn[1:2, :]).astype(o_ref.dtype)


def prepare_params(layer_params, final_norm):
    """Host-side packing: fuse QKV, pre-transpose w1, keep wo/w2 natural,
    stack per layer, pack tiny vectors into one slab, bf16 MXU weights."""
    def stack(fn, dtype):
        return jnp.stack([fn(p) for p in layer_params]).astype(dtype)

    params = dict(
        wqkvT=stack(lambda p: jnp.concatenate(
            [p['wq'].T, p['wk'].T, p['wv'].T], axis=1), jnp.bfloat16),   # (L,E,3E)
        bqkv=stack(lambda p: jnp.concatenate(
            [p['bq'], p['bk'], p['bv']], axis=1), jnp.float32),          # (L,1,3E)
        wo=stack(lambda p: p['wo'], jnp.bfloat16),                       # (L,E,E)
        w1T=stack(lambda p: p['w1'].T, jnp.bfloat16),                    # (L,E,F)
        b1=stack(lambda p: p['b1'], jnp.float32),                        # (L,1,F)
        w2=stack(lambda p: p['w2'], jnp.bfloat16),                       # (L,E,F) natural
        vecs=stack(lambda p: jnp.concatenate(
            [p['bo'], p['b2'], p['g1'], p['be1'], p['g2'], p['be2']],
            axis=0), jnp.float32),                                       # (L,6,E)
    )
    gf, bf = final_norm
    params['fnorm'] = jnp.concatenate([gf, bf], axis=0).astype(jnp.float32)  # (2,E)
    return params


def _pick_batch_tile(B, S, target_rows=256):
    """Largest divisor of B with TB*S <= target_rows (MXU M-tile target)."""
    tb = max(1, min(B, target_rows // max(1, S)))
    while B % tb:
        tb -= 1
    return tb


def transformer_encoder(x, params, *, tb=None):
    B, S, E = x.shape
    L = params['wqkvT'].shape[0]
    F = params['w1T'].shape[2]
    if tb is None:
        tb = _pick_batch_tile(B, S)
    M = tb * S
    x2d = x.reshape(B * S, E)            # fold batch into the matmul M axis

    xmap = lambda i, l: (i, 0)           # activation/output: constant across layers
    wmap = lambda i, l: (l, 0, 0)        # per-layer params: indexed by layer axis

    kernel = functools.partial(encoder_kernel, tb=tb, seq=S, nhead=NHEAD)

    out = pl.pallas_call(
        kernel,
        out_shape=jax.ShapeDtypeStruct((B * S, E), x.dtype),
        grid=(B // tb, L),
        in_specs=[
            pl.BlockSpec((M, E), xmap),              # x (flattened)
            pl.BlockSpec((None, E, 3 * E), wmap),    # fused QKV weight (pre-T)
            pl.BlockSpec((None, 1, 3 * E), wmap),    # fused QKV bias
            pl.BlockSpec((None, E, E), wmap),        # wo (natural out,in)
            pl.BlockSpec((None, E, F), wmap),        # w1T
            pl.BlockSpec((None, 1, F), wmap),        # b1
            pl.BlockSpec((None, E, F), wmap),        # w2 (natural, trans-B dot)
            pl.BlockSpec((None, 6, E), wmap),        # packed tiny vectors
            pl.BlockSpec((2, E), lambda i, l: (0, 0)),  # final norm gamma/beta
        ],
        out_specs=pl.BlockSpec((M, E), xmap),
        compiler_params=pltpu.CompilerParams(
            dimension_semantics=("parallel", "arbitrary")),
    )(x2d, params['wqkvT'], params['bqkv'], params['wo'], params['w1T'],
      params['b1'], params['w2'], params['vecs'], params['fnorm'])
    return out.reshape(B, S, E)


def init_params(key, E, F, num_layers):
    """Deterministic synthetic parameters (PyTorch shapes; in_proj split Q/K/V)."""
    def u(k, shape, s):
        return jax.random.uniform(k, shape, jnp.float32, -s, s)

    layers = []
    sa = 1.0 / math.sqrt(E)
    sf = 1.0 / math.sqrt(F)
    for _ in range(num_layers):
        key, *ks = jax.random.split(key, 13)
        layers.append(dict(
            wq=u(ks[0], (E, E), sa), wk=u(ks[1], (E, E), sa), wv=u(ks[2], (E, E), sa),
            bq=u(ks[3], (1, E), sa), bk=u(ks[4], (1, E), sa), bv=u(ks[5], (1, E), sa),
            wo=u(ks[6], (E, E), sa), bo=u(ks[7], (1, E), sa),
            w1=u(ks[8], (F, E), sa), b1=u(ks[9], (1, F), sa),
            w2=u(ks[10], (E, F), sf), b2=u(ks[11], (1, E), sf),
            g1=jnp.ones((1, E), jnp.float32), be1=jnp.zeros((1, E), jnp.float32),
            g2=jnp.ones((1, E), jnp.float32), be2=jnp.zeros((1, E), jnp.float32),
        ))
    final_norm = (jnp.ones((1, E), jnp.float32), jnp.zeros((1, E), jnp.float32))
    return layers, final_norm


def reference_forward(x, layer_params, final_norm):
    """Pure-JAX f32 reference mirroring nn.TransformerEncoderLayer (eval mode)."""
    hp = lax.Precision.HIGHEST
    B, S, E = x.shape
    Dh = E // NHEAD

    def ln(y, g, b):
        mu = y.mean(-1, keepdims=True)
        var = ((y - mu) ** 2).mean(-1, keepdims=True)
        return (y - mu) / jnp.sqrt(var + EPS) * g + b

    for p in layer_params:
        xt = x.reshape(B * S, E)
        q = jnp.dot(xt, p['wq'].T, precision=hp) + p['bq']
        k = jnp.dot(xt, p['wk'].T, precision=hp) + p['bk']
        v = jnp.dot(xt, p['wv'].T, precision=hp) + p['bv']
        qh = q.reshape(B, S, NHEAD, Dh).transpose(0, 2, 1, 3)
        kh = k.reshape(B, S, NHEAD, Dh).transpose(0, 2, 1, 3)
        vh = v.reshape(B, S, NHEAD, Dh).transpose(0, 2, 1, 3)
        s = jnp.einsum('bhsd,bhtd->bhst', qh, kh, precision=hp) / math.sqrt(Dh)
        pa = jax.nn.softmax(s, axis=-1)
        o = jnp.einsum('bhst,bhtd->bhsd', pa, vh, precision=hp)
        o = o.transpose(0, 2, 1, 3).reshape(B * S, E)
        attn = jnp.dot(o, p['wo'].T, precision=hp) + p['bo']
        x1 = ln(xt + attn, p['g1'], p['be1'])
        h1 = jax.nn.relu(jnp.dot(x1, p['w1'].T, precision=hp) + p['b1'])
        ff = jnp.dot(h1, p['w2'].T, precision=hp) + p['b2']
        x = ln(x1 + ff, p['g2'], p['be2']).reshape(B, S, E)
    g, b = final_norm
    return ln(x, g, b)


if __name__ == "__main__":
    hidden_dim, num_layers = 32, 2          # nhead=8 -> head_dim=4
    B, S = 2, 8

    key = jax.random.PRNGKey(0)
    kx, kp = jax.random.split(key)
    x = jax.random.normal(kx, (B, S, hidden_dim), jnp.float32)
    layer_params, final_norm = init_params(kp, hidden_dim, FFN_DIM, num_layers)

    params = prepare_params(layer_params, final_norm)
    out = transformer_encoder(x, params)
    out = jax.block_until_ready(out)

    assert out.shape == (B, S, hidden_dim)
    assert bool(jnp.all(jnp.isfinite(out)))

    ref = reference_forward(x, layer_params, final_norm)
    if not jnp.allclose(out, ref, atol=5e-2, rtol=5e-2):
        raise AssertionError("Pallas output does not match JAX reference")

    print("KERNEL_OK")
</pallas_src>

<mosaic_0001>
module attributes {stable_mosaic.version = 11 : i64} {
  func.func @encoder_kernel(%arg0: i32, %arg1: i32, %arg2: memref<16x32xf32, #tpu.memory_space<vmem>>, %arg3: memref<1x32x96xbf16, #tpu.memory_space<vmem>>, %arg4: memref<1x1x96xf32, #tpu.memory_space<vmem>>, %arg5: memref<1x32x32xbf16, #tpu.memory_space<vmem>>, %arg6: memref<1x32x2048xbf16, #tpu.memory_space<vmem>>, %arg7: memref<1x1x2048xf32, #tpu.memory_space<vmem>>, %arg8: memref<1x32x2048xbf16, #tpu.memory_space<vmem>>, %arg9: memref<1x6x32xf32, #tpu.memory_space<vmem>>, %arg10: memref<2x32xf32, #tpu.memory_space<vmem>>, %arg11: memref<16x32xf32, #tpu.memory_space<vmem>>) attributes {dimension_semantics = [#tpu.dimension_semantics<parallel>, #tpu.dimension_semantics<arbitrary>], iteration_bounds = array<i64: 1, 2>, scalar_prefetch = 0 : i64, scratch_operands = 0 : i64, tpu.core_type = #tpu.core_type<tc>, window_params = [{transform_indices = @transform_0, window_bounds = array<i64: 16, 32>}, {transform_indices = @transform_1, window_bounds = array<i64: 1, 32, 96>}, {transform_indices = @transform_2, window_bounds = array<i64: 1, 1, 96>}, {transform_indices = @transform_3, window_bounds = array<i64: 1, 32, 32>}, {transform_indices = @transform_4, window_bounds = array<i64: 1, 32, 2048>}, {transform_indices = @transform_5, window_bounds = array<i64: 1, 1, 2048>}, {transform_indices = @transform_6, window_bounds = array<i64: 1, 32, 2048>}, {transform_indices = @transform_7, window_bounds = array<i64: 1, 6, 32>}, {pipeline_mode = #tpu.pipeline_mode<synchronous>, transform_indices = @transform_8, window_bounds = array<i64: 2, 32>}, {transform_indices = @transform_9, window_bounds = array<i64: 16, 32>}]} {
    %c0_i32 = arith.constant 0 : i32
    %0 = arith.cmpi eq, %arg1, %c0_i32 : i32
    %1 = arith.extui %0 : i1 to i32
    %c0_i32_0 = arith.constant 0 : i32
    %2 = arith.cmpi ne, %1, %c0_i32_0 : i32
    scf.if %2 {
      %c0_88 = arith.constant 0 : index
      %c0_89 = arith.constant 0 : index
      %286 = vector.load %arg2[%c0_88, %c0_89] : memref<16x32xf32, #tpu.memory_space<vmem>>, vector<16x32xf32>
      %c0_90 = arith.constant 0 : index
      %c0_91 = arith.constant 0 : index
      %287 = vector.load %arg11[%c0_90, %c0_91] : memref<16x32xf32, #tpu.memory_space<vmem>>, vector<16x32xf32>
      tpu.vector_store %arg11[%c0_90, %c0_91], %286 {strides = array<i32>} : memref<16x32xf32, #tpu.memory_space<vmem>>, vector<16x32xf32>,
    } else {
    }
    %c0 = arith.constant 0 : index
    %c0_1 = arith.constant 0 : index
    %3 = vector.load %arg11[%c0, %c0_1] : memref<16x32xf32, #tpu.memory_space<vmem>>, vector<16x32xf32>
    %c0_2 = arith.constant 0 : index
    %c0_3 = arith.constant 0 : index
    %c0_4 = arith.constant 0 : index
    %4 = vector.load %arg9[%c0_2, %c0_3, %c0_4] : memref<1x6x32xf32, #tpu.memory_space<vmem>>, vector<1x6x32xf32>
    %5 = vector.shape_cast %4 : vector<1x6x32xf32> to vector<6x32xf32>
    %6 = vector.extract_strided_slice %5 {offsets = [0, 0], sizes = [1, 32], strides = [1, 1]} : vector<6x32xf32> to vector<1x32xf32>
    %7 = vector.extract_strided_slice %5 {offsets = [1, 0], sizes = [1, 32], strides = [1, 1]} : vector<6x32xf32> to vector<1x32xf32>
    %8 = vector.extract_strided_slice %5 {offsets = [2, 0], sizes = [1, 32], strides = [1, 1]} : vector<6x32xf32> to vector<1x32xf32>
    %9 = vector.extract_strided_slice %5 {offsets = [3, 0], sizes = [1, 32], strides = [1, 1]} : vector<6x32xf32> to vector<1x32xf32>
    %10 = vector.extract_strided_slice %5 {offsets = [4, 0], sizes = [1, 32], strides = [1, 1]} : vector<6x32xf32> to vector<1x32xf32>
    %11 = vector.extract_strided_slice %5 {offsets = [5, 0], sizes = [1, 32], strides = [1, 1]} : vector<6x32xf32> to vector<1x32xf32>
    %12 = arith.truncf %3 : vector<16x32xf32> to vector<16x32xbf16>
    %c0_5 = arith.constant 0 : index
    %c0_6 = arith.constant 0 : index
    %c0_7 = arith.constant 0 : index
    %13 = vector.load %arg3[%c0_5, %c0_6, %c0_7] : memref<1x32x96xbf16, #tpu.memory_space<vmem>>, vector<1x32x96xbf16>
    %14 = vector.shape_cast %13 : vector<1x32x96xbf16> to vector<32x96xbf16>
    %cst = arith.constant dense<0.000000e+00> : vector<16x96xf32>
    %15 = tpu.matmul %12, %14, %cst {dimension_numbers = #tpu.dot_dimension_numbers<[1], [0], [0], [1], [0, 0, 1, 1], [], []>} : vector<16x32xbf16>, vector<32x96xbf16>, vector<16x96xf32> -> vector<16x96xf32>
    %c0_8 = arith.constant 0 : index
    %c0_9 = arith.constant 0 : index
    %c0_10 = arith.constant 0 : index
    %16 = vector.load %arg4[%c0_8, %c0_9, %c0_10] : memref<1x1x96xf32, #tpu.memory_space<vmem>>, vector<1x1x96xf32>
    %17 = vector.shape_cast %16 : vector<1x1x96xf32> to vector<1x96xf32>
    %18 = vector.broadcast %17 : vector<1x96xf32> to vector<16x96xf32>
    %19 = arith.addf %15, %18 : vector<16x96xf32>
    %20 = vector.extract_strided_slice %19 {offsets = [0, 0], sizes = [16, 32], strides = [1, 1]} : vector<16x96xf32> to vector<16x32xf32>
    %21 = arith.truncf %20 : vector<16x32xf32> to vector<16x32xbf16>
    %22 = vector.shape_cast %21 : vector<16x32xbf16> to vector<2x8x32xbf16>
    %23 = vector.extract_strided_slice %19 {offsets = [0, 32], sizes = [16, 32], strides = [1, 1]} : vector<16x96xf32> to vector<16x32xf32>
    %24 = arith.truncf %23 : vector<16x32xf32> to vector<16x32xbf16>
    %25 = vector.shape_cast %24 : vector<16x32xbf16> to vector<2x8x32xbf16>
    %26 = vector.extract_strided_slice %19 {offsets = [0, 64], sizes = [16, 32], strides = [1, 1]} : vector<16x96xf32> to vector<16x32xf32>
    %27 = arith.truncf %26 : vector<16x32xf32> to vector<16x32xbf16>
    %28 = vector.shape_cast %27 : vector<16x32xbf16> to vector<2x8x32xbf16>
    %c0_11 = arith.constant 0 : index
    %c0_12 = arith.constant 0 : index
    %c0_13 = arith.constant 0 : index
    %29 = vector.load %arg5[%c0_11, %c0_12, %c0_13] : memref<1x32x32xbf16, #tpu.memory_space<vmem>>, vector<1x32x32xbf16>
    %30 = vector.shape_cast %29 : vector<1x32x32xbf16> to vector<32x32xbf16>
    %cst_14 = arith.constant 0.000000e+00 : f32
    %31 = vector.broadcast %cst_14 : f32 to vector<16x32xf32>
    %32 = vector.extract_strided_slice %22 {offsets = [0, 0, 0], sizes = [2, 8, 4], strides = [1, 1, 1]} : vector<2x8x32xbf16> to vector<2x8x4xbf16>
    %33 = vector.extract_strided_slice %25 {offsets = [0, 0, 0], sizes = [2, 8, 4], strides = [1, 1, 1]} : vector<2x8x32xbf16> to vector<2x8x4xbf16>
    "tpu.trace_start"() <{level = 10 : i32, message = "bqd,bkd->bqk"}> : () -> ()
    %cst_15 = arith.constant dense<0.000000e+00> : vector<2x8x8xf32>
    %34 = tpu.matmul %32, %33, %cst_15 {dimension_numbers = #tpu.dot_dimension_numbers<[2], [2], [1], [1], [0, 0, 0, 1, 1, 1], [0], [0]>} : vector<2x8x4xbf16>, vector<2x8x4xbf16>, vector<2x8x8xf32> -> vector<2x8x8xf32>
    "tpu.trace_stop"() : () -> ()
    %cst_16 = arith.constant 5.000000e-01 : f32
    %35 = vector.broadcast %cst_16 : f32 to vector<2x8x8xf32>
    %36 = arith.mulf %34, %35 : vector<2x8x8xf32>
    %cst_17 = arith.constant dense<0xFF800000> : vector<2x8xf32>
    %37 = vector.multi_reduction <maximumf>, %36, %cst_17 [2] : vector<2x8x8xf32> to vector<2x8xf32>
    %38 = vector.shape_cast %37 : vector<2x8xf32> to vector<2x8x1xf32>
    %39 = vector.broadcast %38 : vector<2x8x1xf32> to vector<2x8x8xf32>
    %40 = arith.subf %36, %39 : vector<2x8x8xf32>
    %41 = math.exp %40 : vector<2x8x8xf32>
    %cst_18 = arith.constant dense<0.000000e+00> : vector<2x8xf32>
    %42 = vector.multi_reduction <add>, %41, %cst_18 [2] : vector<2x8x8xf32> to vector<2x8xf32>
    %43 = vector.shape_cast %42 : vector<2x8xf32> to vector<2x8x1xf32>
    %44 = tpu.reciprocal %43 {approx = true} : vector<2x8x1xf32> -> vector<2x8x1xf32>
    %45 = vector.broadcast %44 : vector<2x8x1xf32> to vector<2x8x8xf32>
    %46 = arith.mulf %41, %45 : vector<2x8x8xf32>
    %47 = arith.truncf %46 : vector<2x8x8xf32> to vector<2x8x8xbf16>
    %48 = vector.extract_strided_slice %28 {offsets = [0, 0, 0], sizes = [2, 8, 4], strides = [1, 1, 1]} : vector<2x8x32xbf16> to vector<2x8x4xbf16>
    "tpu.trace_start"() <{level = 10 : i32, message = "bqk,bkd->bqd"}> : () -> ()
    %cst_19 = arith.constant dense<0.000000e+00> : vector<2x8x4xf32>
    %49 = tpu.matmul %47, %48, %cst_19 {dimension_numbers = #tpu.dot_dimension_numbers<[2], [1], [1], [2], [0, 0, 0, 1, 1, 2], [0], [0]>} : vector<2x8x8xbf16>, vector<2x8x4xbf16>, vector<2x8x4xf32> -> vector<2x8x4xf32>
    "tpu.trace_stop"() : () -> ()
    %50 = vector.shape_cast %49 : vector<2x8x4xf32> to vector<16x4xf32>
    %51 = arith.truncf %50 : vector<16x4xf32> to vector<16x4xbf16>
    %52 = vector.extract_strided_slice %30 {offsets = [0, 0], sizes = [32, 4], strides = [1, 1]} : vector<32x32xbf16> to vector<32x4xbf16>
    %cst_20 = arith.constant dense<0.000000e+00> : vector<16x32xf32>
    %53 = tpu.matmul %51, %52, %cst_20 {dimension_numbers = #tpu.dot_dimension_numbers<[1], [1], [0], [0], [0, 0, 1, 0], [], []>} : vector<16x4xbf16>, vector<32x4xbf16>, vector<16x32xf32> -> vector<16x32xf32>
    %54 = arith.addf %31, %53 : vector<16x32xf32>
    %55 = vector.extract_strided_slice %22 {offsets = [0, 0, 4], sizes = [2, 8, 4], strides = [1, 1, 1]} : vector<2x8x32xbf16> to vector<2x8x4xbf16>
    %56 = vector.extract_strided_slice %25 {offsets = [0, 0, 4], sizes = [2, 8, 4], strides = [1, 1, 1]} : vector<2x8x32xbf16> to vector<2x8x4xbf16>
    "tpu.trace_start"() <{level = 10 : i32, message = "bqd,bkd->bqk"}> : () -> ()
    %cst_21 = arith.constant dense<0.000000e+00> : vector<2x8x8xf32>
    %57 = tpu.matmul %55, %56, %cst_21 {dimension_numbers = #tpu.dot_dimension_numbers<[2], [2], [1], [1], [0, 0, 0, 1, 1, 1], [0], [0]>} : vector<2x8x4xbf16>, vector<2x8x4xbf16>, vector<2x8x8xf32> -> vector<2x8x8xf32>
    "tpu.trace_stop"() : () -> ()
    %cst_22 = arith.constant 5.000000e-01 : f32
    %58 = vector.broadcast %cst_22 : f32 to vector<2x8x8xf32>
    %59 = arith.mulf %57, %58 : vector<2x8x8xf32>
    %cst_23 = arith.constant dense<0xFF800000> : vector<2x8xf32>
    %60 = vector.multi_reduction <maximumf>, %59, %cst_23 [2] : vector<2x8x8xf32> to vector<2x8xf32>
    %61 = vector.shape_cast %60 : vector<2x8xf32> to vector<2x8x1xf32>
    %62 = vector.broadcast %61 : vector<2x8x1xf32> to vector<2x8x8xf32>
    %63 = arith.subf %59, %62 : vector<2x8x8xf32>
    %64 = math.exp %63 : vector<2x8x8xf32>
    %cst_24 = arith.constant dense<0.000000e+00> : vector<2x8xf32>
    %65 = vector.multi_reduction <add>, %64, %cst_24 [2] : vector<2x8x8xf32> to vector<2x8xf32>
    %66 = vector.shape_cast %65 : vector<2x8xf32> to vector<2x8x1xf32>
    %67 = tpu.reciprocal %66 {approx = true} : vector<2x8x1xf32> -> vector<2x8x1xf32>
    %68 = vector.broadcast %67 : vector<2x8x1xf32> to vector<2x8x8xf32>
    %69 = arith.mulf %64, %68 : vector<2x8x8xf32>
    %70 = arith.truncf %69 : vector<2x8x8xf32> to vector<2x8x8xbf16>
    %71 = vector.extract_strided_slice %28 {offsets = [0, 0, 4], sizes = [2, 8, 4], strides = [1, 1, 1]} : vector<2x8x32xbf16> to vector<2x8x4xbf16>
    "tpu.trace_start"() <{level = 10 : i32, message = "bqk,bkd->bqd"}> : () -> ()
    %cst_25 = arith.constant dense<0.000000e+00> : vector<2x8x4xf32>
    %72 = tpu.matmul %70, %71, %cst_25 {dimension_numbers = #tpu.dot_dimension_numbers<[2], [1], [1], [2], [0, 0, 0, 1, 1, 2], [0], [0]>} : vector<2x8x8xbf16>, vector<2x8x4xbf16>, vector<2x8x4xf32> -> vector<2x8x4xf32>
    "tpu.trace_stop"() : () -> ()
    %73 = vector.shape_cast %72 : vector<2x8x4xf32> to vector<16x4xf32>
    %74 = arith.truncf %73 : vector<16x4xf32> to vector<16x4xbf16>
    %75 = vector.extract_strided_slice %30 {offsets = [0, 4], sizes = [32, 4], strides = [1, 1]} : vector<32x32xbf16> to vector<32x4xbf16>
    %cst_26 = arith.constant dense<0.000000e+00> : vector<16x32xf32>
    %76 = tpu.matmul %74, %75, %cst_26 {dimension_numbers = #tpu.dot_dimension_numbers<[1], [1], [0], [0], [0, 0, 1, 0], [], []>} : vector<16x4xbf16>, vector<32x4xbf16>, vector<16x32xf32> -> vector<16x32xf32>
    %77 = arith.addf %54, %76 : vector<16x32xf32>
    %78 = vector.extract_strided_slice %22 {offsets = [0, 0, 8], sizes = [2, 8, 4], strides = [1, 1, 1]} : vector<2x8x32xbf16> to vector<2x8x4xbf16>
    %79 = vector.extract_strided_slice %25 {offsets = [0, 0, 8], sizes = [2, 8, 4], strides = [1, 1, 1]} : vector<2x8x32xbf16> to vector<2x8x4xbf16>
    "tpu.trace_start"() <{level = 10 : i32, message = "bqd,bkd->bqk"}> : () -> ()
    %cst_27 = arith.constant dense<0.000000e+00> : vector<2x8x8xf32>
    %80 = tpu.matmul %78, %79, %cst_27 {dimension_numbers = #tpu.dot_dimension_numbers<[2], [2], [1], [1], [0, 0, 0, 1, 1, 1], [0], [0]>} : vector<2x8x4xbf16>, vector<2x8x4xbf16>, vector<2x8x8xf32> -> vector<2x8x8xf32>
    "tpu.trace_stop"() : () -> ()
    %cst_28 = arith.constant 5.000000e-01 : f32
    %81 = vector.broadcast %cst_28 : f32 to vector<2x8x8xf32>
    %82 = arith.mulf %80, %81 : vector<2x8x8xf32>
    %cst_29 = arith.constant dense<0xFF800000> : vector<2x8xf32>
    %83 = vector.multi_reduction <maximumf>, %82, %cst_29 [2] : vector<2x8x8xf32> to vector<2x8xf32>
    %84 = vector.shape_cast %83 : vector<2x8xf32> to vector<2x8x1xf32>
    %85 = vector.broadcast %84 : vector<2x8x1xf32> to vector<2x8x8xf32>
    %86 = arith.subf %82, %85 : vector<2x8x8xf32>
    %87 = math.exp %86 : vector<2x8x8xf32>
    %cst_30 = arith.constant dense<0.000000e+00> : vector<2x8xf32>
    %88 = vector.multi_reduction <add>, %87, %cst_30 [2] : vector<2x8x8xf32> to vector<2x8xf32>
    %89 = vector.shape_cast %88 : vector<2x8xf32> to vector<2x8x1xf32>
    %90 = tpu.reciprocal %89 {approx = true} : vector<2x8x1xf32> -> vector<2x8x1xf32>
    %91 = vector.broadcast %90 : vector<2x8x1xf32> to vector<2x8x8xf32>
    %92 = arith.mulf %87, %91 : vector<2x8x8xf32>
    %93 = arith.truncf %92 : vector<2x8x8xf32> to vector<2x8x8xbf16>
    %94 = vector.extract_strided_slice %28 {offsets = [0, 0, 8], sizes = [2, 8, 4], strides = [1, 1, 1]} : vector<2x8x32xbf16> to vector<2x8x4xbf16>
    "tpu.trace_start"() <{level = 10 : i32, message = "bqk,bkd->bqd"}> : () -> ()
    %cst_31 = arith.constant dense<0.000000e+00> : vector<2x8x4xf32>
    %95 = tpu.matmul %93, %94, %cst_31 {dimension_numbers = #tpu.dot_dimension_numbers<[2], [1], [1], [2], [0, 0, 0, 1, 1, 2], [0], [0]>} : vector<2x8x8xbf16>, vector<2x8x4xbf16>, vector<2x8x4xf32> -> vector<2x8x4xf32>
    "tpu.trace_stop"() : () -> ()
    %96 = vector.shape_cast %95 : vector<2x8x4xf32> to vector<16x4xf32>
    %97 = arith.truncf %96 : vector<16x4xf32> to vector<16x4xbf16>
    %98 = vector.extract_strided_slice %30 {offsets = [0, 8], sizes = [32, 4], strides = [1, 1]} : vector<32x32xbf16> to vector<32x4xbf16>
    %cst_32 = arith.constant dense<0.000000e+00> : vector<16x32xf32>
    %99 = tpu.matmul %97, %98, %cst_32 {dimension_numbers = #tpu.dot_dimension_numbers<[1], [1], [0], [0], [0, 0, 1, 0], [], []>} : vector<16x4xbf16>, vector<32x4xbf16>, vector<16x32xf32> -> vector<16x32xf32>
    %100 = arith.addf %77, %99 : vector<16x32xf32>
    %101 = vector.extract_strided_slice %22 {offsets = [0, 0, 12], sizes = [2, 8, 4], strides = [1, 1, 1]} : vector<2x8x32xbf16> to vector<2x8x4xbf16>
    %102 = vector.extract_strided_slice %25 {offsets = [0, 0, 12], sizes = [2, 8, 4], strides = [1, 1, 1]} : vector<2x8x32xbf16> to vector<2x8x4xbf16>
    "tpu.trace_start"() <{level = 10 : i32, message = "bqd,bkd->bqk"}> : () -> ()
    %cst_33 = arith.constant dense<0.000000e+00> : vector<2x8x8xf32>
    %103 = tpu.matmul %101, %102, %cst_33 {dimension_numbers = #tpu.dot_dimension_numbers<[2], [2], [1], [1], [0, 0, 0, 1, 1, 1], [0], [0]>} : vector<2x8x4xbf16>, vector<2x8x4xbf16>, vector<2x8x8xf32> -> vector<2x8x8xf32>
    "tpu.trace_stop"() : () -> ()
    %cst_34 = arith.constant 5.000000e-01 : f32
    %104 = vector.broadcast %cst_34 : f32 to vector<2x8x8xf32>
    %105 = arith.mulf %103, %104 : vector<2x8x8xf32>
    %cst_35 = arith.constant dense<0xFF800000> : vector<2x8xf32>
    %106 = vector.multi_reduction <maximumf>, %105, %cst_35 [2] : vector<2x8x8xf32> to vector<2x8xf32>
    %107 = vector.shape_cast %106 : vector<2x8xf32> to vector<2x8x1xf32>
    %108 = vector.broadcast %107 : vector<2x8x1xf32> to vector<2x8x8xf32>
    %109 = arith.subf %105, %108 : vector<2x8x8xf32>
    %110 = math.exp %109 : vector<2x8x8xf32>
    %cst_36 = arith.constant dense<0.000000e+00> : vector<2x8xf32>
    %111 = vector.multi_reduction <add>, %110, %cst_36 [2] : vector<2x8x8xf32> to vector<2x8xf32>
    %112 = vector.shape_cast %111 : vector<2x8xf32> to vector<2x8x1xf32>
    %113 = tpu.reciprocal %112 {approx = true} : vector<2x8x1xf32> -> vector<2x8x1xf32>
    %114 = vector.broadcast %113 : vector<2x8x1xf32> to vector<2x8x8xf32>
    %115 = arith.mulf %110, %114 : vector<2x8x8xf32>
    %116 = arith.truncf %115 : vector<2x8x8xf32> to vector<2x8x8xbf16>
    %117 = vector.extract_strided_slice %28 {offsets = [0, 0, 12], sizes = [2, 8, 4], strides = [1, 1, 1]} : vector<2x8x32xbf16> to vector<2x8x4xbf16>
    "tpu.trace_start"() <{level = 10 : i32, message = "bqk,bkd->bqd"}> : () -> ()
    %cst_37 = arith.constant dense<0.000000e+00> : vector<2x8x4xf32>
    %118 = tpu.matmul %116, %117, %cst_37 {dimension_numbers = #tpu.dot_dimension_numbers<[2], [1], [1], [2], [0, 0, 0, 1, 1, 2], [0], [0]>} : vector<2x8x8xbf16>, vector<2x8x4xbf16>, vector<2x8x4xf32> -> vector<2x8x4xf32>
    "tpu.trace_stop"() : () -> ()
    %119 = vector.shape_cast %118 : vector<2x8x4xf32> to vector<16x4xf32>
    %120 = arith.truncf %119 : vector<16x4xf32> to vector<16x4xbf16>
    %121 = vector.extract_strided_slice %30 {offsets = [0, 12], sizes = [32, 4], strides = [1, 1]} : vector<32x32xbf16> to vector<32x4xbf16>
    %cst_38 = arith.constant dense<0.000000e+00> : vector<16x32xf32>
    %122 = tpu.matmul %120, %121, %cst_38 {dimension_numbers = #tpu.dot_dimension_numbers<[1], [1], [0], [0], [0, 0, 1, 0], [], []>} : vector<16x4xbf16>, vector<32x4xbf16>, vector<16x32xf32> -> vector<16x32xf32>
    %123 = arith.addf %100, %122 : vector<16x32xf32>
    %124 = vector.extract_strided_slice %22 {offsets = [0, 0, 16], sizes = [2, 8, 4], strides = [1, 1, 1]} : vector<2x8x32xbf16> to vector<2x8x4xbf16>
    %125 = vector.extract_strided_slice %25 {offsets = [0, 0, 16], sizes = [2, 8, 4], strides = [1, 1, 1]} : vector<2x8x32xbf16> to vector<2x8x4xbf16>
    "tpu.trace_start"() <{level = 10 : i32, message = "bqd,bkd->bqk"}> : () -> ()
    %cst_39 = arith.constant dense<0.000000e+00> : vector<2x8x8xf32>
    %126 = tpu.matmul %124, %125, %cst_39 {dimension_numbers = #tpu.dot_dimension_numbers<[2], [2], [1], [1], [0, 0, 0, 1, 1, 1], [0], [0]>} : vector<2x8x4xbf16>, vector<2x8x4xbf16>, vector<2x8x8xf32> -> vector<2x8x8xf32>
    "tpu.trace_stop"() : () -> ()
    %cst_40 = arith.constant 5.000000e-01 : f32
    %127 = vector.broadcast %cst_40 : f32 to vector<2x8x8xf32>
    %128 = arith.mulf %126, %127 : vector<2x8x8xf32>
    %cst_41 = arith.constant dense<0xFF800000> : vector<2x8xf32>
    %129 = vector.multi_reduction <maximumf>, %128, %cst_41 [2] : vector<2x8x8xf32> to vector<2x8xf32>
    %130 = vector.shape_cast %129 : vector<2x8xf32> to vector<2x8x1xf32>
    %131 = vector.broadcast %130 : vector<2x8x1xf32> to vector<2x8x8xf32>
    %132 = arith.subf %128, %131 : vector<2x8x8xf32>
    %133 = math.exp %132 : vector<2x8x8xf32>
    %cst_42 = arith.constant dense<0.000000e+00> : vector<2x8xf32>
    %134 = vector.multi_reduction <add>, %133, %cst_42 [2] : vector<2x8x8xf32> to vector<2x8xf32>
    %135 = vector.shape_cast %134 : vector<2x8xf32> to vector<2x8x1xf32>
    %136 = tpu.reciprocal %135 {approx = true} : vector<2x8x1xf32> -> vector<2x8x1xf32>
    %137 = vector.broadcast %136 : vector<2x8x1xf32> to vector<2x8x8xf32>
    %138 = arith.mulf %133, %137 : vector<2x8x8xf32>
    %139 = arith.truncf %138 : vector<2x8x8xf32> to vector<2x8x8xbf16>
    %140 = vector.extract_strided_slice %28 {offsets = [0, 0, 16], sizes = [2, 8, 4], strides = [1, 1, 1]} : vector<2x8x32xbf16> to vector<2x8x4xbf16>
    "tpu.trace_start"() <{level = 10 : i32, message = "bqk,bkd->bqd"}> : () -> ()
    %cst_43 = arith.constant dense<0.000000e+00> : vector<2x8x4xf32>
    %141 = tpu.matmul %139, %140, %cst_43 {dimension_numbers = #tpu.dot_dimension_numbers<[2], [1], [1], [2], [0, 0, 0, 1, 1, 2], [0], [0]>} : vector<2x8x8xbf16>, vector<2x8x4xbf16>, vector<2x8x4xf32> -> vector<2x8x4xf32>
    "tpu.trace_stop"() : () -> ()
    %142 = vector.shape_cast %141 : vector<2x8x4xf32> to vector<16x4xf32>
    %143 = arith.truncf %142 : vector<16x4xf32> to vector<16x4xbf16>
    %144 = vector.extract_strided_slice %30 {offsets = [0, 16], sizes = [32, 4], strides = [1, 1]} : vector<32x32xbf16> to vector<32x4xbf16>
    %cst_44 = arith.constant dense<0.000000e+00> : vector<16x32xf32>
    %145 = tpu.matmul %143, %144, %cst_44 {dimension_numbers = #tpu.dot_dimension_numbers<[1], [1], [0], [0], [0, 0, 1, 0], [], []>} : vector<16x4xbf16>, vector<32x4xbf16>, vector<16x32xf32> -> vector<16x32xf32>
    %146 = arith.addf %123, %145 : vector<16x32xf32>
    %147 = vector.extract_strided_slice %22 {offsets = [0, 0, 20], sizes = [2, 8, 4], strides = [1, 1, 1]} : vector<2x8x32xbf16> to vector<2x8x4xbf16>
    %148 = vector.extract_strided_slice %25 {offsets = [0, 0, 20], sizes = [2, 8, 4], strides = [1, 1, 1]} : vector<2x8x32xbf16> to vector<2x8x4xbf16>
    "tpu.trace_start"() <{level = 10 : i32, message = "bqd,bkd->bqk"}> : () -> ()
    %cst_45 = arith.constant dense<0.000000e+00> : vector<2x8x8xf32>
    %149 = tpu.matmul %147, %148, %cst_45 {dimension_numbers = #tpu.dot_dimension_numbers<[2], [2], [1], [1], [0, 0, 0, 1, 1, 1], [0], [0]>} : vector<2x8x4xbf16>, vector<2x8x4xbf16>, vector<2x8x8xf32> -> vector<2x8x8xf32>
    "tpu.trace_stop"() : () -> ()
    %cst_46 = arith.constant 5.000000e-01 : f32
    %150 = vector.broadcast %cst_46 : f32 to vector<2x8x8xf32>
    %151 = arith.mulf %149, %150 : vector<2x8x8xf32>
    %cst_47 = arith.constant dense<0xFF800000> : vector<2x8xf32>
    %152 = vector.multi_reduction <maximumf>, %151, %cst_47 [2] : vector<2x8x8xf32> to vector<2x8xf32>
    %153 = vector.shape_cast %152 : vector<2x8xf32> to vector<2x8x1xf32>
    %154 = vector.broadcast %153 : vector<2x8x1xf32> to vector<2x8x8xf32>
    %155 = arith.subf %151, %154 : vector<2x8x8xf32>
    %156 = math.exp %155 : vector<2x8x8xf32>
    %cst_48 = arith.constant dense<0.000000e+00> : vector<2x8xf32>
    %157 = vector.multi_reduction <add>, %156, %cst_48 [2] : vector<2x8x8xf32> to vector<2x8xf32>
    %158 = vector.shape_cast %157 : vector<2x8xf32> to vector<2x8x1xf32>
    %159 = tpu.reciprocal %158 {approx = true} : vector<2x8x1xf32> -> vector<2x8x1xf32>
    %160 = vector.broadcast %159 : vector<2x8x1xf32> to vector<2x8x8xf32>
    %161 = arith.mulf %156, %160 : vector<2x8x8xf32>
    %162 = arith.truncf %161 : vector<2x8x8xf32> to vector<2x8x8xbf16>
    %163 = vector.extract_strided_slice %28 {offsets = [0, 0, 20], sizes = [2, 8, 4], strides = [1, 1, 1]} : vector<2x8x32xbf16> to vector<2x8x4xbf16>
    "tpu.trace_start"() <{level = 10 : i32, message = "bqk,bkd->bqd"}> : () -> ()
    %cst_49 = arith.constant dense<0.000000e+00> : vector<2x8x4xf32>
    %164 = tpu.matmul %162, %163, %cst_49 {dimension_numbers = #tpu.dot_dimension_numbers<[2], [1], [1], [2], [0, 0, 0, 1, 1, 2], [0], [0]>} : vector<2x8x8xbf16>, vector<2x8x4xbf16>, vector<2x8x4xf32> -> vector<2x8x4xf32>
    "tpu.trace_stop"() : () -> ()
    %165 = vector.shape_cast %164 : vector<2x8x4xf32> to vector<16x4xf32>
    %166 = arith.truncf %165 : vector<16x4xf32> to vector<16x4xbf16>
    %167 = vector.extract_strided_slice %30 {offsets = [0, 20], sizes = [32, 4], strides = [1, 1]} : vector<32x32xbf16> to vector<32x4xbf16>
    %cst_50 = arith.constant dense<0.000000e+00> : vector<16x32xf32>
    %168 = tpu.matmul %166, %167, %cst_50 {dimension_numbers = #tpu.dot_dimension_numbers<[1], [1], [0], [0], [0, 0, 1, 0], [], []>} : vector<16x4xbf16>, vector<32x4xbf16>, vector<16x32xf32> -> vector<16x32xf32>
    %169 = arith.addf %146, %168 : vector<16x32xf32>
    %170 = vector.extract_strided_slice %22 {offsets = [0, 0, 24], sizes = [2, 8, 4], strides = [1, 1, 1]} : vector<2x8x32xbf16> to vector<2x8x4xbf16>
    %171 = vector.extract_strided_slice %25 {offsets = [0, 0, 24], sizes = [2, 8, 4], strides = [1, 1, 1]} : vector<2x8x32xbf16> to vector<2x8x4xbf16>
    "tpu.trace_start"() <{level = 10 : i32, message = "bqd,bkd->bqk"}> : () -> ()
    %cst_51 = arith.constant dense<0.000000e+00> : vector<2x8x8xf32>
    %172 = tpu.matmul %170, %171, %cst_51 {dimension_numbers = #tpu.dot_dimension_numbers<[2], [2], [1], [1], [0, 0, 0, 1, 1, 1], [0], [0]>} : vector<2x8x4xbf16>, vector<2x8x4xbf16>, vector<2x8x8xf32> -> vector<2x8x8xf32>
    "tpu.trace_stop"() : () -> ()
    %cst_52 = arith.constant 5.000000e-01 : f32
    %173 = vector.broadcast %cst_52 : f32 to vector<2x8x8xf32>
    %174 = arith.mulf %172, %173 : vector<2x8x8xf32>
    %cst_53 = arith.constant dense<0xFF800000> : vector<2x8xf32>
    %175 = vector.multi_reduction <maximumf>, %174, %cst_53 [2] : vector<2x8x8xf32> to vector<2x8xf32>
    %176 = vector.shape_cast %175 : vector<2x8xf32> to vector<2x8x1xf32>
    %177 = vector.broadcast %176 : vector<2x8x1xf32> to vector<2x8x8xf32>
    %178 = arith.subf %174, %177 : vector<2x8x8xf32>
    %179 = math.exp %178 : vector<2x8x8xf32>
    %cst_54 = arith.constant dense<0.000000e+00> : vector<2x8xf32>
    %180 = vector.multi_reduction <add>, %179, %cst_54 [2] : vector<2x8x8xf32> to vector<2x8xf32>
    %181 = vector.shape_cast %180 : vector<2x8xf32> to vector<2x8x1xf32>
    %182 = tpu.reciprocal %181 {approx = true} : vector<2x8x1xf32> -> vector<2x8x1xf32>
    %183 = vector.broadcast %182 : vector<2x8x1xf32> to vector<2x8x8xf32>
    %184 = arith.mulf %179, %183 : vector<2x8x8xf32>
    %185 = arith.truncf %184 : vector<2x8x8xf32> to vector<2x8x8xbf16>
    %186 = vector.extract_strided_slice %28 {offsets = [0, 0, 24], sizes = [2, 8, 4], strides = [1, 1, 1]} : vector<2x8x32xbf16> to vector<2x8x4xbf16>
    "tpu.trace_start"() <{level = 10 : i32, message = "bqk,bkd->bqd"}> : () -> ()
    %cst_55 = arith.constant dense<0.000000e+00> : vector<2x8x4xf32>
    %187 = tpu.matmul %185, %186, %cst_55 {dimension_numbers = #tpu.dot_dimension_numbers<[2], [1], [1], [2], [0, 0, 0, 1, 1, 2], [0], [0]>} : vector<2x8x8xbf16>, vector<2x8x4xbf16>, vector<2x8x4xf32> -> vector<2x8x4xf32>
    "tpu.trace_stop"() : () -> ()
    %188 = vector.shape_cast %187 : vector<2x8x4xf32> to vector<16x4xf32>
    %189 = arith.truncf %188 : vector<16x4xf32> to vector<16x4xbf16>
    %190 = vector.extract_strided_slice %30 {offsets = [0, 24], sizes = [32, 4], strides = [1, 1]} : vector<32x32xbf16> to vector<32x4xbf16>
    %cst_56 = arith.constant dense<0.000000e+00> : vector<16x32xf32>
    %191 = tpu.matmul %189, %190, %cst_56 {dimension_numbers = #tpu.dot_dimension_numbers<[1], [1], [0], [0], [0, 0, 1, 0], [], []>} : vector<16x4xbf16>, vector<32x4xbf16>, vector<16x32xf32> -> vector<16x32xf32>
    %192 = arith.addf %169, %191 : vector<16x32xf32>
    %193 = vector.extract_strided_slice %22 {offsets = [0, 0, 28], sizes = [2, 8, 4], strides = [1, 1, 1]} : vector<2x8x32xbf16> to vector<2x8x4xbf16>
    %194 = vector.extract_strided_slice %25 {offsets = [0, 0, 28], sizes = [2, 8, 4], strides = [1, 1, 1]} : vector<2x8x32xbf16> to vector<2x8x4xbf16>
    "tpu.trace_start"() <{level = 10 : i32, message = "bqd,bkd->bqk"}> : () -> ()
    %cst_57 = arith.constant dense<0.000000e+00> : vector<2x8x8xf32>
    %195 = tpu.matmul %193, %194, %cst_57 {dimension_numbers = #tpu.dot_dimension_numbers<[2], [2], [1], [1], [0, 0, 0, 1, 1, 1], [0], [0]>} : vector<2x8x4xbf16>, vector<2x8x4xbf16>, vector<2x8x8xf32> -> vector<2x8x8xf32>
    "tpu.trace_stop"() : () -> ()
    %cst_58 = arith.constant 5.000000e-01 : f32
    %196 = vector.broadcast %cst_58 : f32 to vector<2x8x8xf32>
    %197 = arith.mulf %195, %196 : vector<2x8x8xf32>
    %cst_59 = arith.constant dense<0xFF800000> : vector<2x8xf32>
    %198 = vector.multi_reduction <maximumf>, %197, %cst_59 [2] : vector<2x8x8xf32> to vector<2x8xf32>
    %199 = vector.shape_cast %198 : vector<2x8xf32> to vector<2x8x1xf32>
    %200 = vector.broadcast %199 : vector<2x8x1xf32> to vector<2x8x8xf32>
    %201 = arith.subf %197, %200 : vector<2x8x8xf32>
    %202 = math.exp %201 : vector<2x8x8xf32>
    %cst_60 = arith.constant dense<0.000000e+00> : vector<2x8xf32>
    %203 = vector.multi_reduction <add>, %202, %cst_60 [2] : vector<2x8x8xf32> to vector<2x8xf32>
    %204 = vector.shape_cast %203 : vector<2x8xf32> to vector<2x8x1xf32>
    %205 = tpu.reciprocal %204 {approx = true} : vector<2x8x1xf32> -> vector<2x8x1xf32>
    %206 = vector.broadcast %205 : vector<2x8x1xf32> to vector<2x8x8xf32>
    %207 = arith.mulf %202, %206 : vector<2x8x8xf32>
    %208 = arith.truncf %207 : vector<2x8x8xf32> to vector<2x8x8xbf16>
    %209 = vector.extract_strided_slice %28 {offsets = [0, 0, 28], sizes = [2, 8, 4], strides = [1, 1, 1]} : vector<2x8x32xbf16> to vector<2x8x4xbf16>
    "tpu.trace_start"() <{level = 10 : i32, message = "bqk,bkd->bqd"}> : () -> ()
    %cst_61 = arith.constant dense<0.000000e+00> : vector<2x8x4xf32>
    %210 = tpu.matmul %208, %209, %cst_61 {dimension_numbers = #tpu.dot_dimension_numbers<[2], [1], [1], [2], [0, 0, 0, 1, 1, 2], [0], [0]>} : vector<2x8x8xbf16>, vector<2x8x4xbf16>, vector<2x8x4xf32> -> vector<2x8x4xf32>
    "tpu.trace_stop"() : () -> ()
    %211 = vector.shape_cast %210 : vector<2x8x4xf32> to vector<16x4xf32>
    %212 = arith.truncf %211 : vector<16x4xf32> to vector<16x4xbf16>
    %213 = vector.extract_strided_slice %30 {offsets = [0, 28], sizes = [32, 4], strides = [1, 1]} : vector<32x32xbf16> to vector<32x4xbf16>
    %cst_62 = arith.constant dense<0.000000e+00> : vector<16x32xf32>
    %214 = tpu.matmul %212, %213, %cst_62 {dimension_numbers = #tpu.dot_dimension_numbers<[1], [1], [0], [0], [0, 0, 1, 0], [], []>} : vector<16x4xbf16>, vector<32x4xbf16>, vector<16x32xf32> -> vector<16x32xf32>
    %215 = arith.addf %192, %214 : vector<16x32xf32>
    %216 = vector.broadcast %6 : vector<1x32xf32> to vector<16x32xf32>
    %217 = arith.addf %215, %216 : vector<16x32xf32>
    %218 = arith.addf %3, %217 : vector<16x32xf32>
    %cst_63 = arith.constant dense<0.000000e+00> : vector<16xf32>
    %219 = vector.multi_reduction <add>, %218, %cst_63 [1] : vector<16x32xf32> to vector<16xf32>
    %220 = vector.shape_cast %219 : vector<16xf32> to vector<16x1xf32>
    %cst_64 = arith.constant 3.200000e+01 : f32
    %221 = vector.broadcast %cst_64 : f32 to vector<16x1xf32>
    %222 = arith.divf %220, %221 : vector<16x1xf32>
    %223 = vector.broadcast %222 : vector<16x1xf32> to vector<16x32xf32>
    %224 = arith.subf %218, %223 : vector<16x32xf32>
    %225 = arith.mulf %224, %224 : vector<16x32xf32>
    %cst_65 = arith.constant dense<0.000000e+00> : vector<16xf32>
    %226 = vector.multi_reduction <add>, %225, %cst_65 [1] : vector<16x32xf32> to vector<16xf32>
    %227 = vector.shape_cast %226 : vector<16xf32> to vector<16x1xf32>
    %cst_66 = arith.constant 3.200000e+01 : f32
    %228 = vector.broadcast %cst_66 : f32 to vector<16x1xf32>
    %229 = arith.divf %227, %228 : vector<16x1xf32>
    %230 = vector.broadcast %222 : vector<16x1xf32> to vector<16x32xf32>
    %231 = arith.subf %218, %230 : vector<16x32xf32>
    %cst_67 = arith.constant 9.99999974E-6 : f32
    %232 = vector.broadcast %cst_67 : f32 to vector<16x1xf32>
    %233 = arith.addf %229, %232 : vector<16x1xf32>
    %234 = math.rsqrt %233 : vector<16x1xf32>
    %235 = vector.broadcast %234 : vector<16x1xf32> to vector<16x32xf32>
    %236 = arith.mulf %231, %235 : vector<16x32xf32>
    %237 = vector.broadcast %8 : vector<1x32xf32> to vector<16x32xf32>
    %238 = arith.mulf %236, %237 : vector<16x32xf32>
    %239 = vector.broadcast %9 : vector<1x32xf32> to vector<16x32xf32>
    %240 = arith.addf %238, %239 : vector<16x32xf32>
    %241 = arith.truncf %240 : vector<16x32xf32> to vector<16x32xbf16>
    %c0_68 = arith.constant 0 : index
    %c0_69 = arith.constant 0 : index
    %c0_70 = arith.constant 0 : index
    %242 = vector.load %arg6[%c0_68, %c0_69, %c0_70] : memref<1x32x2048xbf16, #tpu.memory_space<vmem>>, vector<1x32x2048xbf16>
    %243 = vector.shape_cast %242 : vector<1x32x2048xbf16> to vector<32x2048xbf16>
    %cst_71 = arith.constant dense<0.000000e+00> : vector<16x2048xf32>
    %244 = tpu.matmul %241, %243, %cst_71 {dimension_numbers = #tpu.dot_dimension_numbers<[1], [0], [0], [1], [0, 0, 1, 1], [], []>} : vector<16x32xbf16>, vector<32x2048xbf16>, vector<16x2048xf32> -> vector<16x2048xf32>
    %c0_72 = arith.constant 0 : index
    %c0_73 = arith.constant 0 : index
    %c0_74 = arith.constant 0 : index
    %245 = vector.load %arg7[%c0_72, %c0_73, %c0_74] : memref<1x1x2048xf32, #tpu.memory_space<vmem>>, vector<1x1x2048xf32>
    %246 = vector.shape_cast %245 : vector<1x1x2048xf32> to vector<1x2048xf32>
    %247 = vector.broadcast %246 : vector<1x2048xf32> to vector<16x2048xf32>
    %248 = arith.addf %244, %247 : vector<16x2048xf32>
    %cst_75 = arith.constant 0.000000e+00 : f32
    %249 = vector.broadcast %cst_75 : f32 to vector<16x2048xf32>
    %250 = arith.maximumf %248, %249 : vector<16x2048xf32>
    %251 = arith.truncf %250 : vector<16x2048xf32> to vector<16x2048xbf16>
    %c0_76 = arith.constant 0 : index
    %c0_77 = arith.constant 0 : index
    %c0_78 = arith.constant 0 : index
    %252 = vector.load %arg8[%c0_76, %c0_77, %c0_78] : memref<1x32x2048xbf16, #tpu.memory_space<vmem>>, vector<1x32x2048xbf16>
    %253 = vector.shape_cast %252 : vector<1x32x2048xbf16> to vector<32x2048xbf16>
    %cst_79 = arith.constant dense<0.000000e+00> : vector<16x32xf32>
    %254 = tpu.matmul %251, %253, %cst_79 {dimension_numbers = #tpu.dot_dimension_numbers<[1], [1], [0], [0], [0, 0, 1, 0], [], []>} : vector<16x2048xbf16>, vector<32x2048xbf16>, vector<16x32xf32> -> vector<16x32xf32>
    %255 = vector.broadcast %7 : vector<1x32xf32> to vector<16x32xf32>
    %256 = arith.addf %254, %255 : vector<16x32xf32>
    %257 = arith.addf %240, %256 : vector<16x32xf32>
    %cst_80 = arith.constant dense<0.000000e+00> : vector<16xf32>
    %258 = vector.multi_reduction <add>, %257, %cst_80 [1] : vector<16x32xf32> to vector<16xf32>
    %259 = vector.shape_cast %258 : vector<16xf32> to vector<16x1xf32>
    %cst_81 = arith.constant 3.200000e+01 : f32
    %260 = vector.broadcast %cst_81 : f32 to vector<16x1xf32>
    %261 = arith.divf %259, %260 : vector<16x1xf32>
    %262 = vector.broadcast %261 : vector<16x1xf32> to vector<16x32xf32>
    %263 = arith.subf %257, %262 : vector<16x32xf32>
    %264 = arith.mulf %263, %263 : vector<16x32xf32>
    %cst_82 = arith.constant dense<0.000000e+00> : vector<16xf32>
    %265 = vector.multi_reduction <add>, %264, %cst_82 [1] : vector<16x32xf32> to vector<16xf32>
    %266 = vector.shape_cast %265 : vector<16xf32> to vector<16x1xf32>
    %cst_83 = arith.constant 3.200000e+01 : f32
    %267 = vector.broadcast %cst_83 : f32 to vector<16x1xf32>
    %268 = arith.divf %266, %267 : vector<16x1xf32>
    %269 = vector.broadcast %261 : vector<16x1xf32> to vector<16x32xf32>
    %270 = arith.subf %257, %269 : vector<16x32xf32>
    %cst_84 = arith.constant 9.99999974E-6 : f32
    %271 = vector.broadcast %cst_84 : f32 to vector<16x1xf32>
    %272 = arith.addf %268, %271 : vector<16x1xf32>
    %273 = math.rsqrt %272 : vector<16x1xf32>
    %274 = vector.broadcast %273 : vector<16x1xf32> to vector<16x32xf32>
    %275 = arith.mulf %270, %274 : vector<16x32xf32>
    %276 = vector.broadcast %10 : vector<1x32xf32> to vector<16x32xf32>
    %277 = arith.mulf %275, %276 : vector<16x32xf32>
    %278 = vector.broadcast %11 : vector<1x32xf32> to vector<16x32xf32>
    %279 = arith.addf %277, %278 : vector<16x32xf32>
    %c1_i32 = arith.constant 1 : i32
    %280 = arith.cmpi slt, %arg1, %c1_i32 : i32
    %281 = arith.extui %280 : i1 to i32
    %c0_i32_85 = arith.constant 0 : i32
    %282 = arith.cmpi ne, %281, %c0_i32_85 : i32
    scf.if %282 {
      %c0_88 = arith.constant 0 : index
      %c0_89 = arith.constant 0 : index
      %286 = vector.load %arg11[%c0_88, %c0_89] : memref<16x32xf32, #tpu.memory_space<vmem>>, vector<16x32xf32>
      tpu.vector_store %arg11[%c0_88, %c0_89], %279 {strides = array<i32>} : memref<16x32xf32, #tpu.memory_space<vmem>>, vector<16x32xf32>,
    } else {
    }
    %c1_i32_86 = arith.constant 1 : i32
    %283 = arith.cmpi eq, %arg1, %c1_i32_86 : i32
    %284 = arith.extui %283 : i1 to i32
    %c0_i32_87 = arith.constant 0 : i32
    %285 = arith.cmpi ne, %284, %c0_i32_87 : i32
    scf.if %285 {
      %c0_88 = arith.constant 0 : index
      %c0_89 = arith.constant 0 : index
      %286 = vector.load %arg10[%c0_88, %c0_89] : memref<2x32xf32, #tpu.memory_space<vmem>>, vector<2x32xf32>
      %287 = vector.extract_strided_slice %286 {offsets = [0, 0], sizes = [1, 32], strides = [1, 1]} : vector<2x32xf32> to vector<1x32xf32>
      %288 = vector.extract_strided_slice %286 {offsets = [1, 0], sizes = [1, 32], strides = [1, 1]} : vector<2x32xf32> to vector<1x32xf32>
      %cst_90 = arith.constant dense<0.000000e+00> : vector<16xf32>
      %289 = vector.multi_reduction <add>, %279, %cst_90 [1] : vector<16x32xf32> to vector<16xf32>
      %290 = vector.shape_cast %289 : vector<16xf32> to vector<16x1xf32>
      %cst_91 = arith.constant 3.200000e+01 : f32
      %291 = vector.broadcast %cst_91 : f32 to vector<16x1xf32>
      %292 = arith.divf %290, %291 : vector<16x1xf32>
      %293 = vector.broadcast %292 : vector<16x1xf32> to vector<16x32xf32>
      %294 = arith.subf %279, %293 : vector<16x32xf32>
      %295 = arith.mulf %294, %294 : vector<16x32xf32>
      %cst_92 = arith.constant dense<0.000000e+00> : vector<16xf32>
      %296 = vector.multi_reduction <add>, %295, %cst_92 [1] : vector<16x32xf32> to vector<16xf32>
      %297 = vector.shape_cast %296 : vector<16xf32> to vector<16x1xf32>
      %cst_93 = arith.constant 3.200000e+01 : f32
      %298 = vector.broadcast %cst_93 : f32 to vector<16x1xf32>
      %299 = arith.divf %297, %298 : vector<16x1xf32>
      %300 = vector.broadcast %292 : vector<16x1xf32> to vector<16x32xf32>
      %301 = arith.subf %279, %300 : vector<16x32xf32>
      %cst_94 = arith.constant 9.99999974E-6 : f32
      %302 = vector.broadcast %cst_94 : f32 to vector<16x1xf32>
      %303 = arith.addf %299, %302 : vector<16x1xf32>
      %304 = math.rsqrt %303 : vector<16x1xf32>
      %305 = vector.broadcast %304 : vector<16x1xf32> to vector<16x32xf32>
      %306 = arith.mulf %301, %305 : vector<16x32xf32>
      %307 = vector.broadcast %287 : vector<1x32xf32> to vector<16x32xf32>
      %308 = arith.mulf %306, %307 : vector<16x32xf32>
      %309 = vector.broadcast %288 : vector<1x32xf32> to vector<16x32xf32>
      %310 = arith.addf %308, %309 : vector<16x32xf32>
      %c0_95 = arith.constant 0 : index
      %c0_96 = arith.constant 0 : index
      %311 = vector.load %arg11[%c0_95, %c0_96] : memref<16x32xf32, #tpu.memory_space<vmem>>, vector<16x32xf32>
      tpu.vector_store %arg11[%c0_95, %c0_96], %310 {strides = array<i32>} : memref<16x32xf32, #tpu.memory_space<vmem>>, vector<16x32xf32>,
    } else {
    }
    return
  }
  func.func @transform_0(%arg0: i32, %arg1: i32) -> (i32, i32) {
    %c0_i32 = arith.constant 0 : i32
    %c0_i32_0 = arith.constant 0 : i32
    return %arg0, %c0_i32 : i32, i32
  }
  func.func @transform_1(%arg0: i32, %arg1: i32) -> (i32, i32, i32) {
    %c0_i32 = arith.constant 0 : i32
    %c0_i32_0 = arith.constant 0 : i32
    %c0_i32_1 = arith.constant 0 : i32
    return %arg1, %c0_i32, %c0_i32_0 : i32, i32, i32
  }
  func.func @transform_2(%arg0: i32, %arg1: i32) -> (i32, i32, i32) {
    %c0_i32 = arith.constant 0 : i32
    %c0_i32_0 = arith.constant 0 : i32
    %c0_i32_1 = arith.constant 0 : i32
    return %arg1, %c0_i32, %c0_i32_0 : i32, i32, i32
  }
  func.func @transform_3(%arg0: i32, %arg1: i32) -> (i32, i32, i32) {
    %c0_i32 = arith.constant 0 : i32
    %c0_i32_0 = arith.constant 0 : i32
    %c0_i32_1 = arith.constant 0 : i32
    return %arg1, %c0_i32, %c0_i32_0 : i32, i32, i32
  }
  func.func @transform_4(%arg0: i32, %arg1: i32) -> (i32, i32, i32) {
    %c0_i32 = arith.constant 0 : i32
    %c0_i32_0 = arith.constant 0 : i32
    %c0_i32_1 = arith.constant 0 : i32
    return %arg1, %c0_i32, %c0_i32_0 : i32, i32, i32
  }
  func.func @transform_5(%arg0: i32, %arg1: i32) -> (i32, i32, i32) {
    %c0_i32 = arith.constant 0 : i32
    %c0_i32_0 = arith.constant 0 : i32
    %c0_i32_1 = arith.constant 0 : i32
    return %arg1, %c0_i32, %c0_i32_0 : i32, i32, i32
  }
  func.func @transform_6(%arg0: i32, %arg1: i32) -> (i32, i32, i32) {
    %c0_i32 = arith.constant 0 : i32
    %c0_i32_0 = arith.constant 0 : i32
    %c0_i32_1 = arith.constant 0 : i32
    return %arg1, %c0_i32, %c0_i32_0 : i32, i32, i32
  }
  func.func @transform_7(%arg0: i32, %arg1: i32) -> (i32, i32, i32) {
    %c0_i32 = arith.constant 0 : i32
    %c0_i32_0 = arith.constant 0 : i32
    %c0_i32_1 = arith.constant 0 : i32
    return %arg1, %c0_i32, %c0_i32_0 : i32, i32, i32
  }
  func.func @transform_8(%arg0: i32, %arg1: i32) -> (i32, i32) {
    %c0_i32 = arith.constant 0 : i32
    %c0_i32_0 = arith.constant 0 : i32
    %c0_i32_1 = arith.constant 0 : i32
    return %c0_i32, %c0_i32_0 : i32, i32
  }
  func.func @transform_9(%arg0: i32, %arg1: i32) -> (i32, i32) {
    %c0_i32 = arith.constant 0 : i32
    %c0_i32_0 = arith.constant 0 : i32
    return %arg0, %c0_i32 : i32, i32
  }
}

</mosaic_0001>

<llo_original>
// kernel: tpu_custom_call.1
$region0: #{tpu_custom_call.1}
  #allocation0 [shape = 'u32[]', space=smem, size = 0x4, offset = 0x4, fixed_abs, tag = 'smem constant byte address 0x4 - core index']
  #allocation1 [shape = 'u32[144,128]{1,0:T(1,128)}', space=vmem, size = 0x12000, scoped, tag = 'internal scratch']
  %s0 = inlined_call_operand.hbm [shape: f32[16,32], index: 0, kind: input, shape index: {}]
  %s1 = inlined_call_operand.hbm [shape: bf16[2,32,96], index: 1, kind: input, shape index: {}]
  %s2 = inlined_call_operand.vmem [shape: f32[2,1,96], index: 2, kind: input, shape index: {}]
  %s3 = inlined_call_operand.vmem [shape: bf16[2,32,32], index: 3, kind: input, shape index: {}]
  %s4 = inlined_call_operand.hbm [shape: bf16[2,32,2048], index: 4, kind: input, shape index: {}]
  %s5 = inlined_call_operand.hbm [shape: f32[2,1,2048], index: 5, kind: input, shape index: {}]
  %s6 = inlined_call_operand.hbm [shape: bf16[2,32,2048], index: 6, kind: input, shape index: {}]
  %s7 = inlined_call_operand.vmem [shape: f32[2,6,32], index: 7, kind: input, shape index: {}]
  %s8 = inlined_call_operand.vmem [shape: f32[2,32], index: 8, kind: input, shape index: {}]
  %s9 = inlined_call_operand.hbm [shape: f32[16,32], index: 9, kind: output, shape index: {}]
  %s10 = sld [smem:[#allocation0]]
  $region101: #{tpu_custom_call.1} parent=0
    _
  %s12 = ssub.s32 1, %s10
  %s13 = scalar_select 0, %s12, %s10
  $region1: #{tpu_custom_call.1} parent=0
    #allocation2 [shape = 'u8[8192]{0}', space=vmem, size = 0x2000, scoped, tag = 'input window, operand 0, single buffered']
    #allocation3 [shape = 's32[2]{0}', space=sflag, size = 0x8, scoped, tag = 'scoped memory for tpu_custom_call.1']
    #allocation4 [shape = 's32[2]{0}', space=sflag, size = 0x8, scoped, tag = 'scoped memory for tpu_custom_call.1']
    #allocation5 [shape = 'u8[16384]{0}', space=vmem, size = 0x4000, scoped, tag = 'input window, operand 1']
    #allocation6 [shape = 's32[2]{0}', space=sflag, size = 0x8, scoped, tag = 'scoped memory for tpu_custom_call.1']
    #allocation7 [shape = 'u8[262144]{0}', space=vmem, size = 0x40000, scoped, tag = 'input window, operand 4']
    #allocation8 [shape = 'u8[16384]{0}', space=vmem, size = 0x4000, scoped, tag = 'input window, operand 5']
    #allocation9 [shape = 's32[2]{0}', space=sflag, size = 0x8, scoped, tag = 'scoped memory for tpu_custom_call.1']
    #allocation10 [shape = 'u8[262144]{0}', space=vmem, size = 0x40000, scoped, tag = 'input window, operand 6']
    #allocation11 [shape = 'u8[8192]{0}', space=vmem, size = 0x2000, scoped, tag = 'output window, operand 0, single buffered']
    %14 = vsyncpa [#allocation3], 0
    %15 = vsyncpa [#allocation6], 0
    %s16 = scalar_lea.sflag [#allocation6], 1
    %17 = vsyncpa %s16, 0
    %18 = vsyncpa [#allocation9], 0
    %s19 = scalar_lea.sflag [#allocation9], 1
    %20 = vsyncpa %s19, 0
    %21 = vsyncpa [#allocation4], 0
    loop: start=0, step=1, limit=4
    $region2: #{tpu_custom_call.1} parent=1 // loop_pre_header
      _
    $region3: #{tpu_custom_call.1} parent=1 // loop_header
      %s23 = sphi 0, %s27
      %p24 = scmp.ge.s32.totalorder %s23, 4
      %s30 = sphi 0, %s42
      %s31 = sphi 0, %s38
      %s32 = sphi 0, %s30
      %s33 = sphi 0, %s31
      %s34 = sphi 0, %s32
      %s35 = sphi 0, %s33
      %s45 = sphi 0, %s47
      %s48 = sphi 0, %s45
      %s49 = sphi 0, %s48
      %s65 = sphi 0, %s49
      %s71 = sphi 0, %s73
      %s74 = sphi 0, %s71
      %s75 = sphi 0, %s74
      %s91 = sphi 0, %s75
      %s97 = sphi 0, %s99
      %s100 = sphi 0, %s97
      %s101 = sphi 0, %s100
      %s117 = sphi 0, %s101
      %s123 = sphi 0, %s125
      %s126 = sphi 0, %s123
      %s127 = sphi 0, %s126
      %s143 = sphi 0, %s127
      %s149 = sphi 0, %s151
      %s152 = sphi 0, %s149
      %s153 = sphi 0, %s152
      %s169 = sphi 0, %s153
      %s175 = sphi 0, %s177
      %s178 = sphi 0, %s175
      %s179 = sphi 0, %s178
      %s195 = sphi 0, %s179
      %s201 = sphi 0, %s203
      %s204 = sphi 0, %s201
      %s205 = sphi 0, %s204
      %s221 = sphi 0, %s205
      %s227 = sphi 0, %s229
      %s230 = sphi 0, %s227
      %s231 = sphi 0, %s230
      %s247 = sphi 0, %s231
      %s251 = sphi 0, %s251
      %s253 = sphi 0, %s251
      %s254 = sphi 0, %s253
      %s268 = sphi 0, %s254
      %s274 = sphi 0, %s276
      %s277 = sphi 0, %s274
      %s278 = sphi 0, %s277
      %s294 = sphi 0, %s278
    $region4: #{tpu_custom_call.1} parent=1 // loop_header_branch
      %26 = sbr.rel (%p24) target = $region8
    $region5: #{tpu_custom_call.1} parent=1 // loop_body
      %s28 = ssub.s32 %s23, 1
      %s29 = ssub.s32 %s23, 2
      %s36 = sadd.s32 1, %s31
      %p37 = scmp.ge.s32.totalorder %s36, 2
      %s38 = scalar_select %p37, 0, %s36
      %s39 = sadd.s32 1, %s30
      %s40 = scalar_select %p37, %s39, %s30
      %p41 = scmp.ge.s32.totalorder %s40, 1
      %s42 = scalar_select %p41, 0, %s40
      %s43 = ssub.s32 %s30, %s42
      %p44 = scmp.eq.s32.totalorder %s43, 0
      %s46 = sadd.s32 %s45, 1
      %s47 = scalar_select %p44, %s45, %s46
      %p50 = pneg %p44
      %p51 = scmp.eq.s32.totalorder %s23, 1
      %p52 = por %p50, %p51
      %p53 = scmp.ne.s32.totalorder %s45, %s48
      %p54 = scmp.eq.s32.totalorder %s23, 0
      %p55 = por %p53, %p54
      %p56 = scmp.ne.s32.totalorder %s45, %s48
      %p57 = scmp.eq.s32.totalorder %s28, 1
      %p58 = por %p56, %p57
      %p59 = scmp.ne.s32.totalorder %s48, %s49
      %p60 = scmp.eq.s32.totalorder %s28, 0
      %p61 = por %p59, %p60
      %p62 = scmp.ne.s32.totalorder %s48, %s49
      %p63 = scmp.eq.s32.totalorder %s29, 1
      %p64 = por %p62, %p63
      %p66 = scmp.ne.s32.totalorder %s49, %s65
      %p67 = scmp.eq.s32.totalorder %s29, 0
      %p68 = por %p66, %p67
      %s69 = ssub.s32 %s31, %s38
      %p70 = scmp.eq.s32.totalorder %s69, 0
      %s72 = sadd.s32 %s71, 1
      %s73 = scalar_select %p70, %s71, %s72
      %p76 = pneg %p70
      %p77 = scmp.eq.s32.totalorder %s23, 1
      %p78 = por %p76, %p77
      %p79 = scmp.ne.s32.totalorder %s71, %s74
      %p80 = scmp.eq.s32.totalorder %s23, 0
      %p81 = por %p79, %p80
      %p82 = scmp.ne.s32.totalorder %s71, %s74
      %p83 = scmp.eq.s32.totalorder %s28, 1
      %p84 = por %p82, %p83
      %p85 = scmp.ne.s32.totalorder %s74, %s75
      %p86 = scmp.eq.s32.totalorder %s28, 0
      %p87 = por %p85, %p86
      %p88 = scmp.ne.s32.totalorder %s74, %s75
      %p89 = scmp.eq.s32.totalorder %s29, 1
      %p90 = por %p88, %p89
      %p92 = scmp.ne.s32.totalorder %s75, %s91
      %p93 = scmp.eq.s32.totalorder %s29, 0
      %p94 = por %p92, %p93
      %s95 = ssub.s32 %s31, %s38
      %p96 = scmp.eq.s32.totalorder %s95, 0
      %s98 = sadd.s32 %s97, 1
      %s99 = scalar_select %p96, %s97, %s98
      %p102 = pneg %p96
      %p103 = scmp.eq.s32.totalorder %s23, 1
      %p104 = por %p102, %p103
      %p105 = scmp.ne.s32.totalorder %s97, %s100
      %p106 = scmp.eq.s32.totalorder %s23, 0
      %p107 = por %p105, %p106
      %p108 = scmp.ne.s32.totalorder %s97, %s100
      %p109 = scmp.eq.s32.totalorder %s28, 1
      %p110 = por %p108, %p109
      %p111 = scmp.ne.s32.totalorder %s100, %s101
      %p112 = scmp.eq.s32.totalorder %s28, 0
      %p113 = por %p111, %p112
      %p114 = scmp.ne.s32.totalorder %s100, %s101
      %p115 = scmp.eq.s32.totalorder %s29, 1
      %p116 = por %p114, %p115
      %p118 = scmp.ne.s32.totalorder %s101, %s117
      %p119 = scmp.eq.s32.totalorder %s29, 0
      %p120 = por %p118, %p119
      %s121 = ssub.s32 %s31, %s38
      %p122 = scmp.eq.s32.totalorder %s121, 0
      %s124 = sadd.s32 %s123, 1
      %s125 = scalar_select %p122, %s123, %s124
      %p128 = pneg %p122
      %p129 = scmp.eq.s32.totalorder %s23, 1
      %p130 = por %p128, %p129
      %p131 = scmp.ne.s32.totalorder %s123, %s126
      %p132 = scmp.eq.s32.totalorder %s23, 0
      %p133 = por %p131, %p132
      %p134 = scmp.ne.s32.totalorder %s123, %s126
      %p135 = scmp.eq.s32.totalorder %s28, 1
      %p136 = por %p134, %p135
      %p137 = scmp.ne.s32.totalorder %s126, %s127
      %p138 = scmp.eq.s32.totalorder %s28, 0
      %p139 = por %p137, %p138
      %p140 = scmp.ne.s32.totalorder %s126, %s127
      %p141 = scmp.eq.s32.totalorder %s29, 1
      %p142 = por %p140, %p141
      %p144 = scmp.ne.s32.totalorder %s127, %s143
      %p145 = scmp.eq.s32.totalorder %s29, 0
      %p146 = por %p144, %p145
      %s147 = ssub.s32 %s31, %s38
      %p148 = scmp.eq.s32.totalorder %s147, 0
      %s150 = sadd.s32 %s149, 1
      %s151 = scalar_select %p148, %s149, %s150
      %p154 = pneg %p148
      %p155 = scmp.eq.s32.totalorder %s23, 1
      %p156 = por %p154, %p155
      %p157 = scmp.ne.s32.totalorder %s149, %s152
      %p158 = scmp.eq.s32.totalorder %s23, 0
      %p159 = por %p157, %p158
      %p160 = scmp.ne.s32.totalorder %s149, %s152
      %p161 = scmp.eq.s32.totalorder %s28, 1
      %p162 = por %p160, %p161
      %p163 = scmp.ne.s32.totalorder %s152, %s153
      %p164 = scmp.eq.s32.totalorder %s28, 0
      %p165 = por %p163, %p164
      %p166 = scmp.ne.s32.totalorder %s152, %s153
      %p167 = scmp.eq.s32.totalorder %s29, 1
      %p168 = por %p166, %p167
      %p170 = scmp.ne.s32.totalorder %s153, %s169
      %p171 = scmp.eq.s32.totalorder %s29, 0
      %p172 = por %p170, %p171
      %s173 = ssub.s32 %s31, %s38
      %p174 = scmp.eq.s32.totalorder %s173, 0
      %s176 = sadd.s32 %s175, 1
      %s177 = scalar_select %p174, %s175, %s176
      %p180 = pneg %p174
      %p181 = scmp.eq.s32.totalorder %s23, 1
      %p182 = por %p180, %p181
      %p183 = scmp.ne.s32.totalorder %s175, %s178
      %p184 = scmp.eq.s32.totalorder %s23, 0
      %p185 = por %p183, %p184
      %p186 = scmp.ne.s32.totalorder %s175, %s178
      %p187 = scmp.eq.s32.totalorder %s28, 1
      %p188 = por %p186, %p187
      %p189 = scmp.ne.s32.totalorder %s178, %s179
      %p190 = scmp.eq.s32.totalorder %s28, 0
      %p191 = por %p189, %p190
      %p192 = scmp.ne.s32.totalorder %s178, %s179
      %p193 = scmp.eq.s32.totalorder %s29, 1
      %p194 = por %p192, %p193
      %p196 = scmp.ne.s32.totalorder %s179, %s195
      %p197 = scmp.eq.s32.totalorder %s29, 0
      %p198 = por %p196, %p197
      %s199 = ssub.s32 %s31, %s38
      %p200 = scmp.eq.s32.totalorder %s199, 0
      %s202 = sadd.s32 %s201, 1
      %s203 = scalar_select %p200, %s201, %s202
      %p206 = pneg %p200
      %p207 = scmp.eq.s32.totalorder %s23, 1
      %p208 = por %p206, %p207
      %p209 = scmp.ne.s32.totalorder %s201, %s204
      %p210 = scmp.eq.s32.totalorder %s23, 0
      %p211 = por %p209, %p210
      %p212 = scmp.ne.s32.totalorder %s201, %s204
      %p213 = scmp.eq.s32.totalorder %s28, 1
      %p214 = por %p212, %p213
      %p215 = scmp.ne.s32.totalorder %s204, %s205
      %p216 = scmp.eq.s32.totalorder %s28, 0
      %p217 = por %p215, %p216
      %p218 = scmp.ne.s32.totalorder %s204, %s205
      %p219 = scmp.eq.s32.totalorder %s29, 1
      %p220 = por %p218, %p219
      %p222 = scmp.ne.s32.totalorder %s205, %s221
      %p223 = scmp.eq.s32.totalorder %s29, 0
      %p224 = por %p222, %p223
      %s225 = ssub.s32 %s31, %s38
      %p226 = scmp.eq.s32.totalorder %s225, 0
      %s228 = sadd.s32 %s227, 1
      %s229 = scalar_select %p226, %s227, %s228
      %p232 = pneg %p226
      %p233 = scmp.eq.s32.totalorder %s23, 1
      %p234 = por %p232, %p233
      %p235 = scmp.ne.s32.totalorder %s227, %s230
      %p236 = scmp.eq.s32.totalorder %s23, 0
      %p237 = por %p235, %p236
      %p238 = scmp.ne.s32.totalorder %s227, %s230
      %p239 = scmp.eq.s32.totalorder %s28, 1
      %p240 = por %p238, %p239
      %p241 = scmp.ne.s32.totalorder %s230, %s231
      %p242 = scmp.eq.s32.totalorder %s28, 0
      %p243 = por %p241, %p242
      %p244 = scmp.ne.s32.totalorder %s230, %s231
      %p245 = scmp.eq.s32.totalorder %s29, 1
      %p246 = por %p244, %p245
      %p248 = scmp.ne.s32.totalorder %s231, %s247
      %p249 = scmp.eq.s32.totalorder %s29, 0
      %p250 = por %p248, %p249
      %s252 = sadd.s32 %s251, 1
      %p255 = scmp.eq.s32.totalorder %s23, 1
      %p256 = scmp.ne.s32.totalorder %s251, %s253
      %p257 = scmp.eq.s32.totalorder %s23, 0
      %p258 = por %p256, %p257
      %p259 = scmp.ne.s32.totalorder %s251, %s253
      %p260 = scmp.eq.s32.totalorder %s28, 1
      %p261 = por %p259, %p260
      %p262 = scmp.ne.s32.totalorder %s253, %s254
      %p263 = scmp.eq.s32.totalorder %s28, 0
      %p264 = por %p262, %p263
      %p265 = scmp.ne.s32.totalorder %s253, %s254
      %p266 = scmp.eq.s32.totalorder %s29, 1
      %p267 = por %p265, %p266
      %p269 = scmp.ne.s32.totalorder %s254, %s268
      %p270 = scmp.eq.s32.totalorder %s29, 0
      %p271 = por %p269, %p270
      %s272 = ssub.s32 %s30, %s42
      %p273 = scmp.eq.s32.totalorder %s272, 0
      %s275 = sadd.s32 %s274, 1
      %s276 = scalar_select %p273, %s274, %s275
      %p279 = pneg %p273
      %p280 = scmp.eq.s32.totalorder %s23, 1
      %p281 = por %p279, %p280
      %p282 = scmp.ne.s32.totalorder %s274, %s277
      %p283 = scmp.eq.s32.totalorder %s23, 0
      %p284 = por %p282, %p283
      %p285 = scmp.ne.s32.totalorder %s274, %s277
      %p286 = scmp.eq.s32.totalorder %s28, 1
      %p287 = por %p285, %p286
      %p288 = scmp.ne.s32.totalorder %s277, %s278
      %p289 = scmp.eq.s32.totalorder %s28, 0
      %p290 = por %p288, %p289
      %p291 = scmp.ne.s32.totalorder %s277, %s278
      %p292 = scmp.eq.s32.totalorder %s29, 1
      %p293 = por %p291, %p292
      %p295 = scmp.ne.s32.totalorder %s278, %s294
      %p296 = scmp.eq.s32.totalorder %s29, 0
      %p297 = por %p295, %p296
      %p298 = scmp.le.s32.totalorder 1, %s23
      %p299 = scmp.lt.s32.totalorder %s23, 3
      %p300 = pnand %p298, %p299
      %p301 = pneg %p300
      // Predicated region
      $region9: #{tpu_custom_call.1} parent=5 // pred_check
        _
      $region10: #{tpu_custom_call.1} parent=5 // pred_check_branch
        %303 = sbr.rel (%p300) target = $region12
      $region11: #{tpu_custom_call.1} parent=5 // pred_region
        %s304 = ssub.s32 %s23, 1
        // Predicated region
        $region13: #{tpu_custom_call.1} parent=11 // pred_check
          %p305 = pneg %p61
        $region14: #{tpu_custom_call.1} parent=11 // pred_check_branch
          %307 = sbr.rel (%p305) target = $region16
        $region15: #{tpu_custom_call.1} parent=11 // pred_region
          %s308 = smul.u32 2, %s32
          %s310 = ssub.s32 256, 256
          %311 = vsyncadd [#allocation3], %s310
          %s312 = smul.addr %s308, 128
          %s313 = scalar_lea.hbm %s0, %s312
          %s314 = sshll.u32 [#allocation2], 4
          %s315 = int_to_ptr.vmem [resolvable:$true] %s314
          %320 = dma.hbm_to_vmem [thread:$0]  %s313, 256, %s315, [#allocation3], 128, 128, 8
        $region16: #{tpu_custom_call.1} parent=11 // pred_fallthru
          _
        // Predicated region
        $region17: #{tpu_custom_call.1} parent=11 // pred_check
          %p321 = pneg %p264
        $region18: #{tpu_custom_call.1} parent=11 // pred_check_branch
          %323 = sbr.rel (%p321) target = $region20
        $region19: #{tpu_custom_call.1} parent=11 // pred_region
          _
        $region20: #{tpu_custom_call.1} parent=11 // pred_fallthru
          _
      $region12: #{tpu_custom_call.1} parent=5 // pred_fallthru
        _
      %p324 = scmp.lt.s32.totalorder %s23, 2
      // Predicated region
      $region21: #{tpu_custom_call.1} parent=5 // pred_check
        %p325 = pneg %p324
      $region22: #{tpu_custom_call.1} parent=5 // pred_check_branch
        %327 = sbr.rel (%p325) target = $region24
      $region23: #{tpu_custom_call.1} parent=5 // pred_region
        // Predicated region
        $region25: #{tpu_custom_call.1} parent=23 // pred_check
          %p328 = pneg %p81
        $region26: #{tpu_custom_call.1} parent=23 // pred_check_branch
          %330 = sbr.rel (%p328) target = $region28
        $region27: #{tpu_custom_call.1} parent=23 // pred_region
          %s331 = sand.u32 %s23, 1
          %s332 = scalar_lea.sflag [#allocation6], %s331
          %s333 = sand.u32 %s71, 1
          %s334 = smul.addr %s333, 16
          %s335 = scalar_lea.vmem [#allocation5], %s334
          %s337 = ssub.s32 256, 256
          %338 = vsyncadd %s332, %s337
          %s339 = smul.addr %s31, 4
          %s340 = smul.addr %s339, 64
          %s341 = scalar_lea.hbm %s1, %s340
          %s342 = sshll.u32 %s335, 4
          %s343 = int_to_ptr.vmem [resolvable:$true] %s342
          %348 = dma.hbm_to_vmem [thread:$0]  %s341, 256, %s343, %s332, 64, 64, 4
        $region28: #{tpu_custom_call.1} parent=23 // pred_fallthru
          _
        // Predicated region
        $region29: #{tpu_custom_call.1} parent=23 // pred_check
          %p349 = pneg %p107
        $region30: #{tpu_custom_call.1} parent=23 // pred_check_branch
          %351 = sbr.rel (%p349) target = $region32
        $region31: #{tpu_custom_call.1} parent=23 // pred_region
          %p352 = scmp.lt.s32.totalorder %s31, 1
          %s353 = scalar_select %p352, %s31, 1
          %s354 = scalar_lea.vmem %s2, %s353
        $region32: #{tpu_custom_call.1} parent=23 // pred_fallthru
          _
        // Predicated region
        $region33: #{tpu_custom_call.1} parent=23 // pred_check
          %p355 = pneg %p133
        $region34: #{tpu_custom_call.1} parent=23 // pred_check_branch
          %357 = sbr.rel (%p355) target = $region36
        $region35: #{tpu_custom_call.1} parent=23 // pred_region
          %p358 = scmp.lt.s32.totalorder %s31, 1
          %s359 = scalar_select %p358, %s31, 1
          %s360 = smul.addr %s359, 4
          %s361 = smul.addr %s360, 4
          %s362 = scalar_lea.vmem %s3, %s361
        $region36: #{tpu_custom_call.1} parent=23 // pred_fallthru
          _
        // Predicated region
        $region37: #{tpu_custom_call.1} parent=23 // pred_check
          %p363 = pneg %p159
        $region38: #{tpu_custom_call.1} parent=23 // pred_check_branch
          %365 = sbr.rel (%p363) target = $region40
        $region39: #{tpu_custom_call.1} parent=23 // pred_region
          %s366 = sand.u32 %s23, 1
          %s367 = scalar_lea.sflag [#allocation6], %s366
          %s368 = sand.u32 %s149, 1
          %s369 = smul.addr %s368, 256
          %s370 = scalar_lea.vmem [#allocation7], %s369
          %s372 = ssub.s32 4096, 4096
          %373 = vsyncadd %s367, %s372
          %s374 = smul.addr %s31, 64
          %s375 = smul.addr %s374, 64
          %s376 = scalar_lea.hbm %s4, %s375
          %s377 = sshll.u32 %s370, 4
          %s378 = int_to_ptr.vmem [resolvable:$true] %s377
          %383 = dma.hbm_to_vmem [thread:$0]  %s376, 4096, %s378, %s367, 1024, 1024, 64
        $region40: #{tpu_custom_call.1} parent=23 // pred_fallthru
          _
        // Predicated region
        $region41: #{tpu_custom_call.1} parent=23 // pred_check
          %p384 = pneg %p185
        $region42: #{tpu_custom_call.1} parent=23 // pred_check_branch
          %386 = sbr.rel (%p384) target = $region44
        $region43: #{tpu_custom_call.1} parent=23 // pred_region
          %s387 = sand.u32 %s23, 1
          %s388 = scalar_lea.sflag [#allocation9], %s387
          %s389 = sand.u32 %s175, 1
          %s390 = smul.addr %s389, 16
          %s391 = scalar_lea.vmem [#allocation8], %s390
          %s393 = ssub.s32 256, 256
          %394 = vsyncadd %s388, %s393
          %s395 = smul.addr %s31, 16
          %s396 = smul.addr %s395, 16
          %s397 = scalar_lea.hbm %s5, %s396
          %s399 = sshll.u32 %s391, 4
          %s400 = int_to_ptr.vmem [resolvable:$true] %s399
          %402 = dma.hbm_to_vmem [thread:$0]  %s397, 256, %s400, %s388
        $region44: #{tpu_custom_call.1} parent=23 // pred_fallthru
          _
        // Predicated region
        $region45: #{tpu_custom_call.1} parent=23 // pred_check
          %p403 = pneg %p211
        $region46: #{tpu_custom_call.1} parent=23 // pred_check_branch
          %405 = sbr.rel (%p403) target = $region48
        $region47: #{tpu_custom_call.1} parent=23 // pred_region
          %s406 = sand.u32 %s23, 1
          %s407 = scalar_lea.sflag [#allocation9], %s406
          %s408 = sand.u32 %s201, 1
          %s409 = smul.addr %s408, 256
          %s410 = scalar_lea.vmem [#allocation10], %s409
          %s412 = ssub.s32 4096, 4096
          %413 = vsyncadd %s407, %s412
          %s414 = smul.addr %s31, 64
          %s415 = smul.addr %s414, 64
          %s416 = scalar_lea.hbm %s6, %s415
          %s417 = sshll.u32 %s410, 4
          %s418 = int_to_ptr.vmem [resolvable:$true] %s417
          %423 = dma.hbm_to_vmem [thread:$0]  %s416, 4096, %s418, %s407, 1024, 1024, 64
        $region48: #{tpu_custom_call.1} parent=23 // pred_fallthru
          _
        // Predicated region
        $region49: #{tpu_custom_call.1} parent=23 // pred_check
          %p424 = pneg %p237
        $region50: #{tpu_custom_call.1} parent=23 // pred_check_branch
          %426 = sbr.rel (%p424) target = $region52
        $region51: #{tpu_custom_call.1} parent=23 // pred_region
          %p427 = scmp.lt.s32.totalorder %s31, 1
          %s428 = scalar_select %p427, %s31, 1
          %s429 = smul.addr %s428, 8
          %s430 = scalar_lea.vmem %s7, %s429
        $region52: #{tpu_custom_call.1} parent=23 // pred_fallthru
          _
      $region24: #{tpu_custom_call.1} parent=5 // pred_fallthru
        _
      %p431 = scmp.le.s32.totalorder 1, %s23
      %p432 = scmp.lt.s32.totalorder %s23, 3
      %p433 = pnand %p431, %p432
      %p434 = pneg %p433
      // Predicated region
      $region53: #{tpu_custom_call.1} parent=5 // pred_check
        _
      $region54: #{tpu_custom_call.1} parent=5 // pred_check_branch
        %436 = sbr.rel (%p433) target = $region56
      $region55: #{tpu_custom_call.1} parent=5 // pred_region
        %s437 = ssub.s32 %s23, 1
        // Predicated region
        $region57: #{tpu_custom_call.1} parent=55 // pred_check
          %p438 = pneg %p61
        $region58: #{tpu_custom_call.1} parent=55 // pred_check_branch
          %440 = sbr.rel (%p438) target = $region60
        $region59: #{tpu_custom_call.1} parent=55 // pred_region
          %441 = dma.done [#allocation3], 256
        $region60: #{tpu_custom_call.1} parent=55 // pred_fallthru
          _
        %s442 = sand.u32 %s28, 1
        %s443 = scalar_lea.sflag [#allocation6], %s442
        %s444 = sand.u32 %s74, 1
        %s445 = smul.addr %s444, 16
        %s446 = scalar_lea.vmem [#allocation5], %s445
        // Predicated region
        $region61: #{tpu_custom_call.1} parent=55 // pred_check
          %p447 = pneg %p87
        $region62: #{tpu_custom_call.1} parent=55 // pred_check_branch
          %449 = sbr.rel (%p447) target = $region64
        $region63: #{tpu_custom_call.1} parent=55 // pred_region
          %450 = dma.done %s443, 256
        $region64: #{tpu_custom_call.1} parent=55 // pred_fallthru
          _
        %s451 = sand.u32 %s28, 1
        %s452 = scalar_lea.sflag [#allocation6], %s451
        %s453 = sand.u32 %s152, 1
        %s454 = smul.addr %s453, 256
        %s455 = scalar_lea.vmem [#allocation7], %s454
        // Predicated region
        $region65: #{tpu_custom_call.1} parent=55 // pred_check
          %p456 = pneg %p165
        $region66: #{tpu_custom_call.1} parent=55 // pred_check_branch
          %458 = sbr.rel (%p456) target = $region68
        $region67: #{tpu_custom_call.1} parent=55 // pred_region
          %459 = dma.done %s452, 4096
        $region68: #{tpu_custom_call.1} parent=55 // pred_fallthru
          _
        %s460 = sand.u32 %s28, 1
        %s461 = scalar_lea.sflag [#allocation9], %s460
        %s462 = sand.u32 %s178, 1
        %s463 = smul.addr %s462, 16
        %s464 = scalar_lea.vmem [#allocation8], %s463
        // Predicated region
        $region69: #{tpu_custom_call.1} parent=55 // pred_check
          %p465 = pneg %p191
        $region70: #{tpu_custom_call.1} parent=55 // pred_check_branch
          %467 = sbr.rel (%p465) target = $region72
        $region71: #{tpu_custom_call.1} parent=55 // pred_region
          %468 = dma.done %s461, 256
        $region72: #{tpu_custom_call.1} parent=55 // pred_fallthru
          _
        %s469 = sand.u32 %s28, 1
        %s470 = scalar_lea.sflag [#allocation9], %s469
        %s471 = sand.u32 %s204, 1
        %s472 = smul.addr %s471, 256
        %s473 = scalar_lea.vmem [#allocation10], %s472
        // Predicated region
        $region73: #{tpu_custom_call.1} parent=55 // pred_check
          %p474 = pneg %p217
        $region74: #{tpu_custom_call.1} parent=55 // pred_check_branch
          %476 = sbr.rel (%p474) target = $region76
        $region75: #{tpu_custom_call.1} parent=55 // pred_region
          %477 = dma.done %s470, 4096
        $region76: #{tpu_custom_call.1} parent=55 // pred_fallthru
          _
        %p478 = pneg %p61
        %p479 = pneg %p58
        %s480 = sand.u32 %s28, 1
        %s481 = scalar_lea.sflag [#allocation6], %s480
        %s482 = sand.u32 %s74, 1
        %s483 = smul.addr %s482, 16
        %s484 = scalar_lea.vmem [#allocation5], %s483
        %p485 = pneg %p87
        %p486 = pneg %p84
        %p487 = scmp.lt.s32.totalorder %s33, 1
        %s488 = scalar_select %p487, %s33, 1
        %s489 = scalar_lea.vmem %s2, %s488
        %p490 = pneg %p113
        %p491 = pneg %p110
        %p492 = scmp.lt.s32.totalorder %s33, 1
        %s493 = scalar_select %p492, %s33, 1
        %s494 = smul.addr %s493, 4
        %s495 = smul.addr %s494, 4
        %s496 = scalar_lea.vmem %s3, %s495
        %p497 = pneg %p139
        %p498 = pneg %p136
        %s499 = sand.u32 %s28, 1
        %s500 = scalar_lea.sflag [#allocation6], %s499
        %s501 = sand.u32 %s152, 1
        %s502 = smul.addr %s501, 256
        %s503 = scalar_lea.vmem [#allocation7], %s502
        %p504 = pneg %p165
        %p505 = pneg %p162
        %s506 = sand.u32 %s28, 1
        %s507 = scalar_lea.sflag [#allocation9], %s506
        %s508 = sand.u32 %s178, 1
        %s509 = smul.addr %s508, 16
        %s510 = scalar_lea.vmem [#allocation8], %s509
        %p511 = pneg %p191
        %p512 = pneg %p188
        %s513 = sand.u32 %s28, 1
        %s514 = scalar_lea.sflag [#allocation9], %s513
        %s515 = sand.u32 %s204, 1
        %s516 = smul.addr %s515, 256
        %s517 = scalar_lea.vmem [#allocation10], %s516
        %p518 = pneg %p217
        %p519 = pneg %p214
        %p520 = scmp.lt.s32.totalorder %s33, 1
        %s521 = scalar_select %p520, %s33, 1
        %s522 = smul.addr %s521, 8
        %s523 = scalar_lea.vmem %s7, %s522
        %p524 = pneg %p243
        %p525 = pneg %p240
        %p526 = pneg %p264
        %p527 = pneg %p261
        %p528 = pneg %p290
        %p529 = pneg %p287
        %s530 = smul.u32 2, %s32
        %p531 = scmp.lt.s32.totalorder %s33, 1
        %s532 = scalar_select %p531, %s33, 1
        %s533 = scalar_lea.vmem %s2, %s532
        %p534 = scmp.lt.s32.totalorder %s33, 1
        %s535 = scalar_select %p534, %s33, 1
        %s536 = smul.addr %s535, 4
        %s537 = smul.addr %s536, 4
        %s538 = scalar_lea.vmem %s3, %s537
        %p539 = scmp.lt.s32.totalorder %s33, 1
        %s540 = scalar_select %p539, %s33, 1
        %s541 = smul.addr %s540, 8
        %s542 = scalar_lea.vmem %s7, %s541
        %s543 = smul.u32 2, %s32
        %p545 = scmp.eq.s32.totalorder %s33, 0
        // Predicated region
        $region77: #{tpu_custom_call.1} parent=55 // pred_check
          %p546 = pneg %p545
        $region78: #{tpu_custom_call.1} parent=55 // pred_check_branch
          %548 = sbr.rel (%p546) target = $region80
        $region79: #{tpu_custom_call.1} parent=55 // pred_region
          %v549 = vld [vmem:[#allocation2] sm:$0xff]
          %v550 = vld [vmem:[#allocation2 + $0x8] sm:$0xff]
          %vm551 = vcmask 261120
          %552 = vst.msk [vmem:[#allocation11] sm:$0xff] %vm551, %v549
          %553 = vst.msk [vmem:[#allocation11 + $0x8] sm:$0xff] %vm551, %v550
        $region80: #{tpu_custom_call.1} parent=55 // pred_fallthru
          _
        %v554 = vld [vmem:[#allocation11] sm:$0xff]
        %v555 = vld [vmem:[#allocation11 + $0x8] sm:$0xff]
        %v556 = vld [vmem:[%s542] sm:$0x3f]
        %v557 = vpack.c.bf16 %v555, %v554
        %v558 = vld [vmem:[%s446] sm:$0xf]
        %v559 = vld [vmem:[%s446 + $0x4] sm:$0xf]
        %v560 = vld [vmem:[%s446 + $0x8] sm:$0xf]
        %v561 = vld [vmem:[%s446 + $0xc] sm:$0xf]
        %v562 = vld [vmem:[%s533] sm:$0x1]
        %v564 = vlaneseq
        %v565 = vshrl.u32 %v564, 7
        %v566 = vsub.s32 0, %v565
        %v567 = vrot.slane %v562, %v566
        %v573 = vunpack.c.l.b16 %v558
        %v574 = vunpack.c.l.b16 %v559
        %v575 = vunpack.c.l.b16 %v560
        %v576 = vunpack.c.l.b16 %v561
        %v577 = vpack.c.b16 %v574, %v573
        %v578 = vpack.c.b16 %v576, %v575
        %vm581 = vcmask 261120
        %v583 = vsel %vm581, %v557, 0
        %585 = vmatprep.subr.bf16.mxu0 0
        %586 = vmatpush1.bf16.msra.mxu0 %v577
        %587 = vmatprep.subr.bf16.mxu0 0
        %588 = vmatpush1.bf16.msra.mxu0 %v578
        %589 = vmatprep.subr.bf16.mxu0 0
        %590 = vmatpush1.bf16.msra.mxu0 0
        %591 = vmatprep.subr.bf16.mxu0 0
        %592 = vmatpush1.bf16.msra.mxu0 0
        %593 = vmatprep.subr.bf16.mxu0 0
        %594 = vmatpush1.bf16.msra.mxu0 0
        %595 = vmatprep.subr.bf16.mxu0 0
        %596 = vmatpush1.bf16.msra.mxu0 0
        %597 = vmatprep.subr.bf16.mxu0 0
        %598 = vmatpush1.bf16.msra.mxu0 0
        %599 = vmatprep.subr.bf16.mxu0 0
        %600 = vmatpush1.bf16.msra.mxu0 0
        %601 = vmatprep.subr.bf16.mxu0 0
        %602 = vmatpush1.bf16.msra.mxu0 0
        %603 = vmatprep.subr.bf16.mxu0 0
        %604 = vmatpush1.bf16.msra.mxu0 0
        %605 = vmatprep.subr.bf16.mxu0 0
        %606 = vmatpush1.bf16.msra.mxu0 0
        %607 = vmatprep.subr.bf16.mxu0 0
        %608 = vmatpush1.bf16.msra.mxu0 0
        %609 = vmatprep.subr.bf16.mxu0 0
        %610 = vmatpush1.bf16.msra.mxu0 0
        %611 = vmatprep.subr.bf16.mxu0 0
        %612 = vmatpush1.bf16.msra.mxu0 0
        %613 = vmatprep.subr.bf16.mxu0 0
        %614 = vmatpush1.bf16.msra.mxu0 0
        %615 = vmatprep.subr.bf16.mxu0 0
        %616 = vmatpush1.bf16.msra.mxu0 0
        %617 = vmatprep.mubr.bf16.mxu0 0
        %618 = vmatmul.mubr.bf16.gmra.mrb[0].mxu0 %v583
        %v619 = vpop.f32.mrb[0].mxu0
        %v620 = vadd.f32 %v567, %v619
        %v621 = vpop.f32.mrb[0].mxu0
        %v622 = vpop.f32.mrb[0].mxu0
        %v623 = vadd.f32 %v567, %v622
        %v624 = vpop.f32.mrb[0].mxu0
        %625 = vdwg.mxu0
        %v626 = vpack.c.bf16 %v623, %v620
        %v628 = vunpack.c.l.b16 %v626
        %v629 = vunpack.c.h.b16 %v626
        %v630 = vpack.c.b16 %v628, %v628
        %v631 = vpack.c.b16 %v629, %v629
        %v632 = vld [vmem:[%s538] sm:$0xf]
        %v633 = vld [vmem:[%s538 + $0x4] sm:$0xf]
        %v634 = vld [vmem:[%s538 + $0x8] sm:$0xf]
        %v635 = vld [vmem:[%s538 + $0xc] sm:$0xf]
        %636 = vrot.lane.b32.xlu0 %v630, 96
        %v637 = vpop.permute.xlu0 %636
        %vm638 = vcmask 31744
        %v640 = vsel %vm638, %v630, 0
        %v643 = vsel %vm638, %v637, 0
        %645 = vmatprep.subr.bf16.mxu0 0
        %646 = vmatpush1.bf16.xpose.msra.mxu0 %v643
        %647 = vmatprep.subr.bf16.mxu0 0
        %648 = vmatpush1.bf16.xpose.msra.mxu0 0
        %649 = vmatprep.subr.bf16.mxu0 0
        %650 = vmatpush1.bf16.xpose.msra.mxu0 0
        %651 = vmatprep.subr.bf16.mxu0 0
        %652 = vmatpush1.bf16.xpose.msra.mxu0 0
        %653 = vmatprep.subr.bf16.mxu0 0
        %654 = vmatpush1.bf16.xpose.msra.mxu0 0
        %655 = vmatprep.subr.bf16.mxu0 0
        %656 = vmatpush1.bf16.xpose.msra.mxu0 0
        %657 = vmatprep.subr.bf16.mxu0 0
        %658 = vmatpush1.bf16.xpose.msra.mxu0 0
        %659 = vmatprep.subr.bf16.mxu0 0
        %660 = vmatpush1.bf16.xpose.msra.mxu0 0
        %661 = vmatprep.subr.bf16.mxu0 0
        %662 = vmatpush1.bf16.xpose.msra.mxu0 0
        %663 = vmatprep.subr.bf16.mxu0 0
        %664 = vmatpush1.bf16.xpose.msra.mxu0 0
        %665 = vmatprep.subr.bf16.mxu0 0
        %666 = vmatpush1.bf16.xpose.msra.mxu0 0
        %667 = vmatprep.subr.bf16.mxu0 0
        %668 = vmatpush1.bf16.xpose.msra.mxu0 0
        %669 = vmatprep.subr.bf16.mxu0 0
        %670 = vmatpush1.bf16.xpose.msra.mxu0 0
        %671 = vmatprep.subr.bf16.mxu0 0
        %672 = vmatpush1.bf16.xpose.msra.mxu0 0
        %673 = vmatprep.subr.bf16.mxu0 0
        %674 = vmatpush1.bf16.xpose.msra.mxu0 0
        %675 = vmatprep.subr.bf16.mxu0 0
        %676 = vmatpush1.bf16.xpose.msra.mxu0 0
        %677 = vmatprep.mubr.bf16.mxu0 0
        %678 = vmatmul.mubr.bf16.gmra.mrb[0].mxu0 %v640
        %v679 = vpop.f32.mrb[0].mxu0
        %v680 = vadd.f32 0.0, %v679
        %v681 = vpop.f32.mrb[0].mxu0
        %v682 = vpop.f32.mrb[0].mxu0
        %v683 = vpop.f32.mrb[0].mxu0
        %684 = vdwg.mxu0
        %685 = vrot.lane.b32.xlu0 %v631, 96
        %v686 = vpop.permute.xlu0 %685
        %v688 = vsel %vm638, %v631, 0
        %v691 = vsel %vm638, %v686, 0
        %693 = vmatprep.subr.bf16.mxu0 0
        %694 = vmatpush1.bf16.xpose.msra.mxu0 %v691
        %695 = vmatprep.subr.bf16.mxu0 0
        %696 = vmatpush1.bf16.xpose.msra.mxu0 0
        %697 = vmatprep.subr.bf16.mxu0 0
        %698 = vmatpush1.bf16.xpose.msra.mxu0 0
        %699 = vmatprep.subr.bf16.mxu0 0
        %700 = vmatpush1.bf16.xpose.msra.mxu0 0
        %701 = vmatprep.subr.bf16.mxu0 0
        %702 = vmatpush1.bf16.xpose.msra.mxu0 0
        %703 = vmatprep.subr.bf16.mxu0 0
        %704 = vmatpush1.bf16.xpose.msra.mxu0 0
        %705 = vmatprep.subr.bf16.mxu0 0
        %706 = vmatpush1.bf16.xpose.msra.mxu0 0
        %707 = vmatprep.subr.bf16.mxu0 0
        %708 = vmatpush1.bf16.xpose.msra.mxu0 0
        %709 = vmatprep.subr.bf16.mxu0 0
        %710 = vmatpush1.bf16.xpose.msra.mxu0 0
        %711 = vmatprep.subr.bf16.mxu0 0
        %712 = vmatpush1.bf16.xpose.msra.mxu0 0
        %713 = vmatprep.subr.bf16.mxu0 0
        %714 = vmatpush1.bf16.xpose.msra.mxu0 0
        %715 = vmatprep.subr.bf16.mxu0 0
        %716 = vmatpush1.bf16.xpose.msra.mxu0 0
        %717 = vmatprep.subr.bf16.mxu0 0
        %718 = vmatpush1.bf16.xpose.msra.mxu0 0
        %719 = vmatprep.subr.bf16.mxu0 0
        %720 = vmatpush1.bf16.xpose.msra.mxu0 0
        %721 = vmatprep.subr.bf16.mxu0 0
        %722 = vmatpush1.bf16.xpose.msra.mxu0 0
        %723 = vmatprep.subr.bf16.mxu0 0
        %724 = vmatpush1.bf16.xpose.msra.mxu0 0
        %725 = vmatprep.mubr.bf16.mxu0 0
        %726 = vmatmul.mubr.bf16.gmra.mrb[0].mxu0 %v688
        %v727 = vpop.f32.mrb[0].mxu0
        %v728 = vadd.f32 0.0, %v727
        %v729 = vpop.f32.mrb[0].mxu0
        %v730 = vpop.f32.mrb[0].mxu0
        %v731 = vpop.f32.mrb[0].mxu0
        %732 = vdwg.mxu0
        %v733 = vmul.f32 %v680, 0.5
        %v734 = vmul.f32 %v728, 0.5
        %vm735 = vcmask 64512
        %v736 = vsel %vm735, %v733, -inf
        %737 = vmax.xlane.f32.xlu0 %v736
        %v738 = vpop.xlane.xlu0 %737
        %v739 = vsel %vm735, %v734, -inf
        %740 = vmax.xlane.f32.xlu0 %v739
        %v741 = vpop.xlane.xlu0 %740
        %v742 = vsub.f32 %v733, %v738
        %v743 = vsub.f32 %v734, %v741
        %v744 = vmul.f32 %v742, 1.442695
        %v745 = vpow.pop %v744
        %v746 = vmul.f32 %v743, 1.442695
        %v747 = vpow.pop %v746
        %v748 = vsel %vm735, %v745, 0.0
        %749 = vadd.xlane.f32.xlu0 %v748
        %v750 = vpop.xlane.xlu0 %749
        %v751 = vsel %vm735, %v747, 0.0
        %752 = vadd.xlane.f32.xlu0 %v751
        %v753 = vpop.xlane.xlu0 %752
        %v754 = vrcp.pop %v750
        %v755 = vrcp.pop %v753
        %v756 = vmul.f32 %v745, %v754
        %v757 = vmul.f32 %v747, %v755
        %v758 = vpack.c.bf16 %v756, %v756
        %v759 = vpack.c.bf16 %v757, %v757
        %760 = vrot.lane.b32.xlu0 %v630, 64
        %v761 = vpop.permute.xlu0 %760
        %v763 = vsel %vm735, %v758, 0
        %vm765 = vcmask 1043456
        %v767 = vsel %vm765, %v761, 0
        %769 = vmatprep.subr.bf16.mxu0 0
        %770 = vmatpush1.bf16.msra.mxu0 %v767
        %771 = vmatprep.subr.bf16.mxu0 0
        %772 = vmatpush1.bf16.msra.mxu0 0
        %773 = vmatprep.subr.bf16.mxu0 0
        %774 = vmatpush1.bf16.msra.mxu0 0
        %775 = vmatprep.subr.bf16.mxu0 0
        %776 = vmatpush1.bf16.msra.mxu0 0
        %777 = vmatprep.subr.bf16.mxu0 0
        %778 = vmatpush1.bf16.msra.mxu0 0
        %779 = vmatprep.subr.bf16.mxu0 0
        %780 = vmatpush1.bf16.msra.mxu0 0
        %781 = vmatprep.subr.bf16.mxu0 0
        %782 = vmatpush1.bf16.msra.mxu0 0
        %783 = vmatprep.subr.bf16.mxu0 0
        %784 = vmatpush1.bf16.msra.mxu0 0
        %785 = vmatprep.subr.bf16.mxu0 0
        %786 = vmatpush1.bf16.msra.mxu0 0
        %787 = vmatprep.subr.bf16.mxu0 0
        %788 = vmatpush1.bf16.msra.mxu0 0
        %789 = vmatprep.subr.bf16.mxu0 0
        %790 = vmatpush1.bf16.msra.mxu0 0
        %791 = vmatprep.subr.bf16.mxu0 0
        %792 = vmatpush1.bf16.msra.mxu0 0
        %793 = vmatprep.subr.bf16.mxu0 0
        %794 = vmatpush1.bf16.msra.mxu0 0
        %795 = vmatprep.subr.bf16.mxu0 0
        %796 = vmatpush1.bf16.msra.mxu0 0
        %797 = vmatprep.subr.bf16.mxu0 0
        %798 = vmatpush1.bf16.msra.mxu0 0
        %799 = vmatprep.subr.bf16.mxu0 0
        %800 = vmatpush1.bf16.msra.mxu0 0
        %801 = vmatprep.mubr.bf16.mxu0 0
        %802 = vmatmul.mubr.bf16.gmra.mrb[0].mxu0 %v763
        %v803 = vpop.f32.mrb[0].mxu0
        %v804 = vadd.f32 0.0, %v803
        %v805 = vpop.f32.mrb[0].mxu0
        %v806 = vpop.f32.mrb[0].mxu0
        %v807 = vpop.f32.mrb[0].mxu0
        %808 = vdwg.mxu0
        %809 = vrot.lane.b32.xlu0 %v631, 64
        %v810 = vpop.permute.xlu0 %809
        %v812 = vsel %vm735, %v759, 0
        %v815 = vsel %vm765, %v810, 0
        %817 = vmatprep.subr.bf16.mxu0 0
        %818 = vmatpush1.bf16.msra.mxu0 %v815
        %819 = vmatprep.subr.bf16.mxu0 0
        %820 = vmatpush1.bf16.msra.mxu0 0
        %821 = vmatprep.subr.bf16.mxu0 0
        %822 = vmatpush1.bf16.msra.mxu0 0
        %823 = vmatprep.subr.bf16.mxu0 0
        %824 = vmatpush1.bf16.msra.mxu0 0
        %825 = vmatprep.subr.bf16.mxu0 0
        %826 = vmatpush1.bf16.msra.mxu0 0
        %827 = vmatprep.subr.bf16.mxu0 0
        %828 = vmatpush1.bf16.msra.mxu0 0
        %829 = vmatprep.subr.bf16.mxu0 0
        %830 = vmatpush1.bf16.msra.mxu0 0
        %831 = vmatprep.subr.bf16.mxu0 0
        %832 = vmatpush1.bf16.msra.mxu0 0
        %833 = vmatprep.subr.bf16.mxu0 0
        %834 = vmatpush1.bf16.msra.mxu0 0
        %835 = vmatprep.subr.bf16.mxu0 0
        %836 = vmatpush1.bf16.msra.mxu0 0
        %837 = vmatprep.subr.bf16.mxu0 0
        %838 = vmatpush1.bf16.msra.mxu0 0
        %839 = vmatprep.subr.bf16.mxu0 0
        %840 = vmatpush1.bf16.msra.mxu0 0
        %841 = vmatprep.subr.bf16.mxu0 0
        %842 = vmatpush1.bf16.msra.mxu0 0
        %843 = vmatprep.subr.bf16.mxu0 0
        %844 = vmatpush1.bf16.msra.mxu0 0
        %845 = vmatprep.subr.bf16.mxu0 0
        %846 = vmatpush1.bf16.msra.mxu0 0
        %847 = vmatprep.subr.bf16.mxu0 0
        %848 = vmatpush1.bf16.msra.mxu0 0
        %849 = vmatprep.mubr.bf16.mxu0 0
        %850 = vmatmul.mubr.bf16.gmra.mrb[0].mxu0 %v812
        %v851 = vpop.f32.mrb[0].mxu0
        %v852 = vadd.f32 0.0, %v851
        %v853 = vpop.f32.mrb[0].mxu0
        %v854 = vpop.f32.mrb[0].mxu0
        %v855 = vpop.f32.mrb[0].mxu0
        %856 = vdwg.mxu0
        %v857 = vpack.c.bf16 %v852, %v804
        %858 = vrot.lane.b32.xlu0 %v630, 124
        %v859 = vpop.permute.xlu0 %858
        %860 = vrot.lane.b32.xlu0 %v630, 92
        %v861 = vpop.permute.xlu0 %860
        %v863 = vsel %vm638, %v859, 0
        %v866 = vsel %vm638, %v861, 0
        %868 = vmatprep.subr.bf16.mxu0 0
        %869 = vmatpush1.bf16.xpose.msra.mxu0 %v866
        %870 = vmatprep.subr.bf16.mxu0 0
        %871 = vmatpush1.bf16.xpose.msra.mxu0 0
        %872 = vmatprep.subr.bf16.mxu0 0
        %873 = vmatpush1.bf16.xpose.msra.mxu0 0
        %874 = vmatprep.subr.bf16.mxu0 0
        %875 = vmatpush1.bf16.xpose.msra.mxu0 0
        %876 = vmatprep.subr.bf16.mxu0 0
        %877 = vmatpush1.bf16.xpose.msra.mxu0 0
        %878 = vmatprep.subr.bf16.mxu0 0
        %879 = vmatpush1.bf16.xpose.msra.mxu0 0
        %880 = vmatprep.subr.bf16.mxu0 0
        %881 = vmatpush1.bf16.xpose.msra.mxu0 0
        %882 = vmatprep.subr.bf16.mxu0 0
        %883 = vmatpush1.bf16.xpose.msra.mxu0 0
        %884 = vmatprep.subr.bf16.mxu0 0
        %885 = vmatpush1.bf16.xpose.msra.mxu0 0
        %886 = vmatprep.subr.bf16.mxu0 0
        %887 = vmatpush1.bf16.xpose.msra.mxu0 0
        %888 = vmatprep.subr.bf16.mxu0 0
        %889 = vmatpush1.bf16.xpose.msra.mxu0 0
        %890 = vmatprep.subr.bf16.mxu0 0
        %891 = vmatpush1.bf16.xpose.msra.mxu0 0
        %892 = vmatprep.subr.bf16.mxu0 0
        %893 = vmatpush1.bf16.xpose.msra.mxu0 0
        %894 = vmatprep.subr.bf16.mxu0 0
        %895 = vmatpush1.bf16.xpose.msra.mxu0 0
        %896 = vmatprep.subr.bf16.mxu0 0
        %897 = vmatpush1.bf16.xpose.msra.mxu0 0
        %898 = vmatprep.subr.bf16.mxu0 0
        %899 = vmatpush1.bf16.xpose.msra.mxu0 0
        %900 = vmatprep.mubr.bf16.mxu0 0
        %901 = vmatmul.mubr.bf16.gmra.mrb[0].mxu0 %v863
        %v902 = vpop.f32.mrb[0].mxu0
        %v903 = vadd.f32 0.0, %v902
        %v904 = vpop.f32.mrb[0].mxu0
        %v905 = vpop.f32.mrb[0].mxu0
        %v906 = vpop.f32.mrb[0].mxu0
        %907 = vdwg.mxu0
        %908 = vrot.lane.b32.xlu0 %v631, 124
        %v909 = vpop.permute.xlu0 %908
        %910 = vrot.lane.b32.xlu0 %v631, 92
        %v911 = vpop.permute.xlu0 %910
        %v913 = vsel %vm638, %v909, 0
        %v916 = vsel %vm638, %v911, 0
        %918 = vmatprep.subr.bf16.mxu0 0
        %919 = vmatpush1.bf16.xpose.msra.mxu0 %v916
        %920 = vmatprep.subr.bf16.mxu0 0
        %921 = vmatpush1.bf16.xpose.msra.mxu0 0
        %922 = vmatprep.subr.bf16.mxu0 0
        %923 = vmatpush1.bf16.xpose.msra.mxu0 0
        %924 = vmatprep.subr.bf16.mxu0 0
        %925 = vmatpush1.bf16.xpose.msra.mxu0 0
        %926 = vmatprep.subr.bf16.mxu0 0
        %927 = vmatpush1.bf16.xpose.msra.mxu0 0
        %928 = vmatprep.subr.bf16.mxu0 0
        %929 = vmatpush1.bf16.xpose.msra.mxu0 0
        %930 = vmatprep.subr.bf16.mxu0 0
        %931 = vmatpush1.bf16.xpose.msra.mxu0 0
        %932 = vmatprep.subr.bf16.mxu0 0
        %933 = vmatpush1.bf16.xpose.msra.mxu0 0
        %934 = vmatprep.subr.bf16.mxu0 0
        %935 = vmatpush1.bf16.xpose.msra.mxu0 0
        %936 = vmatprep.subr.bf16.mxu0 0
        %937 = vmatpush1.bf16.xpose.msra.mxu0 0
        %938 = vmatprep.subr.bf16.mxu0 0
        %939 = vmatpush1.bf16.xpose.msra.mxu0 0
        %940 = vmatprep.subr.bf16.mxu0 0
        %941 = vmatpush1.bf16.xpose.msra.mxu0 0
        %942 = vmatprep.subr.bf16.mxu0 0
        %943 = vmatpush1.bf16.xpose.msra.mxu0 0
        %944 = vmatprep.subr.bf16.mxu0 0
        %945 = vmatpush1.bf16.xpose.msra.mxu0 0
        %946 = vmatprep.subr.bf16.mxu0 0
        %947 = vmatpush1.bf16.xpose.msra.mxu0 0
        %948 = vmatprep.subr.bf16.mxu0 0
        %949 = vmatpush1.bf16.xpose.msra.mxu0 0
        %950 = vmatprep.mubr.bf16.mxu0 0
        %951 = vmatmul.mubr.bf16.gmra.mrb[0].mxu0 %v913
        %v952 = vpop.f32.mrb[0].mxu0
        %v953 = vadd.f32 0.0, %v952
        %v954 = vpop.f32.mrb[0].mxu0
        %v955 = vpop.f32.mrb[0].mxu0
        %v956 = vpop.f32.mrb[0].mxu0
        %957 = vdwg.mxu0
        %v958 = vmul.f32 %v903, 0.5
        %v959 = vmul.f32 %v953, 0.5
        %v960 = vsel %vm735, %v958, -inf
        %961 = vmax.xlane.f32.xlu0 %v960
        %v962 = vpop.xlane.xlu0 %961
        %v963 = vsel %vm735, %v959, -inf
        %964 = vmax.xlane.f32.xlu0 %v963
        %v965 = vpop.xlane.xlu0 %964
        %v966 = vsub.f32 %v958, %v962
        %v967 = vsub.f32 %v959, %v965
        %v968 = vmul.f32 %v966, 1.442695
        %v969 = vpow.pop %v968
        %v970 = vmul.f32 %v967, 1.442695
        %v971 = vpow.pop %v970
        %v972 = vsel %vm735, %v969, 0.0
        %973 = vadd.xlane.f32.xlu0 %v972
        %v974 = vpop.xlane.xlu0 %973
        %v975 = vsel %vm735, %v971, 0.0
        %976 = vadd.xlane.f32.xlu0 %v975
        %v977 = vpop.xlane.xlu0 %976
        %v978 = vrcp.pop %v974
        %v979 = vrcp.pop %v977
        %v980 = vmul.f32 %v969, %v978
        %v981 = vmul.f32 %v971, %v979
        %v982 = vpack.c.bf16 %v980, %v980
        %v983 = vpack.c.bf16 %v981, %v981
        %984 = vrot.lane.b32.xlu0 %v630, 60
        %v985 = vpop.permute.xlu0 %984
        %v987 = vsel %vm735, %v982, 0
        %v990 = vsel %vm765, %v985, 0
        %992 = vmatprep.subr.bf16.mxu0 0
        %993 = vmatpush1.bf16.msra.mxu0 %v990
        %994 = vmatprep.subr.bf16.mxu0 0
        %995 = vmatpush1.bf16.msra.mxu0 0
        %996 = vmatprep.subr.bf16.mxu0 0
        %997 = vmatpush1.bf16.msra.mxu0 0
        %998 = vmatprep.subr.bf16.mxu0 0
        %999 = vmatpush1.bf16.msra.mxu0 0
        %1000 = vmatprep.subr.bf16.mxu0 0
        %1001 = vmatpush1.bf16.msra.mxu0 0
        %1002 = vmatprep.subr.bf16.mxu0 0
        %1003 = vmatpush1.bf16.msra.mxu0 0
        %1004 = vmatprep.subr.bf16.mxu0 0
        %1005 = vmatpush1.bf16.msra.mxu0 0
        %1006 = vmatprep.subr.bf16.mxu0 0
        %1007 = vmatpush1.bf16.msra.mxu0 0
        %1008 = vmatprep.subr.bf16.mxu0 0
        %1009 = vmatpush1.bf16.msra.mxu0 0
        %1010 = vmatprep.subr.bf16.mxu0 0
        %1011 = vmatpush1.bf16.msra.mxu0 0
        %1012 = vmatprep.subr.bf16.mxu0 0
        %1013 = vmatpush1.bf16.msra.mxu0 0
        %1014 = vmatprep.subr.bf16.mxu0 0
        %1015 = vmatpush1.bf16.msra.mxu0 0
        %1016 = vmatprep.subr.bf16.mxu0 0
        %1017 = vmatpush1.bf16.msra.mxu0 0
        %1018 = vmatprep.subr.bf16.mxu0 0
        %1019 = vmatpush1.bf16.msra.mxu0 0
        %1020 = vmatprep.subr.bf16.mxu0 0
        %1021 = vmatpush1.bf16.msra.mxu0 0
        %1022 = vmatprep.subr.bf16.mxu0 0
        %1023 = vmatpush1.bf16.msra.mxu0 0
        %1024 = vmatprep.mubr.bf16.mxu0 0
        %1025 = vmatmul.mubr.bf16.gmra.mrb[0].mxu0 %v987
        %v1026 = vpop.f32.mrb[0].mxu0
        %v1027 = vadd.f32 0.0, %v1026
        %v1028 = vpop.f32.mrb[0].mxu0
        %v1029 = vpop.f32.mrb[0].mxu0
        %v1030 = vpop.f32.mrb[0].mxu0
        %1031 = vdwg.mxu0
        %1032 = vrot.lane.b32.xlu0 %v631, 60
        %v1033 = vpop.permute.xlu0 %1032
        %v1035 = vsel %vm735, %v983, 0
        %v1038 = vsel %vm765, %v1033, 0
        %1040 = vmatprep.subr.bf16.mxu0 0
        %1041 = vmatpush1.bf16.msra.mxu0 %v1038
        %1042 = vmatprep.subr.bf16.mxu0 0
        %1043 = vmatpush1.bf16.msra.mxu0 0
        %1044 = vmatprep.subr.bf16.mxu0 0
        %1045 = vmatpush1.bf16.msra.mxu0 0
        %1046 = vmatprep.subr.bf16.mxu0 0
        %1047 = vmatpush1.bf16.msra.mxu0 0
        %1048 = vmatprep.subr.bf16.mxu0 0
        %1049 = vmatpush1.bf16.msra.mxu0 0
        %1050 = vmatprep.subr.bf16.mxu0 0
        %1051 = vmatpush1.bf16.msra.mxu0 0
        %1052 = vmatprep.subr.bf16.mxu0 0
        %1053 = vmatpush1.bf16.msra.mxu0 0
        %1054 = vmatprep.subr.bf16.mxu0 0
        %1055 = vmatpush1.bf16.msra.mxu0 0
        %1056 = vmatprep.subr.bf16.mxu0 0
        %1057 = vmatpush1.bf16.msra.mxu0 0
        %1058 = vmatprep.subr.bf16.mxu0 0
        %1059 = vmatpush1.bf16.msra.mxu0 0
        %1060 = vmatprep.subr.bf16.mxu0 0
        %1061 = vmatpush1.bf16.msra.mxu0 0
        %1062 = vmatprep.subr.bf16.mxu0 0
        %1063 = vmatpush1.bf16.msra.mxu0 0
        %1064 = vmatprep.subr.bf16.mxu0 0
        %1065 = vmatpush1.bf16.msra.mxu0 0
        %1066 = vmatprep.subr.bf16.mxu0 0
        %1067 = vmatpush1.bf16.msra.mxu0 0
        %1068 = vmatprep.subr.bf16.mxu0 0
        %1069 = vmatpush1.bf16.msra.mxu0 0
        %1070 = vmatprep.subr.bf16.mxu0 0
        %1071 = vmatpush1.bf16.msra.mxu0 0
        %1072 = vmatprep.mubr.bf16.mxu0 0
        %1073 = vmatmul.mubr.bf16.gmra.mrb[0].mxu0 %v1035
        %v1074 = vpop.f32.mrb[0].mxu0
        %v1075 = vadd.f32 0.0, %v1074
        %v1076 = vpop.f32.mrb[0].mxu0
        %v1077 = vpop.f32.mrb[0].mxu0
        %v1078 = vpop.f32.mrb[0].mxu0
        %1079 = vdwg.mxu0
        %v1080 = vpack.c.bf16 %v1075, %v1027
        %v1085 = vunpack.c.l.b16 %v632
        %v1086 = vunpack.c.l.b16 %v633
        %v1087 = vunpack.c.l.b16 %v634
        %v1088 = vunpack.c.l.b16 %v635
        %v1089 = vpack.c.b16 %v1086, %v1085
        %v1090 = vpack.c.b16 %v1088, %v1087
        %1091 = vrot.lane.b32.xlu0 %v1089, 124
        %v1092 = vpop.permute.xlu0 %1091
        %1093 = vrot.lane.b32.xlu0 %v1090, 124
        %v1094 = vpop.permute.xlu0 %1093
        %v1096 = vsel %vm638, %v1080, 0
        %v1099 = vsel %vm638, %v1092, 0
        %v1102 = vsel %vm638, %v1094, 0
        %1104 = vmatprep.subr.bf16.mxu0 0
        %1105 = vmatpush1.bf16.xpose.msra.mxu0 %v1099
        %1106 = vmatprep.subr.bf16.mxu0 0
        %1107 = vmatpush1.bf16.xpose.msra.mxu0 %v1102
        %1108 = vmatprep.subr.bf16.mxu0 0
        %1109 = vmatpush1.bf16.xpose.msra.mxu0 0
        %1110 = vmatprep.subr.bf16.mxu0 0
        %1111 = vmatpush1.bf16.xpose.msra.mxu0 0
        %1112 = vmatprep.subr.bf16.mxu0 0
        %1113 = vmatpush1.bf16.xpose.msra.mxu0 0
        %1114 = vmatprep.subr.bf16.mxu0 0
        %1115 = vmatpush1.bf16.xpose.msra.mxu0 0
        %1116 = vmatprep.subr.bf16.mxu0 0
        %1117 = vmatpush1.bf16.xpose.msra.mxu0 0
        %1118 = vmatprep.subr.bf16.mxu0 0
        %1119 = vmatpush1.bf16.xpose.msra.mxu0 0
        %1120 = vmatprep.subr.bf16.mxu0 0
        %1121 = vmatpush1.bf16.xpose.msra.mxu0 0
        %1122 = vmatprep.subr.bf16.mxu0 0
        %1123 = vmatpush1.bf16.xpose.msra.mxu0 0
        %1124 = vmatprep.subr.bf16.mxu0 0
        %1125 = vmatpush1.bf16.xpose.msra.mxu0 0
        %1126 = vmatprep.subr.bf16.mxu0 0
        %1127 = vmatpush1.bf16.xpose.msra.mxu0 0
        %1128 = vmatprep.subr.bf16.mxu0 0
        %1129 = vmatpush1.bf16.xpose.msra.mxu0 0
        %1130 = vmatprep.subr.bf16.mxu0 0
        %1131 = vmatpush1.bf16.xpose.msra.mxu0 0
        %1132 = vmatprep.subr.bf16.mxu0 0
        %1133 = vmatpush1.bf16.xpose.msra.mxu0 0
        %1134 = vmatprep.subr.bf16.mxu0 0
        %1135 = vmatpush1.bf16.xpose.msra.mxu0 0
        %1136 = vmatprep.mubr.bf16.mxu0 0
        %1137 = vmatmul.mubr.bf16.gmra.mrb[0].mxu0 %v1096
        %v1138 = vpop.f32.mrb[0].mxu0
        %v1139 = vadd.f32 0.0, %v1138
        %v1140 = vpop.f32.mrb[0].mxu0
        %v1141 = vpop.f32.mrb[0].mxu0
        %v1142 = vadd.f32 0.0, %v1141
        %v1143 = vpop.f32.mrb[0].mxu0
        %1144 = vdwg.mxu0
        %v1146 = vsel %vm638, %v857, 0
        %v1149 = vsel %vm638, %v1089, 0
        %v1152 = vsel %vm638, %v1090, 0
        %1154 = vmatprep.subr.bf16.mxu0 0
        %1155 = vmatpush1.bf16.xpose.msra.mxu0 %v1149
        %1156 = vmatprep.subr.bf16.mxu0 0
        %1157 = vmatpush1.bf16.xpose.msra.mxu0 %v1152
        %1158 = vmatprep.subr.bf16.mxu0 0
        %1159 = vmatpush1.bf16.xpose.msra.mxu0 0
        %1160 = vmatprep.subr.bf16.mxu0 0
        %1161 = vmatpush1.bf16.xpose.msra.mxu0 0
        %1162 = vmatprep.subr.bf16.mxu0 0
        %1163 = vmatpush1.bf16.xpose.msra.mxu0 0
        %1164 = vmatprep.subr.bf16.mxu0 0
        %1165 = vmatpush1.bf16.xpose.msra.mxu0 0
        %1166 = vmatprep.subr.bf16.mxu0 0
        %1167 = vmatpush1.bf16.xpose.msra.mxu0 0
        %1168 = vmatprep.subr.bf16.mxu0 0
        %1169 = vmatpush1.bf16.xpose.msra.mxu0 0
        %1170 = vmatprep.subr.bf16.mxu0 0
        %1171 = vmatpush1.bf16.xpose.msra.mxu0 0
        %1172 = vmatprep.subr.bf16.mxu0 0
        %1173 = vmatpush1.bf16.xpose.msra.mxu0 0
        %1174 = vmatprep.subr.bf16.mxu0 0
        %1175 = vmatpush1.bf16.xpose.msra.mxu0 0
        %1176 = vmatprep.subr.bf16.mxu0 0
        %1177 = vmatpush1.bf16.xpose.msra.mxu0 0
        %1178 = vmatprep.subr.bf16.mxu0 0
        %1179 = vmatpush1.bf16.xpose.msra.mxu0 0
        %1180 = vmatprep.subr.bf16.mxu0 0
        %1181 = vmatpush1.bf16.xpose.msra.mxu0 0
        %1182 = vmatprep.subr.bf16.mxu0 0
        %1183 = vmatpush1.bf16.xpose.msra.mxu0 0
        %1184 = vmatprep.subr.bf16.mxu0 0
        %1185 = vmatpush1.bf16.xpose.msra.mxu0 0
        %1186 = vmatprep.mubr.bf16.mxu0 0
        %1187 = vmatmul.mubr.bf16.gmra.mrb[0].mxu0 %v1146
        %v1188 = vpop.f32.mrb[0].mxu0
        %v1189 = vadd.f32 %v1139, %v1188
        %v1190 = vpop.f32.mrb[0].mxu0
        %v1191 = vpop.f32.mrb[0].mxu0
        %v1192 = vadd.f32 %v1142, %v1191
        %v1193 = vpop.f32.mrb[0].mxu0
        %1194 = vdwg.mxu0
        %1195 = vrot.lane.b32.xlu0 %v630, 120
        %v1196 = vpop.permute.xlu0 %1195
        %1197 = vrot.lane.b32.xlu0 %v630, 88
        %v1198 = vpop.permute.xlu0 %1197
        %v1200 = vsel %vm638, %v1196, 0
        %v1203 = vsel %vm638, %v1198, 0
        %1205 = vmatprep.subr.bf16.mxu0 0
        %1206 = vmatpush1.bf16.xpose.msra.mxu0 %v1203
        %1207 = vmatprep.subr.bf16.mxu0 0
        %1208 = vmatpush1.bf16.xpose.msra.mxu0 0
        %1209 = vmatprep.subr.bf16.mxu0 0
        %1210 = vmatpush1.bf16.xpose.msra.mxu0 0
        %1211 = vmatprep.subr.bf16.mxu0 0
        %1212 = vmatpush1.bf16.xpose.msra.mxu0 0
        %1213 = vmatprep.subr.bf16.mxu0 0
        %1214 = vmatpush1.bf16.xpose.msra.mxu0 0
        %1215 = vmatprep.subr.bf16.mxu0 0
        %1216 = vmatpush1.bf16.xpose.msra.mxu0 0
        %1217 = vmatprep.subr.bf16.mxu0 0
        %1218 = vmatpush1.bf16.xpose.msra.mxu0 0
        %1219 = vmatprep.subr.bf16.mxu0 0
        %1220 = vmatpush1.bf16.xpose.msra.mxu0 0
        %1221 = vmatprep.subr.bf16.mxu0 0
        %1222 = vmatpush1.bf16.xpose.msra.mxu0 0
        %1223 = vmatprep.subr.bf16.mxu0 0
        %1224 = vmatpush1.bf16.xpose.msra.mxu0 0
        %1225 = vmatprep.subr.bf16.mxu0 0
        %1226 = vmatpush1.bf16.xpose.msra.mxu0 0
        %1227 = vmatprep.subr.bf16.mxu0 0
        %1228 = vmatpush1.bf16.xpose.msra.mxu0 0
        %1229 = vmatprep.subr.bf16.mxu0 0
        %1230 = vmatpush1.bf16.xpose.msra.mxu0 0
        %1231 = vmatprep.subr.bf16.mxu0 0
        %1232 = vmatpush1.bf16.xpose.msra.mxu0 0
        %1233 = vmatprep.subr.bf16.mxu0 0
        %1234 = vmatpush1.bf16.xpose.msra.mxu0 0
        %1235 = vmatprep.subr.bf16.mxu0 0
        %1236 = vmatpush1.bf16.xpose.msra.mxu0 0
        %1237 = vmatprep.mubr.bf16.mxu0 0
        %1238 = vmatmul.mubr.bf16.gmra.mrb[0].mxu0 %v1200
        %v1239 = vpop.f32.mrb[0].mxu0
        %v1240 = vadd.f32 0.0, %v1239
        %v1241 = vpop.f32.mrb[0].mxu0
        %v1242 = vpop.f32.mrb[0].mxu0
        %v1243 = vpop.f32.mrb[0].mxu0
        %1244 = vdwg.mxu0
        %1245 = vrot.lane.b32.xlu0 %v631, 120
        %v1246 = vpop.permute.xlu0 %1245
        %1247 = vrot.lane.b32.xlu0 %v631, 88
        %v1248 = vpop.permute.xlu0 %1247
        %v1250 = vsel %vm638, %v1246, 0
        %v1253 = vsel %vm638, %v1248, 0
        %1255 = vmatprep.subr.bf16.mxu0 0
        %1256 = vmatpush1.bf16.xpose.msra.mxu0 %v1253
        %1257 = vmatprep.subr.bf16.mxu0 0
        %1258 = vmatpush1.bf16.xpose.msra.mxu0 0
        %1259 = vmatprep.subr.bf16.mxu0 0
        %1260 = vmatpush1.bf16.xpose.msra.mxu0 0
        %1261 = vmatprep.subr.bf16.mxu0 0
        %1262 = vmatpush1.bf16.xpose.msra.mxu0 0
        %1263 = vmatprep.subr.bf16.mxu0 0
        %1264 = vmatpush1.bf16.xpose.msra.mxu0 0
        %1265 = vmatprep.subr.bf16.mxu0 0
        %1266 = vmatpush1.bf16.xpose.msra.mxu0 0
        %1267 = vmatprep.subr.bf16.mxu0 0
        %1268 = vmatpush1.bf16.xpose.msra.mxu0 0
        %1269 = vmatprep.subr.bf16.mxu0 0
        %1270 = vmatpush1.bf16.xpose.msra.mxu0 0
        %1271 = vmatprep.subr.bf16.mxu0 0
        %1272 = vmatpush1.bf16.xpose.msra.mxu0 0
        %1273 = vmatprep.subr.bf16.mxu0 0
        %1274 = vmatpush1.bf16.xpose.msra.mxu0 0
        %1275 = vmatprep.subr.bf16.mxu0 0
        %1276 = vmatpush1.bf16.xpose.msra.mxu0 0
        %1277 = vmatprep.subr.bf16.mxu0 0
        %1278 = vmatpush1.bf16.xpose.msra.mxu0 0
        %1279 = vmatprep.subr.bf16.mxu0 0
        %1280 = vmatpush1.bf16.xpose.msra.mxu0 0
        %1281 = vmatprep.subr.bf16.mxu0 0
        %1282 = vmatpush1.bf16.xpose.msra.mxu0 0
        %1283 = vmatprep.subr.bf16.mxu0 0
        %1284 = vmatpush1.bf16.xpose.msra.mxu0 0
        %1285 = vmatprep.subr.bf16.mxu0 0
        %1286 = vmatpush1.bf16.xpose.msra.mxu0 0
        %1287 = vmatprep.mubr.bf16.mxu0 0
        %1288 = vmatmul.mubr.bf16.gmra.mrb[0].mxu0 %v1250
        %v1289 = vpop.f32.mrb[0].mxu0
        %v1290 = vadd.f32 0.0, %v1289
        %v1291 = vpop.f32.mrb[0].mxu0
        %v1292 = vpop.f32.mrb[0].mxu0
        %v1293 = vpop.f32.mrb[0].mxu0
        %1294 = vdwg.mxu0
        %v1295 = vmul.f32 %v1240, 0.5
        %v1296 = vmul.f32 %v1290, 0.5
        %v1297 = vsel %vm735, %v1295, -inf
        %1298 = vmax.xlane.f32.xlu0 %v1297
        %v1299 = vpop.xlane.xlu0 %1298
        %v1300 = vsel %vm735, %v1296, -inf
        %1301 = vmax.xlane.f32.xlu0 %v1300
        %v1302 = vpop.xlane.xlu0 %1301
        %v1303 = vsub.f32 %v1295, %v1299
        %v1304 = vsub.f32 %v1296, %v1302
        %v1305 = vmul.f32 %v1303, 1.442695
        %v1306 = vpow.pop %v1305
        %v1307 = vmul.f32 %v1304, 1.442695
        %v1308 = vpow.pop %v1307
        %v1309 = vsel %vm735, %v1306, 0.0
        %1310 = vadd.xlane.f32.xlu0 %v1309
        %v1311 = vpop.xlane.xlu0 %1310
        %v1312 = vsel %vm735, %v1308, 0.0
        %1313 = vadd.xlane.f32.xlu0 %v1312
        %v1314 = vpop.xlane.xlu0 %1313
        %v1315 = vrcp.pop %v1311
        %v1316 = vrcp.pop %v1314
        %v1317 = vmul.f32 %v1306, %v1315
        %v1318 = vmul.f32 %v1308, %v1316
        %v1319 = vpack.c.bf16 %v1317, %v1317
        %v1320 = vpack.c.bf16 %v1318, %v1318
        %1321 = vrot.lane.b32.xlu0 %v630, 56
        %v1322 = vpop.permute.xlu0 %1321
        %v1324 = vsel %vm735, %v1319, 0
        %v1327 = vsel %vm765, %v1322, 0
        %1329 = vmatprep.subr.bf16.mxu0 0
        %1330 = vmatpush1.bf16.msra.mxu0 %v1327
        %1331 = vmatprep.subr.bf16.mxu0 0
        %1332 = vmatpush1.bf16.msra.mxu0 0
        %1333 = vmatprep.subr.bf16.mxu0 0
        %1334 = vmatpush1.bf16.msra.mxu0 0
        %1335 = vmatprep.subr.bf16.mxu0 0
        %1336 = vmatpush1.bf16.msra.mxu0 0
        %1337 = vmatprep.subr.bf16.mxu0 0
        %1338 = vmatpush1.bf16.msra.mxu0 0
        %1339 = vmatprep.subr.bf16.mxu0 0
        %1340 = vmatpush1.bf16.msra.mxu0 0
        %1341 = vmatprep.subr.bf16.mxu0 0
        %1342 = vmatpush1.bf16.msra.mxu0 0
        %1343 = vmatprep.subr.bf16.mxu0 0
        %1344 = vmatpush1.bf16.msra.mxu0 0
        %1345 = vmatprep.subr.bf16.mxu0 0
        %1346 = vmatpush1.bf16.msra.mxu0 0
        %1347 = vmatprep.subr.bf16.mxu0 0
        %1348 = vmatpush1.bf16.msra.mxu0 0
        %1349 = vmatprep.subr.bf16.mxu0 0
        %1350 = vmatpush1.bf16.msra.mxu0 0
        %1351 = vmatprep.subr.bf16.mxu0 0
        %1352 = vmatpush1.bf16.msra.mxu0 0
        %1353 = vmatprep.subr.bf16.mxu0 0
        %1354 = vmatpush1.bf16.msra.mxu0 0
        %1355 = vmatprep.subr.bf16.mxu0 0
        %1356 = vmatpush1.bf16.msra.mxu0 0
        %1357 = vmatprep.subr.bf16.mxu0 0
        %1358 = vmatpush1.bf16.msra.mxu0 0
        %1359 = vmatprep.subr.bf16.mxu0 0
        %1360 = vmatpush1.bf16.msra.mxu0 0
        %1361 = vmatprep.mubr.bf16.mxu0 0
        %1362 = vmatmul.mubr.bf16.gmra.mrb[0].mxu0 %v1324
        %v1363 = vpop.f32.mrb[0].mxu0
        %v1364 = vadd.f32 0.0, %v1363
        %v1365 = vpop.f32.mrb[0].mxu0
        %v1366 = vpop.f32.mrb[0].mxu0
        %v1367 = vpop.f32.mrb[0].mxu0
        %1368 = vdwg.mxu0
        %1369 = vrot.lane.b32.xlu0 %v631, 56
        %v1370 = vpop.permute.xlu0 %1369
        %v1372 = vsel %vm735, %v1320, 0
        %v1375 = vsel %vm765, %v1370, 0
        %1377 = vmatprep.subr.bf16.mxu0 0
        %1378 = vmatpush1.bf16.msra.mxu0 %v1375
        %1379 = vmatprep.subr.bf16.mxu0 0
        %1380 = vmatpush1.bf16.msra.mxu0 0
        %1381 = vmatprep.subr.bf16.mxu0 0
        %1382 = vmatpush1.bf16.msra.mxu0 0
        %1383 = vmatprep.subr.bf16.mxu0 0
        %1384 = vmatpush1.bf16.msra.mxu0 0
        %1385 = vmatprep.subr.bf16.mxu0 0
        %1386 = vmatpush1.bf16.msra.mxu0 0
        %1387 = vmatprep.subr.bf16.mxu0 0
        %1388 = vmatpush1.bf16.msra.mxu0 0
        %1389 = vmatprep.subr.bf16.mxu0 0
        %1390 = vmatpush1.bf16.msra.mxu0 0
        %1391 = vmatprep.subr.bf16.mxu0 0
        %1392 = vmatpush1.bf16.msra.mxu0 0
        %1393 = vmatprep.subr.bf16.mxu0 0
        %1394 = vmatpush1.bf16.msra.mxu0 0
        %1395 = vmatprep.subr.bf16.mxu0 0
        %1396 = vmatpush1.bf16.msra.mxu0 0
        %1397 = vmatprep.subr.bf16.mxu0 0
        %1398 = vmatpush1.bf16.msra.mxu0 0
        %1399 = vmatprep.subr.bf16.mxu0 0
        %1400 = vmatpush1.bf16.msra.mxu0 0
        %1401 = vmatprep.subr.bf16.mxu0 0
        %1402 = vmatpush1.bf16.msra.mxu0 0
        %1403 = vmatprep.subr.bf16.mxu0 0
        %1404 = vmatpush1.bf16.msra.mxu0 0
        %1405 = vmatprep.subr.bf16.mxu0 0
        %1406 = vmatpush1.bf16.msra.mxu0 0
        %1407 = vmatprep.subr.bf16.mxu0 0
        %1408 = vmatpush1.bf16.msra.mxu0 0
        %1409 = vmatprep.mubr.bf16.mxu0 0
        %1410 = vmatmul.mubr.bf16.gmra.mrb[0].mxu0 %v1372
        %v1411 = vpop.f32.mrb[0].mxu0
        %v1412 = vadd.f32 0.0, %v1411
        %v1413 = vpop.f32.mrb[0].mxu0
        %v1414 = vpop.f32.mrb[0].mxu0
        %v1415 = vpop.f32.mrb[0].mxu0
        %1416 = vdwg.mxu0
        %v1417 = vpack.c.bf16 %v1412, %v1364
        %1418 = vrot.lane.b32.xlu0 %v1089, 120
        %v1419 = vpop.permute.xlu0 %1418
        %1420 = vrot.lane.b32.xlu0 %v1090, 120
        %v1421 = vpop.permute.xlu0 %1420
        %v1423 = vsel %vm638, %v1417, 0
        %v1426 = vsel %vm638, %v1419, 0
        %v1429 = vsel %vm638, %v1421, 0
        %1431 = vmatprep.subr.bf16.mxu0 0
        %1432 = vmatpush1.bf16.xpose.msra.mxu0 %v1426
        %1433 = vmatprep.subr.bf16.mxu0 0
        %1434 = vmatpush1.bf16.xpose.msra.mxu0 %v1429
        %1435 = vmatprep.subr.bf16.mxu0 0
        %1436 = vmatpush1.bf16.xpose.msra.mxu0 0
        %1437 = vmatprep.subr.bf16.mxu0 0
        %1438 = vmatpush1.bf16.xpose.msra.mxu0 0
        %1439 = vmatprep.subr.bf16.mxu0 0
        %1440 = vmatpush1.bf16.xpose.msra.mxu0 0
        %1441 = vmatprep.subr.bf16.mxu0 0
        %1442 = vmatpush1.bf16.xpose.msra.mxu0 0
        %1443 = vmatprep.subr.bf16.mxu0 0
        %1444 = vmatpush1.bf16.xpose.msra.mxu0 0
        %1445 = vmatprep.subr.bf16.mxu0 0
        %1446 = vmatpush1.bf16.xpose.msra.mxu0 0
        %1447 = vmatprep.subr.bf16.mxu0 0
        %1448 = vmatpush1.bf16.xpose.msra.mxu0 0
        %1449 = vmatprep.subr.bf16.mxu0 0
        %1450 = vmatpush1.bf16.xpose.msra.mxu0 0
        %1451 = vmatprep.subr.bf16.mxu0 0
        %1452 = vmatpush1.bf16.xpose.msra.mxu0 0
        %1453 = vmatprep.subr.bf16.mxu0 0
        %1454 = vmatpush1.bf16.xpose.msra.mxu0 0
        %1455 = vmatprep.subr.bf16.mxu0 0
        %1456 = vmatpush1.bf16.xpose.msra.mxu0 0
        %1457 = vmatprep.subr.bf16.mxu0 0
        %1458 = vmatpush1.bf16.xpose.msra.mxu0 0
        %1459 = vmatprep.subr.bf16.mxu0 0
        %1460 = vmatpush1.bf16.xpose.msra.mxu0 0
        %1461 = vmatprep.subr.bf16.mxu0 0
        %1462 = vmatpush1.bf16.xpose.msra.mxu0 0
        %1463 = vmatprep.mubr.bf16.mxu0 0
        %1464 = vmatmul.mubr.bf16.gmra.mrb[0].mxu0 %v1423
        %v1465 = vpop.f32.mrb[0].mxu0
        %v1466 = vadd.f32 0.0, %v1465
        %v1467 = vpop.f32.mrb[0].mxu0
        %v1468 = vpop.f32.mrb[0].mxu0
        %v1469 = vadd.f32 0.0, %v1468
        %v1470 = vpop.f32.mrb[0].mxu0
        %1471 = vdwg.mxu0
        %v1472 = vadd.f32 %v1189, %v1466
        %v1473 = vadd.f32 %v1192, %v1469
        %1474 = vrot.lane.b32.xlu0 %v630, 116
        %v1475 = vpop.permute.xlu0 %1474
        %1476 = vrot.lane.b32.xlu0 %v630, 84
        %v1477 = vpop.permute.xlu0 %1476
        %v1479 = vsel %vm638, %v1475, 0
        %v1482 = vsel %vm638, %v1477, 0
        %1484 = vmatprep.subr.bf16.mxu0 0
        %1485 = vmatpush1.bf16.xpose.msra.mxu0 %v1482
        %1486 = vmatprep.subr.bf16.mxu0 0
        %1487 = vmatpush1.bf16.xpose.msra.mxu0 0
        %1488 = vmatprep.subr.bf16.mxu0 0
        %1489 = vmatpush1.bf16.xpose.msra.mxu0 0
        %1490 = vmatprep.subr.bf16.mxu0 0
        %1491 = vmatpush1.bf16.xpose.msra.mxu0 0
        %1492 = vmatprep.subr.bf16.mxu0 0
        %1493 = vmatpush1.bf16.xpose.msra.mxu0 0
        %1494 = vmatprep.subr.bf16.mxu0 0
        %1495 = vmatpush1.bf16.xpose.msra.mxu0 0
        %1496 = vmatprep.subr.bf16.mxu0 0
        %1497 = vmatpush1.bf16.xpose.msra.mxu0 0
        %1498 = vmatprep.subr.bf16.mxu0 0
        %1499 = vmatpush1.bf16.xpose.msra.mxu0 0
        %1500 = vmatprep.subr.bf16.mxu0 0
        %1501 = vmatpush1.bf16.xpose.msra.mxu0 0
        %1502 = vmatprep.subr.bf16.mxu0 0
        %1503 = vmatpush1.bf16.xpose.msra.mxu0 0
        %1504 = vmatprep.subr.bf16.mxu0 0
        %1505 = vmatpush1.bf16.xpose.msra.mxu0 0
        %1506 = vmatprep.subr.bf16.mxu0 0
        %1507 = vmatpush1.bf16.xpose.msra.mxu0 0
        %1508 = vmatprep.subr.bf16.mxu0 0
        %1509 = vmatpush1.bf16.xpose.msra.mxu0 0
        %1510 = vmatprep.subr.bf16.mxu0 0
        %1511 = vmatpush1.bf16.xpose.msra.mxu0 0
        %1512 = vmatprep.subr.bf16.mxu0 0
        %1513 = vmatpush1.bf16.xpose.msra.mxu0 0
        %1514 = vmatprep.subr.bf16.mxu0 0
        %1515 = vmatpush1.bf16.xpose.msra.mxu0 0
        %1516 = vmatprep.mubr.bf16.mxu0 0
        %1517 = vmatmul.mubr.bf16.gmra.mrb[0].mxu0 %v1479
        %v1518 = vpop.f32.mrb[0].mxu0
        %v1519 = vadd.f32 0.0, %v1518
        %v1520 = vpop.f32.mrb[0].mxu0
        %v1521 = vpop.f32.mrb[0].mxu0
        %v1522 = vpop.f32.mrb[0].mxu0
        %1523 = vdwg.mxu0
        %1524 = vrot.lane.b32.xlu0 %v631, 116
        %v1525 = vpop.permute.xlu0 %1524
        %1526 = vrot.lane.b32.xlu0 %v631, 84
        %v1527 = vpop.permute.xlu0 %1526
        %v1529 = vsel %vm638, %v1525, 0
        %v1532 = vsel %vm638, %v1527, 0
        %1534 = vmatprep.subr.bf16.mxu0 0
        %1535 = vmatpush1.bf16.xpose.msra.mxu0 %v1532
        %1536 = vmatprep.subr.bf16.mxu0 0
        %1537 = vmatpush1.bf16.xpose.msra.mxu0 0
        %1538 = vmatprep.subr.bf16.mxu0 0
        %1539 = vmatpush1.bf16.xpose.msra.mxu0 0
        %1540 = vmatprep.subr.bf16.mxu0 0
        %1541 = vmatpush1.bf16.xpose.msra.mxu0 0
        %1542 = vmatprep.subr.bf16.mxu0 0
        %1543 = vmatpush1.bf16.xpose.msra.mxu0 0
        %1544 = vmatprep.subr.bf16.mxu0 0
        %1545 = vmatpush1.bf16.xpose.msra.mxu0 0
        %1546 = vmatprep.subr.bf16.mxu0 0
        %1547 = vmatpush1.bf16.xpose.msra.mxu0 0
        %1548 = vmatprep.subr.bf16.mxu0 0
        %1549 = vmatpush1.bf16.xpose.msra.mxu0 0
        %1550 = vmatprep.subr.bf16.mxu0 0
        %1551 = vmatpush1.bf16.xpose.msra.mxu0 0
        %1552 = vmatprep.subr.bf16.mxu0 0
        %1553 = vmatpush1.bf16.xpose.msra.mxu0 0
        %1554 = vmatprep.subr.bf16.mxu0 0
        %1555 = vmatpush1.bf16.xpose.msra.mxu0 0
        %1556 = vmatprep.subr.bf16.mxu0 0
        %1557 = vmatpush1.bf16.xpose.msra.mxu0 0
        %1558 = vmatprep.subr.bf16.mxu0 0
        %1559 = vmatpush1.bf16.xpose.msra.mxu0 0
        %1560 = vmatprep.subr.bf16.mxu0 0
        %1561 = vmatpush1.bf16.xpose.msra.mxu0 0
        %1562 = vmatprep.subr.bf16.mxu0 0
        %1563 = vmatpush1.bf16.xpose.msra.mxu0 0
        %1564 = vmatprep.subr.bf16.mxu0 0
        %1565 = vmatpush1.bf16.xpose.msra.mxu0 0
        %1566 = vmatprep.mubr.bf16.mxu0 0
        %1567 = vmatmul.mubr.bf16.gmra.mrb[0].mxu0 %v1529
        %v1568 = vpop.f32.mrb[0].mxu0
        %v1569 = vadd.f32 0.0, %v1568
        %v1570 = vpop.f32.mrb[0].mxu0
        %v1571 = vpop.f32.mrb[0].mxu0
        %v1572 = vpop.f32.mrb[0].mxu0
        %1573 = vdwg.mxu0
        %v1574 = vmul.f32 %v1519, 0.5
        %v1575 = vmul.f32 %v1569, 0.5
        %v1576 = vsel %vm735, %v1574, -inf
        %1577 = vmax.xlane.f32.xlu0 %v1576
        %v1578 = vpop.xlane.xlu0 %1577
        %v1579 = vsel %vm735, %v1575, -inf
        %1580 = vmax.xlane.f32.xlu0 %v1579
        %v1581 = vpop.xlane.xlu0 %1580
        %v1582 = vsub.f32 %v1574, %v1578
        %v1583 = vsub.f32 %v1575, %v1581
        %v1584 = vmul.f32 %v1582, 1.442695
        %v1585 = vpow.pop %v1584
        %v1586 = vmul.f32 %v1583, 1.442695
        %v1587 = vpow.pop %v1586
        %v1588 = vsel %vm735, %v1585, 0.0
        %1589 = vadd.xlane.f32.xlu0 %v1588
        %v1590 = vpop.xlane.xlu0 %1589
        %v1591 = vsel %vm735, %v1587, 0.0
        %1592 = vadd.xlane.f32.xlu0 %v1591
        %v1593 = vpop.xlane.xlu0 %1592
        %v1594 = vrcp.pop %v1590
        %v1595 = vrcp.pop %v1593
        %v1596 = vmul.f32 %v1585, %v1594
        %v1597 = vmul.f32 %v1587, %v1595
        %v1598 = vpack.c.bf16 %v1596, %v1596
        %v1599 = vpack.c.bf16 %v1597, %v1597
        %1600 = vrot.lane.b32.xlu0 %v630, 52
        %v1601 = vpop.permute.xlu0 %1600
        %v1603 = vsel %vm735, %v1598, 0
        %v1606 = vsel %vm765, %v1601, 0
        %1608 = vmatprep.subr.bf16.mxu0 0
        %1609 = vmatpush1.bf16.msra.mxu0 %v1606
        %1610 = vmatprep.subr.bf16.mxu0 0
        %1611 = vmatpush1.bf16.msra.mxu0 0
        %1612 = vmatprep.subr.bf16.mxu0 0
        %1613 = vmatpush1.bf16.msra.mxu0 0
        %1614 = vmatprep.subr.bf16.mxu0 0
        %1615 = vmatpush1.bf16.msra.mxu0 0
        %1616 = vmatprep.subr.bf16.mxu0 0
        %1617 = vmatpush1.bf16.msra.mxu0 0
        %1618 = vmatprep.subr.bf16.mxu0 0
        %1619 = vmatpush1.bf16.msra.mxu0 0
        %1620 = vmatprep.subr.bf16.mxu0 0
        %1621 = vmatpush1.bf16.msra.mxu0 0
        %1622 = vmatprep.subr.bf16.mxu0 0
        %1623 = vmatpush1.bf16.msra.mxu0 0
        %1624 = vmatprep.subr.bf16.mxu0 0
        %1625 = vmatpush1.bf16.msra.mxu0 0
        %1626 = vmatprep.subr.bf16.mxu0 0
        %1627 = vmatpush1.bf16.msra.mxu0 0
        %1628 = vmatprep.subr.bf16.mxu0 0
        %1629 = vmatpush1.bf16.msra.mxu0 0
        %1630 = vmatprep.subr.bf16.mxu0 0
        %1631 = vmatpush1.bf16.msra.mxu0 0
        %1632 = vmatprep.subr.bf16.mxu0 0
        %1633 = vmatpush1.bf16.msra.mxu0 0
        %1634 = vmatprep.subr.bf16.mxu0 0
        %1635 = vmatpush1.bf16.msra.mxu0 0
        %1636 = vmatprep.subr.bf16.mxu0 0
        %1637 = vmatpush1.bf16.msra.mxu0 0
        %1638 = vmatprep.subr.bf16.mxu0 0
        %1639 = vmatpush1.bf16.msra.mxu0 0
        %1640 = vmatprep.mubr.bf16.mxu0 0
        %1641 = vmatmul.mubr.bf16.gmra.mrb[0].mxu0 %v1603
        %v1642 = vpop.f32.mrb[0].mxu0
        %v1643 = vadd.f32 0.0, %v1642
        %v1644 = vpop.f32.mrb[0].mxu0
        %v1645 = vpop.f32.mrb[0].mxu0
        %v1646 = vpop.f32.mrb[0].mxu0
        %1647 = vdwg.mxu0
        %1648 = vrot.lane.b32.xlu0 %v631, 52
        %v1649 = vpop.permute.xlu0 %1648
        %v1651 = vsel %vm735, %v1599, 0
        %v1654 = vsel %vm765, %v1649, 0
        %1656 = vmatprep.subr.bf16.mxu0 0
        %1657 = vmatpush1.bf16.msra.mxu0 %v1654
        %1658 = vmatprep.subr.bf16.mxu0 0
        %1659 = vmatpush1.bf16.msra.mxu0 0
        %1660 = vmatprep.subr.bf16.mxu0 0
        %1661 = vmatpush1.bf16.msra.mxu0 0
        %1662 = vmatprep.subr.bf16.mxu0 0
        %1663 = vmatpush1.bf16.msra.mxu0 0
        %1664 = vmatprep.subr.bf16.mxu0 0
        %1665 = vmatpush1.bf16.msra.mxu0 0
        %1666 = vmatprep.subr.bf16.mxu0 0
        %1667 = vmatpush1.bf16.msra.mxu0 0
        %1668 = vmatprep.subr.bf16.mxu0 0
        %1669 = vmatpush1.bf16.msra.mxu0 0
        %1670 = vmatprep.subr.bf16.mxu0 0
        %1671 = vmatpush1.bf16.msra.mxu0 0
        %1672 = vmatprep.subr.bf16.mxu0 0
        %1673 = vmatpush1.bf16.msra.mxu0 0
        %1674 = vmatprep.subr.bf16.mxu0 0
        %1675 = vmatpush1.bf16.msra.mxu0 0
        %1676 = vmatprep.subr.bf16.mxu0 0
        %1677 = vmatpush1.bf16.msra.mxu0 0
        %1678 = vmatprep.subr.bf16.mxu0 0
        %1679 = vmatpush1.bf16.msra.mxu0 0
        %1680 = vmatprep.subr.bf16.mxu0 0
        %1681 = vmatpush1.bf16.msra.mxu0 0
        %1682 = vmatprep.subr.bf16.mxu0 0
        %1683 = vmatpush1.bf16.msra.mxu0 0
        %1684 = vmatprep.subr.bf16.mxu0 0
        %1685 = vmatpush1.bf16.msra.mxu0 0
        %1686 = vmatprep.subr.bf16.mxu0 0
        %1687 = vmatpush1.bf16.msra.mxu0 0
        %1688 = vmatprep.mubr.bf16.mxu0 0
        %1689 = vmatmul.mubr.bf16.gmra.mrb[0].mxu0 %v1651
        %v1690 = vpop.f32.mrb[0].mxu0
        %v1691 = vadd.f32 0.0, %v1690
        %v1692 = vpop.f32.mrb[0].mxu0
        %v1693 = vpop.f32.mrb[0].mxu0
        %v1694 = vpop.f32.mrb[0].mxu0
        %1695 = vdwg.mxu0
        %v1696 = vpack.c.bf16 %v1691, %v1643
        %1697 = vrot.lane.b32.xlu0 %v1089, 116
        %v1698 = vpop.permute.xlu0 %1697
        %1699 = vrot.lane.b32.xlu0 %v1090, 116
        %v1700 = vpop.permute.xlu0 %1699
        %v1702 = vsel %vm638, %v1696, 0
        %v1705 = vsel %vm638, %v1698, 0
        %v1708 = vsel %vm638, %v1700, 0
        %1710 = vmatprep.subr.bf16.mxu0 0
        %1711 = vmatpush1.bf16.xpose.msra.mxu0 %v1705
        %1712 = vmatprep.subr.bf16.mxu0 0
        %1713 = vmatpush1.bf16.xpose.msra.mxu0 %v1708
        %1714 = vmatprep.subr.bf16.mxu0 0
        %1715 = vmatpush1.bf16.xpose.msra.mxu0 0
        %1716 = vmatprep.subr.bf16.mxu0 0
        %1717 = vmatpush1.bf16.xpose.msra.mxu0 0
        %1718 = vmatprep.subr.bf16.mxu0 0
        %1719 = vmatpush1.bf16.xpose.msra.mxu0 0
        %1720 = vmatprep.subr.bf16.mxu0 0
        %1721 = vmatpush1.bf16.xpose.msra.mxu0 0
        %1722 = vmatprep.subr.bf16.mxu0 0
        %1723 = vmatpush1.bf16.xpose.msra.mxu0 0
        %1724 = vmatprep.subr.bf16.mxu0 0
        %1725 = vmatpush1.bf16.xpose.msra.mxu0 0
        %1726 = vmatprep.subr.bf16.mxu0 0
        %1727 = vmatpush1.bf16.xpose.msra.mxu0 0
        %1728 = vmatprep.subr.bf16.mxu0 0
        %1729 = vmatpush1.bf16.xpose.msra.mxu0 0
        %1730 = vmatprep.subr.bf16.mxu0 0
        %1731 = vmatpush1.bf16.xpose.msra.mxu0 0
        %1732 = vmatprep.subr.bf16.mxu0 0
        %1733 = vmatpush1.bf16.xpose.msra.mxu0 0
        %1734 = vmatprep.subr.bf16.mxu0 0
        %1735 = vmatpush1.bf16.xpose.msra.mxu0 0
        %1736 = vmatprep.subr.bf16.mxu0 0
        %1737 = vmatpush1.bf16.xpose.msra.mxu0 0
        %1738 = vmatprep.subr.bf16.mxu0 0
        %1739 = vmatpush1.bf16.xpose.msra.mxu0 0
        %1740 = vmatprep.subr.bf16.mxu0 0
        %1741 = vmatpush1.bf16.xpose.msra.mxu0 0
        %1742 = vmatprep.mubr.bf16.mxu0 0
        %1743 = vmatmul.mubr.bf16.gmra.mrb[0].mxu0 %v1702
        %v1744 = vpop.f32.mrb[0].mxu0
        %v1745 = vadd.f32 0.0, %v1744
        %v1746 = vpop.f32.mrb[0].mxu0
        %v1747 = vpop.f32.mrb[0].mxu0
        %v1748 = vadd.f32 0.0, %v1747
        %v1749 = vpop.f32.mrb[0].mxu0
        %1750 = vdwg.mxu0
        %v1751 = vadd.f32 %v1472, %v1745
        %v1752 = vadd.f32 %v1473, %v1748
        %1753 = vrot.lane.b32.xlu0 %v630, 112
        %v1754 = vpop.permute.xlu0 %1753
        %1755 = vrot.lane.b32.xlu0 %v630, 80
        %v1756 = vpop.permute.xlu0 %1755
        %v1758 = vsel %vm638, %v1754, 0
        %v1761 = vsel %vm638, %v1756, 0
        %1763 = vmatprep.subr.bf16.mxu0 0
        %1764 = vmatpush1.bf16.xpose.msra.mxu0 %v1761
        %1765 = vmatprep.subr.bf16.mxu0 0
        %1766 = vmatpush1.bf16.xpose.msra.mxu0 0
        %1767 = vmatprep.subr.bf16.mxu0 0
        %1768 = vmatpush1.bf16.xpose.msra.mxu0 0
        %1769 = vmatprep.subr.bf16.mxu0 0
        %1770 = vmatpush1.bf16.xpose.msra.mxu0 0
        %1771 = vmatprep.subr.bf16.mxu0 0
        %1772 = vmatpush1.bf16.xpose.msra.mxu0 0
        %1773 = vmatprep.subr.bf16.mxu0 0
        %1774 = vmatpush1.bf16.xpose.msra.mxu0 0
        %1775 = vmatprep.subr.bf16.mxu0 0
        %1776 = vmatpush1.bf16.xpose.msra.mxu0 0
        %1777 = vmatprep.subr.bf16.mxu0 0
        %1778 = vmatpush1.bf16.xpose.msra.mxu0 0
        %1779 = vmatprep.subr.bf16.mxu0 0
        %1780 = vmatpush1.bf16.xpose.msra.mxu0 0
        %1781 = vmatprep.subr.bf16.mxu0 0
        %1782 = vmatpush1.bf16.xpose.msra.mxu0 0
        %1783 = vmatprep.subr.bf16.mxu0 0
        %1784 = vmatpush1.bf16.xpose.msra.mxu0 0
        %1785 = vmatprep.subr.bf16.mxu0 0
        %1786 = vmatpush1.bf16.xpose.msra.mxu0 0
        %1787 = vmatprep.subr.bf16.mxu0 0
        %1788 = vmatpush1.bf16.xpose.msra.mxu0 0
        %1789 = vmatprep.subr.bf16.mxu0 0
        %1790 = vmatpush1.bf16.xpose.msra.mxu0 0
        %1791 = vmatprep.subr.bf16.mxu0 0
        %1792 = vmatpush1.bf16.xpose.msra.mxu0 0
        %1793 = vmatprep.subr.bf16.mxu0 0
        %1794 = vmatpush1.bf16.xpose.msra.mxu0 0
        %1795 = vmatprep.mubr.bf16.mxu0 0
        %1796 = vmatmul.mubr.bf16.gmra.mrb[0].mxu0 %v1758
        %v1797 = vpop.f32.mrb[0].mxu0
        %v1798 = vadd.f32 0.0, %v1797
        %v1799 = vpop.f32.mrb[0].mxu0
        %v1800 = vpop.f32.mrb[0].mxu0
        %v1801 = vpop.f32.mrb[0].mxu0
        %1802 = vdwg.mxu0
        %1803 = vrot.lane.b32.xlu0 %v631, 112
        %v1804 = vpop.permute.xlu0 %1803
        %1805 = vrot.lane.b32.xlu0 %v631, 80
        %v1806 = vpop.permute.xlu0 %1805
        %v1808 = vsel %vm638, %v1804, 0
        %v1811 = vsel %vm638, %v1806, 0
        %1813 = vmatprep.subr.bf16.mxu0 0
        %1814 = vmatpush1.bf16.xpose.msra.mxu0 %v1811
        %1815 = vmatprep.subr.bf16.mxu0 0
        %1816 = vmatpush1.bf16.xpose.msra.mxu0 0
        %1817 = vmatprep.subr.bf16.mxu0 0
        %1818 = vmatpush1.bf16.xpose.msra.mxu0 0
        %1819 = vmatprep.subr.bf16.mxu0 0
        %1820 = vmatpush1.bf16.xpose.msra.mxu0 0
        %1821 = vmatprep.subr.bf16.mxu0 0
        %1822 = vmatpush1.bf16.xpose.msra.mxu0 0
        %1823 = vmatprep.subr.bf16.mxu0 0
        %1824 = vmatpush1.bf16.xpose.msra.mxu0 0
        %1825 = vmatprep.subr.bf16.mxu0 0
        %1826 = vmatpush1.bf16.xpose.msra.mxu0 0
        %1827 = vmatprep.subr.bf16.mxu0 0
        %1828 = vmatpush1.bf16.xpose.msra.mxu0 0
        %1829 = vmatprep.subr.bf16.mxu0 0
        %1830 = vmatpush1.bf16.xpose.msra.mxu0 0
        %1831 = vmatprep.subr.bf16.mxu0 0
        %1832 = vmatpush1.bf16.xpose.msra.mxu0 0
        %1833 = vmatprep.subr.bf16.mxu0 0
        %1834 = vmatpush1.bf16.xpose.msra.mxu0 0
        %1835 = vmatprep.subr.bf16.mxu0 0
        %1836 = vmatpush1.bf16.xpose.msra.mxu0 0
        %1837 = vmatprep.subr.bf16.mxu0 0
        %1838 = vmatpush1.bf16.xpose.msra.mxu0 0
        %1839 = vmatprep.subr.bf16.mxu0 0
        %1840 = vmatpush1.bf16.xpose.msra.mxu0 0
        %1841 = vmatprep.subr.bf16.mxu0 0
        %1842 = vmatpush1.bf16.xpose.msra.mxu0 0
        %1843 = vmatprep.subr.bf16.mxu0 0
        %1844 = vmatpush1.bf16.xpose.msra.mxu0 0
        %1845 = vmatprep.mubr.bf16.mxu0 0
        %1846 = vmatmul.mubr.bf16.gmra.mrb[0].mxu0 %v1808
        %v1847 = vpop.f32.mrb[0].mxu0
        %v1848 = vadd.f32 0.0, %v1847
        %v1849 = vpop.f32.mrb[0].mxu0
        %v1850 = vpop.f32.mrb[0].mxu0
        %v1851 = vpop.f32.mrb[0].mxu0
        %1852 = vdwg.mxu0
        %v1853 = vmul.f32 %v1798, 0.5
        %v1854 = vmul.f32 %v1848, 0.5
        %v1855 = vsel %vm735, %v1853, -inf
        %1856 = vmax.xlane.f32.xlu0 %v1855
        %v1857 = vpop.xlane.xlu0 %1856
        %v1858 = vsel %vm735, %v1854, -inf
        %1859 = vmax.xlane.f32.xlu0 %v1858
        %v1860 = vpop.xlane.xlu0 %1859
        %v1861 = vsub.f32 %v1853, %v1857
        %v1862 = vsub.f32 %v1854, %v1860
        %v1863 = vmul.f32 %v1861, 1.442695
        %v1864 = vpow.pop %v1863
        %v1865 = vmul.f32 %v1862, 1.442695
        %v1866 = vpow.pop %v1865
        %v1867 = vsel %vm735, %v1864, 0.0
        %1868 = vadd.xlane.f32.xlu0 %v1867
        %v1869 = vpop.xlane.xlu0 %1868
        %v1870 = vsel %vm735, %v1866, 0.0
        %1871 = vadd.xlane.f32.xlu0 %v1870
        %v1872 = vpop.xlane.xlu0 %1871
        %v1873 = vrcp.pop %v1869
        %v1874 = vrcp.pop %v1872
        %v1875 = vmul.f32 %v1864, %v1873
        %v1876 = vmul.f32 %v1866, %v1874
        %v1877 = vpack.c.bf16 %v1875, %v1875
        %v1878 = vpack.c.bf16 %v1876, %v1876
        %1879 = vrot.lane.b32.xlu0 %v630, 48
        %v1880 = vpop.permute.xlu0 %1879
        %v1882 = vsel %vm735, %v1877, 0
        %v1885 = vsel %vm765, %v1880, 0
        %1887 = vmatprep.subr.bf16.mxu0 0
        %1888 = vmatpush1.bf16.msra.mxu0 %v1885
        %1889 = vmatprep.subr.bf16.mxu0 0
        %1890 = vmatpush1.bf16.msra.mxu0 0
        %1891 = vmatprep.subr.bf16.mxu0 0
        %1892 = vmatpush1.bf16.msra.mxu0 0
        %1893 = vmatprep.subr.bf16.mxu0 0
        %1894 = vmatpush1.bf16.msra.mxu0 0
        %1895 = vmatprep.subr.bf16.mxu0 0
        %1896 = vmatpush1.bf16.msra.mxu0 0
        %1897 = vmatprep.subr.bf16.mxu0 0
        %1898 = vmatpush1.bf16.msra.mxu0 0
        %1899 = vmatprep.subr.bf16.mxu0 0
        %1900 = vmatpush1.bf16.msra.mxu0 0
        %1901 = vmatprep.subr.bf16.mxu0 0
        %1902 = vmatpush1.bf16.msra.mxu0 0
        %1903 = vmatprep.subr.bf16.mxu0 0
        %1904 = vmatpush1.bf16.msra.mxu0 0
        %1905 = vmatprep.subr.bf16.mxu0 0
        %1906 = vmatpush1.bf16.msra.mxu0 0
        %1907 = vmatprep.subr.bf16.mxu0 0
        %1908 = vmatpush1.bf16.msra.mxu0 0
        %1909 = vmatprep.subr.bf16.mxu0 0
        %1910 = vmatpush1.bf16.msra.mxu0 0
        %1911 = vmatprep.subr.bf16.mxu0 0
        %1912 = vmatpush1.bf16.msra.mxu0 0
        %1913 = vmatprep.subr.bf16.mxu0 0
        %1914 = vmatpush1.bf16.msra.mxu0 0
        %1915 = vmatprep.subr.bf16.mxu0 0
        %1916 = vmatpush1.bf16.msra.mxu0 0
        %1917 = vmatprep.subr.bf16.mxu0 0
        %1918 = vmatpush1.bf16.msra.mxu0 0
        %1919 = vmatprep.mubr.bf16.mxu0 0
        %1920 = vmatmul.mubr.bf16.gmra.mrb[0].mxu0 %v1882
        %v1921 = vpop.f32.mrb[0].mxu0
        %v1922 = vadd.f32 0.0, %v1921
        %v1923 = vpop.f32.mrb[0].mxu0
        %v1924 = vpop.f32.mrb[0].mxu0
        %v1925 = vpop.f32.mrb[0].mxu0
        %1926 = vdwg.mxu0
        %1927 = vrot.lane.b32.xlu0 %v631, 48
        %v1928 = vpop.permute.xlu0 %1927
        %v1930 = vsel %vm735, %v1878, 0
        %v1933 = vsel %vm765, %v1928, 0
        %1935 = vmatprep.subr.bf16.mxu0 0
        %1936 = vmatpush1.bf16.msra.mxu0 %v1933
        %1937 = vmatprep.subr.bf16.mxu0 0
        %1938 = vmatpush1.bf16.msra.mxu0 0
        %1939 = vmatprep.subr.bf16.mxu0 0
        %1940 = vmatpush1.bf16.msra.mxu0 0
        %1941 = vmatprep.subr.bf16.mxu0 0
        %1942 = vmatpush1.bf16.msra.mxu0 0
        %1943 = vmatprep.subr.bf16.mxu0 0
        %1944 = vmatpush1.bf16.msra.mxu0 0
        %1945 = vmatprep.subr.bf16.mxu0 0
        %1946 = vmatpush1.bf16.msra.mxu0 0
        %1947 = vmatprep.subr.bf16.mxu0 0
        %1948 = vmatpush1.bf16.msra.mxu0 0
        %1949 = vmatprep.subr.bf16.mxu0 0
        %1950 = vmatpush1.bf16.msra.mxu0 0
        %1951 = vmatprep.subr.bf16.mxu0 0
        %1952 = vmatpush1.bf16.msra.mxu0 0
        %1953 = vmatprep.subr.bf16.mxu0 0
        %1954 = vmatpush1.bf16.msra.mxu0 0
        %1955 = vmatprep.subr.bf16.mxu0 0
        %1956 = vmatpush1.bf16.msra.mxu0 0
        %1957 = vmatprep.subr.bf16.mxu0 0
        %1958 = vmatpush1.bf16.msra.mxu0 0
        %1959 = vmatprep.subr.bf16.mxu0 0
        %1960 = vmatpush1.bf16.msra.mxu0 0
        %1961 = vmatprep.subr.bf16.mxu0 0
        %1962 = vmatpush1.bf16.msra.mxu0 0
        %1963 = vmatprep.subr.bf16.mxu0 0
        %1964 = vmatpush1.bf16.msra.mxu0 0
        %1965 = vmatprep.subr.bf16.mxu0 0
        %1966 = vmatpush1.bf16.msra.mxu0 0
        %1967 = vmatprep.mubr.bf16.mxu0 0
        %1968 = vmatmul.mubr.bf16.gmra.mrb[0].mxu0 %v1930
        %v1969 = vpop.f32.mrb[0].mxu0
        %v1970 = vadd.f32 0.0, %v1969
        %v1971 = vpop.f32.mrb[0].mxu0
        %v1972 = vpop.f32.mrb[0].mxu0
        %v1973 = vpop.f32.mrb[0].mxu0
        %1974 = vdwg.mxu0
        %v1975 = vpack.c.bf16 %v1970, %v1922
        %1976 = vrot.lane.b32.xlu0 %v1089, 112
        %v1977 = vpop.permute.xlu0 %1976
        %1978 = vrot.lane.b32.xlu0 %v1090, 112
        %v1979 = vpop.permute.xlu0 %1978
        %v1981 = vsel %vm638, %v1975, 0
        %v1984 = vsel %vm638, %v1977, 0
        %v1987 = vsel %vm638, %v1979, 0
        %1989 = vmatprep.subr.bf16.mxu0 0
        %1990 = vmatpush1.bf16.xpose.msra.mxu0 %v1984
        %1991 = vmatprep.subr.bf16.mxu0 0
        %1992 = vmatpush1.bf16.xpose.msra.mxu0 %v1987
        %1993 = vmatprep.subr.bf16.mxu0 0
        %1994 = vmatpush1.bf16.xpose.msra.mxu0 0
        %1995 = vmatprep.subr.bf16.mxu0 0
        %1996 = vmatpush1.bf16.xpose.msra.mxu0 0
        %1997 = vmatprep.subr.bf16.mxu0 0
        %1998 = vmatpush1.bf16.xpose.msra.mxu0 0
        %1999 = vmatprep.subr.bf16.mxu0 0
        %2000 = vmatpush1.bf16.xpose.msra.mxu0 0
        %2001 = vmatprep.subr.bf16.mxu0 0
        %2002 = vmatpush1.bf16.xpose.msra.mxu0 0
        %2003 = vmatprep.subr.bf16.mxu0 0
        %2004 = vmatpush1.bf16.xpose.msra.mxu0 0
        %2005 = vmatprep.subr.bf16.mxu0 0
        %2006 = vmatpush1.bf16.xpose.msra.mxu0 0
        %2007 = vmatprep.subr.bf16.mxu0 0
        %2008 = vmatpush1.bf16.xpose.msra.mxu0 0
        %2009 = vmatprep.subr.bf16.mxu0 0
        %2010 = vmatpush1.bf16.xpose.msra.mxu0 0
        %2011 = vmatprep.subr.bf16.mxu0 0
        %2012 = vmatpush1.bf16.xpose.msra.mxu0 0
        %2013 = vmatprep.subr.bf16.mxu0 0
        %2014 = vmatpush1.bf16.xpose.msra.mxu0 0
        %2015 = vmatprep.subr.bf16.mxu0 0
        %2016 = vmatpush1.bf16.xpose.msra.mxu0 0
        %2017 = vmatprep.subr.bf16.mxu0 0
        %2018 = vmatpush1.bf16.xpose.msra.mxu0 0
        %2019 = vmatprep.subr.bf16.mxu0 0
        %2020 = vmatpush1.bf16.xpose.msra.mxu0 0
        %2021 = vmatprep.mubr.bf16.mxu0 0
        %2022 = vmatmul.mubr.bf16.gmra.mrb[0].mxu0 %v1981
        %v2023 = vpop.f32.mrb[0].mxu0
        %v2024 = vadd.f32 0.0, %v2023
        %v2025 = vpop.f32.mrb[0].mxu0
        %v2026 = vpop.f32.mrb[0].mxu0
        %v2027 = vadd.f32 0.0, %v2026
        %v2028 = vpop.f32.mrb[0].mxu0
        %2029 = vdwg.mxu0
        %v2030 = vadd.f32 %v1751, %v2024
        %v2031 = vadd.f32 %v1752, %v2027
        %2032 = vrot.lane.b32.xlu0 %v630, 108
        %v2033 = vpop.permute.xlu0 %2032
        %2034 = vrot.lane.b32.xlu0 %v630, 76
        %v2035 = vpop.permute.xlu0 %2034
        %v2037 = vsel %vm638, %v2033, 0
        %v2040 = vsel %vm638, %v2035, 0
        %2042 = vmatprep.subr.bf16.mxu0 0
        %2043 = vmatpush1.bf16.xpose.msra.mxu0 %v2040
        %2044 = vmatprep.subr.bf16.mxu0 0
        %2045 = vmatpush1.bf16.xpose.msra.mxu0 0
        %2046 = vmatprep.subr.bf16.mxu0 0
        %2047 = vmatpush1.bf16.xpose.msra.mxu0 0
        %2048 = vmatprep.subr.bf16.mxu0 0
        %2049 = vmatpush1.bf16.xpose.msra.mxu0 0
        %2050 = vmatprep.subr.bf16.mxu0 0
        %2051 = vmatpush1.bf16.xpose.msra.mxu0 0
        %2052 = vmatprep.subr.bf16.mxu0 0
        %2053 = vmatpush1.bf16.xpose.msra.mxu0 0
        %2054 = vmatprep.subr.bf16.mxu0 0
        %2055 = vmatpush1.bf16.xpose.msra.mxu0 0
        %2056 = vmatprep.subr.bf16.mxu0 0
        %2057 = vmatpush1.bf16.xpose.msra.mxu0 0
        %2058 = vmatprep.subr.bf16.mxu0 0
        %2059 = vmatpush1.bf16.xpose.msra.mxu0 0
        %2060 = vmatprep.subr.bf16.mxu0 0
        %2061 = vmatpush1.bf16.xpose.msra.mxu0 0
        %2062 = vmatprep.subr.bf16.mxu0 0
        %2063 = vmatpush1.bf16.xpose.msra.mxu0 0
        %2064 = vmatprep.subr.bf16.mxu0 0
        %2065 = vmatpush1.bf16.xpose.msra.mxu0 0
        %2066 = vmatprep.subr.bf16.mxu0 0
        %2067 = vmatpush1.bf16.xpose.msra.mxu0 0
        %2068 = vmatprep.subr.bf16.mxu0 0
        %2069 = vmatpush1.bf16.xpose.msra.mxu0 0
        %2070 = vmatprep.subr.bf16.mxu0 0
        %2071 = vmatpush1.bf16.xpose.msra.mxu0 0
        %2072 = vmatprep.subr.bf16.mxu0 0
        %2073 = vmatpush1.bf16.xpose.msra.mxu0 0
        %2074 = vmatprep.mubr.bf16.mxu0 0
        %2075 = vmatmul.mubr.bf16.gmra.mrb[0].mxu0 %v2037
        %v2076 = vpop.f32.mrb[0].mxu0
        %v2077 = vadd.f32 0.0, %v2076
        %v2078 = vpop.f32.mrb[0].mxu0
        %v2079 = vpop.f32.mrb[0].mxu0
        %v2080 = vpop.f32.mrb[0].mxu0
        %2081 = vdwg.mxu0
        %2082 = vrot.lane.b32.xlu0 %v631, 108
        %v2083 = vpop.permute.xlu0 %2082
        %2084 = vrot.lane.b32.xlu0 %v631, 76
        %v2085 = vpop.permute.xlu0 %2084
        %v2087 = vsel %vm638, %v2083, 0
        %v2090 = vsel %vm638, %v2085, 0
        %2092 = vmatprep.subr.bf16.mxu0 0
        %2093 = vmatpush1.bf16.xpose.msra.mxu0 %v2090
        %2094 = vmatprep.subr.bf16.mxu0 0
        %2095 = vmatpush1.bf16.xpose.msra.mxu0 0
        %2096 = vmatprep.subr.bf16.mxu0 0
        %2097 = vmatpush1.bf16.xpose.msra.mxu0 0
        %2098 = vmatprep.subr.bf16.mxu0 0
        %2099 = vmatpush1.bf16.xpose.msra.mxu0 0
        %2100 = vmatprep.subr.bf16.mxu0 0
        %2101 = vmatpush1.bf16.xpose.msra.mxu0 0
        %2102 = vmatprep.subr.bf16.mxu0 0
        %2103 = vmatpush1.bf16.xpose.msra.mxu0 0
        %2104 = vmatprep.subr.bf16.mxu0 0
        %2105 = vmatpush1.bf16.xpose.msra.mxu0 0
        %2106 = vmatprep.subr.bf16.mxu0 0
        %2107 = vmatpush1.bf16.xpose.msra.mxu0 0
        %2108 = vmatprep.subr.bf16.mxu0 0
        %2109 = vmatpush1.bf16.xpose.msra.mxu0 0
        %2110 = vmatprep.subr.bf16.mxu0 0
        %2111 = vmatpush1.bf16.xpose.msra.mxu0 0
        %2112 = vmatprep.subr.bf16.mxu0 0
        %2113 = vmatpush1.bf16.xpose.msra.mxu0 0
        %2114 = vmatprep.subr.bf16.mxu0 0
        %2115 = vmatpush1.bf16.xpose.msra.mxu0 0
        %2116 = vmatprep.subr.bf16.mxu0 0
        %2117 = vmatpush1.bf16.xpose.msra.mxu0 0
        %2118 = vmatprep.subr.bf16.mxu0 0
        %2119 = vmatpush1.bf16.xpose.msra.mxu0 0
        %2120 = vmatprep.subr.bf16.mxu0 0
        %2121 = vmatpush1.bf16.xpose.msra.mxu0 0
        %2122 = vmatprep.subr.bf16.mxu0 0
        %2123 = vmatpush1.bf16.xpose.msra.mxu0 0
        %2124 = vmatprep.mubr.bf16.mxu0 0
        %2125 = vmatmul.mubr.bf16.gmra.mrb[0].mxu0 %v2087
        %v2126 = vpop.f32.mrb[0].mxu0
        %v2127 = vadd.f32 0.0, %v2126
        %v2128 = vpop.f32.mrb[0].mxu0
        %v2129 = vpop.f32.mrb[0].mxu0
        %v2130 = vpop.f32.mrb[0].mxu0
        %2131 = vdwg.mxu0
        %v2132 = vmul.f32 %v2077, 0.5
        %v2133 = vmul.f32 %v2127, 0.5
        %v2134 = vsel %vm735, %v2132, -inf
        %2135 = vmax.xlane.f32.xlu0 %v2134
        %v2136 = vpop.xlane.xlu0 %2135
        %v2137 = vsel %vm735, %v2133, -inf
        %2138 = vmax.xlane.f32.xlu0 %v2137
        %v2139 = vpop.xlane.xlu0 %2138
        %v2140 = vsub.f32 %v2132, %v2136
        %v2141 = vsub.f32 %v2133, %v2139
        %v2142 = vmul.f32 %v2140, 1.442695
        %v2143 = vpow.pop %v2142
        %v2144 = vmul.f32 %v2141, 1.442695
        %v2145 = vpow.pop %v2144
        %v2146 = vsel %vm735, %v2143, 0.0
        %2147 = vadd.xlane.f32.xlu0 %v2146
        %v2148 = vpop.xlane.xlu0 %2147
        %v2149 = vsel %vm735, %v2145, 0.0
        %2150 = vadd.xlane.f32.xlu0 %v2149
        %v2151 = vpop.xlane.xlu0 %2150
        %v2152 = vrcp.pop %v2148
        %v2153 = vrcp.pop %v2151
        %v2154 = vmul.f32 %v2143, %v2152
        %v2155 = vmul.f32 %v2145, %v2153
        %v2156 = vpack.c.bf16 %v2154, %v2154
        %v2157 = vpack.c.bf16 %v2155, %v2155
        %2158 = vrot.lane.b32.xlu0 %v630, 44
        %v2159 = vpop.permute.xlu0 %2158
        %v2161 = vsel %vm735, %v2156, 0
        %v2164 = vsel %vm765, %v2159, 0
        %2166 = vmatprep.subr.bf16.mxu0 0
        %2167 = vmatpush1.bf16.msra.mxu0 %v2164
        %2168 = vmatprep.subr.bf16.mxu0 0
        %2169 = vmatpush1.bf16.msra.mxu0 0
        %2170 = vmatprep.subr.bf16.mxu0 0
        %2171 = vmatpush1.bf16.msra.mxu0 0
        %2172 = vmatprep.subr.bf16.mxu0 0
        %2173 = vmatpush1.bf16.msra.mxu0 0
        %2174 = vmatprep.subr.bf16.mxu0 0
        %2175 = vmatpush1.bf16.msra.mxu0 0
        %2176 = vmatprep.subr.bf16.mxu0 0
        %2177 = vmatpush1.bf16.msra.mxu0 0
        %2178 = vmatprep.subr.bf16.mxu0 0
        %2179 = vmatpush1.bf16.msra.mxu0 0
        %2180 = vmatprep.subr.bf16.mxu0 0
        %2181 = vmatpush1.bf16.msra.mxu0 0
        %2182 = vmatprep.subr.bf16.mxu0 0
        %2183 = vmatpush1.bf16.msra.mxu0 0
        %2184 = vmatprep.subr.bf16.mxu0 0
        %2185 = vmatpush1.bf16.msra.mxu0 0
        %2186 = vmatprep.subr.bf16.mxu0 0
        %2187 = vmatpush1.bf16.msra.mxu0 0
        %2188 = vmatprep.subr.bf16.mxu0 0
        %2189 = vmatpush1.bf16.msra.mxu0 0
        %2190 = vmatprep.subr.bf16.mxu0 0
        %2191 = vmatpush1.bf16.msra.mxu0 0
        %2192 = vmatprep.subr.bf16.mxu0 0
        %2193 = vmatpush1.bf16.msra.mxu0 0
        %2194 = vmatprep.subr.bf16.mxu0 0
        %2195 = vmatpush1.bf16.msra.mxu0 0
        %2196 = vmatprep.subr.bf16.mxu0 0
        %2197 = vmatpush1.bf16.msra.mxu0 0
        %2198 = vmatprep.mubr.bf16.mxu0 0
        %2199 = vmatmul.mubr.bf16.gmra.mrb[0].mxu0 %v2161
        %v2200 = vpop.f32.mrb[0].mxu0
        %v2201 = vadd.f32 0.0, %v2200
        %v2202 = vpop.f32.mrb[0].mxu0
        %v2203 = vpop.f32.mrb[0].mxu0
        %v2204 = vpop.f32.mrb[0].mxu0
        %2205 = vdwg.mxu0
        %2206 = vrot.lane.b32.xlu0 %v631, 44
        %v2207 = vpop.permute.xlu0 %2206
        %v2209 = vsel %vm735, %v2157, 0
        %v2212 = vsel %vm765, %v2207, 0
        %2214 = vmatprep.subr.bf16.mxu0 0
        %2215 = vmatpush1.bf16.msra.mxu0 %v2212
        %2216 = vmatprep.subr.bf16.mxu0 0
        %2217 = vmatpush1.bf16.msra.mxu0 0
        %2218 = vmatprep.subr.bf16.mxu0 0
        %2219 = vmatpush1.bf16.msra.mxu0 0
        %2220 = vmatprep.subr.bf16.mxu0 0
        %2221 = vmatpush1.bf16.msra.mxu0 0
        %2222 = vmatprep.subr.bf16.mxu0 0
        %2223 = vmatpush1.bf16.msra.mxu0 0
        %2224 = vmatprep.subr.bf16.mxu0 0
        %2225 = vmatpush1.bf16.msra.mxu0 0
        %2226 = vmatprep.subr.bf16.mxu0 0
        %2227 = vmatpush1.bf16.msra.mxu0 0
        %2228 = vmatprep.subr.bf16.mxu0 0
        %2229 = vmatpush1.bf16.msra.mxu0 0
        %2230 = vmatprep.subr.bf16.mxu0 0
        %2231 = vmatpush1.bf16.msra.mxu0 0
        %2232 = vmatprep.subr.bf16.mxu0 0
        %2233 = vmatpush1.bf16.msra.mxu0 0
        %2234 = vmatprep.subr.bf16.mxu0 0
        %2235 = vmatpush1.bf16.msra.mxu0 0
        %2236 = vmatprep.subr.bf16.mxu0 0
        %2237 = vmatpush1.bf16.msra.mxu0 0
        %2238 = vmatprep.subr.bf16.mxu0 0
        %2239 = vmatpush1.bf16.msra.mxu0 0
        %2240 = vmatprep.subr.bf16.mxu0 0
        %2241 = vmatpush1.bf16.msra.mxu0 0
        %2242 = vmatprep.subr.bf16.mxu0 0
        %2243 = vmatpush1.bf16.msra.mxu0 0
        %2244 = vmatprep.subr.bf16.mxu0 0
        %2245 = vmatpush1.bf16.msra.mxu0 0
        %2246 = vmatprep.mubr.bf16.mxu0 0
        %2247 = vmatmul.mubr.bf16.gmra.mrb[0].mxu0 %v2209
        %v2248 = vpop.f32.mrb[0].mxu0
        %v2249 = vadd.f32 0.0, %v2248
        %v2250 = vpop.f32.mrb[0].mxu0
        %v2251 = vpop.f32.mrb[0].mxu0
        %v2252 = vpop.f32.mrb[0].mxu0
        %2253 = vdwg.mxu0
        %v2254 = vpack.c.bf16 %v2249, %v2201
        %2255 = vrot.lane.b32.xlu0 %v1089, 108
        %v2256 = vpop.permute.xlu0 %2255
        %2257 = vrot.lane.b32.xlu0 %v1090, 108
        %v2258 = vpop.permute.xlu0 %2257
        %v2260 = vsel %vm638, %v2254, 0
        %v2263 = vsel %vm638, %v2256, 0
        %v2266 = vsel %vm638, %v2258, 0
        %2268 = vmatprep.subr.bf16.mxu0 0
        %2269 = vmatpush1.bf16.xpose.msra.mxu0 %v2263
        %2270 = vmatprep.subr.bf16.mxu0 0
        %2271 = vmatpush1.bf16.xpose.msra.mxu0 %v2266
        %2272 = vmatprep.subr.bf16.mxu0 0
        %2273 = vmatpush1.bf16.xpose.msra.mxu0 0
        %2274 = vmatprep.subr.bf16.mxu0 0
        %2275 = vmatpush1.bf16.xpose.msra.mxu0 0
        %2276 = vmatprep.subr.bf16.mxu0 0
        %2277 = vmatpush1.bf16.xpose.msra.mxu0 0
        %2278 = vmatprep.subr.bf16.mxu0 0
        %2279 = vmatpush1.bf16.xpose.msra.mxu0 0
        %2280 = vmatprep.subr.bf16.mxu0 0
        %2281 = vmatpush1.bf16.xpose.msra.mxu0 0
        %2282 = vmatprep.subr.bf16.mxu0 0
        %2283 = vmatpush1.bf16.xpose.msra.mxu0 0
        %2284 = vmatprep.subr.bf16.mxu0 0
        %2285 = vmatpush1.bf16.xpose.msra.mxu0 0
        %2286 = vmatprep.subr.bf16.mxu0 0
        %2287 = vmatpush1.bf16.xpose.msra.mxu0 0
        %2288 = vmatprep.subr.bf16.mxu0 0
        %2289 = vmatpush1.bf16.xpose.msra.mxu0 0
        %2290 = vmatprep.subr.bf16.mxu0 0
        %2291 = vmatpush1.bf16.xpose.msra.mxu0 0
        %2292 = vmatprep.subr.bf16.mxu0 0
        %2293 = vmatpush1.bf16.xpose.msra.mxu0 0
        %2294 = vmatprep.subr.bf16.mxu0 0
        %2295 = vmatpush1.bf16.xpose.msra.mxu0 0
        %2296 = vmatprep.subr.bf16.mxu0 0
        %2297 = vmatpush1.bf16.xpose.msra.mxu0 0
        %2298 = vmatprep.subr.bf16.mxu0 0
        %2299 = vmatpush1.bf16.xpose.msra.mxu0 0
        %2300 = vmatprep.mubr.bf16.mxu0 0
        %2301 = vmatmul.mubr.bf16.gmra.mrb[0].mxu0 %v2260
        %v2302 = vpop.f32.mrb[0].mxu0
        %v2303 = vadd.f32 0.0, %v2302
        %v2304 = vpop.f32.mrb[0].mxu0
        %v2305 = vpop.f32.mrb[0].mxu0
        %v2306 = vadd.f32 0.0, %v2305
        %v2307 = vpop.f32.mrb[0].mxu0
        %2308 = vdwg.mxu0
        %v2309 = vadd.f32 %v2030, %v2303
        %v2310 = vadd.f32 %v2031, %v2306
        %2311 = vrot.lane.b32.xlu0 %v630, 104
        %v2312 = vpop.permute.xlu0 %2311
        %2313 = vrot.lane.b32.xlu0 %v630, 72
        %v2314 = vpop.permute.xlu0 %2313
        %v2316 = vsel %vm638, %v2312, 0
        %v2319 = vsel %vm638, %v2314, 0
        %2321 = vmatprep.subr.bf16.mxu0 0
        %2322 = vmatpush1.bf16.xpose.msra.mxu0 %v2319
        %2323 = vmatprep.subr.bf16.mxu0 0
        %2324 = vmatpush1.bf16.xpose.msra.mxu0 0
        %2325 = vmatprep.subr.bf16.mxu0 0
        %2326 = vmatpush1.bf16.xpose.msra.mxu0 0
        %2327 = vmatprep.subr.bf16.mxu0 0
        %2328 = vmatpush1.bf16.xpose.msra.mxu0 0
        %2329 = vmatprep.subr.bf16.mxu0 0
        %2330 = vmatpush1.bf16.xpose.msra.mxu0 0
        %2331 = vmatprep.subr.bf16.mxu0 0
        %2332 = vmatpush1.bf16.xpose.msra.mxu0 0
        %2333 = vmatprep.subr.bf16.mxu0 0
        %2334 = vmatpush1.bf16.xpose.msra.mxu0 0
        %2335 = vmatprep.subr.bf16.mxu0 0
        %2336 = vmatpush1.bf16.xpose.msra.mxu0 0
        %2337 = vmatprep.subr.bf16.mxu0 0
        %2338 = vmatpush1.bf16.xpose.msra.mxu0 0
        %2339 = vmatprep.subr.bf16.mxu0 0
        %2340 = vmatpush1.bf16.xpose.msra.mxu0 0
        %2341 = vmatprep.subr.bf16.mxu0 0
        %2342 = vmatpush1.bf16.xpose.msra.mxu0 0
        %2343 = vmatprep.subr.bf16.mxu0 0
        %2344 = vmatpush1.bf16.xpose.msra.mxu0 0
        %2345 = vmatprep.subr.bf16.mxu0 0
        %2346 = vmatpush1.bf16.xpose.msra.mxu0 0
        %2347 = vmatprep.subr.bf16.mxu0 0
        %2348 = vmatpush1.bf16.xpose.msra.mxu0 0
        %2349 = vmatprep.subr.bf16.mxu0 0
        %2350 = vmatpush1.bf16.xpose.msra.mxu0 0
        %2351 = vmatprep.subr.bf16.mxu0 0
        %2352 = vmatpush1.bf16.xpose.msra.mxu0 0
        %2353 = vmatprep.mubr.bf16.mxu0 0
        %2354 = vmatmul.mubr.bf16.gmra.mrb[0].mxu0 %v2316
        %v2355 = vpop.f32.mrb[0].mxu0
        %v2356 = vadd.f32 0.0, %v2355
        %v2357 = vpop.f32.mrb[0].mxu0
        %v2358 = vpop.f32.mrb[0].mxu0
        %v2359 = vpop.f32.mrb[0].mxu0
        %2360 = vdwg.mxu0
        %2361 = vrot.lane.b32.xlu0 %v631, 104
        %v2362 = vpop.permute.xlu0 %2361
        %2363 = vrot.lane.b32.xlu0 %v631, 72
        %v2364 = vpop.permute.xlu0 %2363
        %v2366 = vsel %vm638, %v2362, 0
        %v2369 = vsel %vm638, %v2364, 0
        %2371 = vmatprep.subr.bf16.mxu0 0
        %2372 = vmatpush1.bf16.xpose.msra.mxu0 %v2369
        %2373 = vmatprep.subr.bf16.mxu0 0
        %2374 = vmatpush1.bf16.xpose.msra.mxu0 0
        %2375 = vmatprep.subr.bf16.mxu0 0
        %2376 = vmatpush1.bf16.xpose.msra.mxu0 0
        %2377 = vmatprep.subr.bf16.mxu0 0
        %2378 = vmatpush1.bf16.xpose.msra.mxu0 0
        %2379 = vmatprep.subr.bf16.mxu0 0
        %2380 = vmatpush1.bf16.xpose.msra.mxu0 0
        %2381 = vmatprep.subr.bf16.mxu0 0
        %2382 = vmatpush1.bf16.xpose.msra.mxu0 0
        %2383 = vmatprep.subr.bf16.mxu0 0
        %2384 = vmatpush1.bf16.xpose.msra.mxu0 0
        %2385 = vmatprep.subr.bf16.mxu0 0
        %2386 = vmatpush1.bf16.xpose.msra.mxu0 0
        %2387 = vmatprep.subr.bf16.mxu0 0
        %2388 = vmatpush1.bf16.xpose.msra.mxu0 0
        %2389 = vmatprep.subr.bf16.mxu0 0
        %2390 = vmatpush1.bf16.xpose.msra.mxu0 0
        %2391 = vmatprep.subr.bf16.mxu0 0
        %2392 = vmatpush1.bf16.xpose.msra.mxu0 0
        %2393 = vmatprep.subr.bf16.mxu0 0
        %2394 = vmatpush1.bf16.xpose.msra.mxu0 0
        %2395 = vmatprep.subr.bf16.mxu0 0
        %2396 = vmatpush1.bf16.xpose.msra.mxu0 0
        %2397 = vmatprep.subr.bf16.mxu0 0
        %2398 = vmatpush1.bf16.xpose.msra.mxu0 0
        %2399 = vmatprep.subr.bf16.mxu0 0
        %2400 = vmatpush1.bf16.xpose.msra.mxu0 0
        %2401 = vmatprep.subr.bf16.mxu0 0
        %2402 = vmatpush1.bf16.xpose.msra.mxu0 0
        %2403 = vmatprep.mubr.bf16.mxu0 0
        %2404 = vmatmul.mubr.bf16.gmra.mrb[0].mxu0 %v2366
        %v2405 = vpop.f32.mrb[0].mxu0
        %v2406 = vadd.f32 0.0, %v2405
        %v2407 = vpop.f32.mrb[0].mxu0
        %v2408 = vpop.f32.mrb[0].mxu0
        %v2409 = vpop.f32.mrb[0].mxu0
        %2410 = vdwg.mxu0
        %v2411 = vmul.f32 %v2356, 0.5
        %v2412 = vmul.f32 %v2406, 0.5
        %v2413 = vsel %vm735, %v2411, -inf
        %2414 = vmax.xlane.f32.xlu0 %v2413
        %v2415 = vpop.xlane.xlu0 %2414
        %v2416 = vsel %vm735, %v2412, -inf
        %2417 = vmax.xlane.f32.xlu0 %v2416
        %v2418 = vpop.xlane.xlu0 %2417
        %v2419 = vsub.f32 %v2411, %v2415
        %v2420 = vsub.f32 %v2412, %v2418
        %v2421 = vmul.f32 %v2419, 1.442695
        %v2422 = vpow.pop %v2421
        %v2423 = vmul.f32 %v2420, 1.442695
        %v2424 = vpow.pop %v2423
        %v2425 = vsel %vm735, %v2422, 0.0
        %2426 = vadd.xlane.f32.xlu0 %v2425
        %v2427 = vpop.xlane.xlu0 %2426
        %v2428 = vsel %vm735, %v2424, 0.0
        %2429 = vadd.xlane.f32.xlu0 %v2428
        %v2430 = vpop.xlane.xlu0 %2429
        %v2431 = vrcp.pop %v2427
        %v2432 = vrcp.pop %v2430
        %v2433 = vmul.f32 %v2422, %v2431
        %v2434 = vmul.f32 %v2424, %v2432
        %v2435 = vpack.c.bf16 %v2433, %v2433
        %v2436 = vpack.c.bf16 %v2434, %v2434
        %2437 = vrot.lane.b32.xlu0 %v630, 40
        %v2438 = vpop.permute.xlu0 %2437
        %v2440 = vsel %vm735, %v2435, 0
        %v2443 = vsel %vm765, %v2438, 0
        %2445 = vmatprep.subr.bf16.mxu0 0
        %2446 = vmatpush1.bf16.msra.mxu0 %v2443
        %2447 = vmatprep.subr.bf16.mxu0 0
        %2448 = vmatpush1.bf16.msra.mxu0 0
        %2449 = vmatprep.subr.bf16.mxu0 0
        %2450 = vmatpush1.bf16.msra.mxu0 0
        %2451 = vmatprep.subr.bf16.mxu0 0
        %2452 = vmatpush1.bf16.msra.mxu0 0
        %2453 = vmatprep.subr.bf16.mxu0 0
        %2454 = vmatpush1.bf16.msra.mxu0 0
        %2455 = vmatprep.subr.bf16.mxu0 0
        %2456 = vmatpush1.bf16.msra.mxu0 0
        %2457 = vmatprep.subr.bf16.mxu0 0
        %2458 = vmatpush1.bf16.msra.mxu0 0
        %2459 = vmatprep.subr.bf16.mxu0 0
        %2460 = vmatpush1.bf16.msra.mxu0 0
        %2461 = vmatprep.subr.bf16.mxu0 0
        %2462 = vmatpush1.bf16.msra.mxu0 0
        %2463 = vmatprep.subr.bf16.mxu0 0
        %2464 = vmatpush1.bf16.msra.mxu0 0
        %2465 = vmatprep.subr.bf16.mxu0 0
        %2466 = vmatpush1.bf16.msra.mxu0 0
        %2467 = vmatprep.subr.bf16.mxu0 0
        %2468 = vmatpush1.bf16.msra.mxu0 0
        %2469 = vmatprep.subr.bf16.mxu0 0
        %2470 = vmatpush1.bf16.msra.mxu0 0
        %2471 = vmatprep.subr.bf16.mxu0 0
        %2472 = vmatpush1.bf16.msra.mxu0 0
        %2473 = vmatprep.subr.bf16.mxu0 0
        %2474 = vmatpush1.bf16.msra.mxu0 0
        %2475 = vmatprep.subr.bf16.mxu0 0
        %2476 = vmatpush1.bf16.msra.mxu0 0
        %2477 = vmatprep.mubr.bf16.mxu0 0
        %2478 = vmatmul.mubr.bf16.gmra.mrb[0].mxu0 %v2440
        %v2479 = vpop.f32.mrb[0].mxu0
        %v2480 = vadd.f32 0.0, %v2479
        %v2481 = vpop.f32.mrb[0].mxu0
        %v2482 = vpop.f32.mrb[0].mxu0
        %v2483 = vpop.f32.mrb[0].mxu0
        %2484 = vdwg.mxu0
        %2485 = vrot.lane.b32.xlu0 %v631, 40
        %v2486 = vpop.permute.xlu0 %2485
        %v2488 = vsel %vm735, %v2436, 0
        %v2491 = vsel %vm765, %v2486, 0
        %2493 = vmatprep.subr.bf16.mxu0 0
        %2494 = vmatpush1.bf16.msra.mxu0 %v2491
        %2495 = vmatprep.subr.bf16.mxu0 0
        %2496 = vmatpush1.bf16.msra.mxu0 0
        %2497 = vmatprep.subr.bf16.mxu0 0
        %2498 = vmatpush1.bf16.msra.mxu0 0
        %2499 = vmatprep.subr.bf16.mxu0 0
        %2500 = vmatpush1.bf16.msra.mxu0 0
        %2501 = vmatprep.subr.bf16.mxu0 0
        %2502 = vmatpush1.bf16.msra.mxu0 0
        %2503 = vmatprep.subr.bf16.mxu0 0
        %2504 = vmatpush1.bf16.msra.mxu0 0
        %2505 = vmatprep.subr.bf16.mxu0 0
        %2506 = vmatpush1.bf16.msra.mxu0 0
        %2507 = vmatprep.subr.bf16.mxu0 0
        %2508 = vmatpush1.bf16.msra.mxu0 0
        %2509 = vmatprep.subr.bf16.mxu0 0
        %2510 = vmatpush1.bf16.msra.mxu0 0
        %2511 = vmatprep.subr.bf16.mxu0 0
        %2512 = vmatpush1.bf16.msra.mxu0 0
        %2513 = vmatprep.subr.bf16.mxu0 0
        %2514 = vmatpush1.bf16.msra.mxu0 0
        %2515 = vmatprep.subr.bf16.mxu0 0
        %2516 = vmatpush1.bf16.msra.mxu0 0
        %2517 = vmatprep.subr.bf16.mxu0 0
        %2518 = vmatpush1.bf16.msra.mxu0 0
        %2519 = vmatprep.subr.bf16.mxu0 0
        %2520 = vmatpush1.bf16.msra.mxu0 0
        %2521 = vmatprep.subr.bf16.mxu0 0
        %2522 = vmatpush1.bf16.msra.mxu0 0
        %2523 = vmatprep.subr.bf16.mxu0 0
        %2524 = vmatpush1.bf16.msra.mxu0 0
        %2525 = vmatprep.mubr.bf16.mxu0 0
        %2526 = vmatmul.mubr.bf16.gmra.mrb[0].mxu0 %v2488
        %v2527 = vpop.f32.mrb[0].mxu0
        %v2528 = vadd.f32 0.0, %v2527
        %v2529 = vpop.f32.mrb[0].mxu0
        %v2530 = vpop.f32.mrb[0].mxu0
        %v2531 = vpop.f32.mrb[0].mxu0
        %2532 = vdwg.mxu0
        %v2533 = vpack.c.bf16 %v2528, %v2480
        %2534 = vrot.lane.b32.xlu0 %v1089, 104
        %v2535 = vpop.permute.xlu0 %2534
        %2536 = vrot.lane.b32.xlu0 %v1090, 104
        %v2537 = vpop.permute.xlu0 %2536
        %v2539 = vsel %vm638, %v2533, 0
        %v2542 = vsel %vm638, %v2535, 0
        %v2545 = vsel %vm638, %v2537, 0
        %2547 = vmatprep.subr.bf16.mxu0 0
        %2548 = vmatpush1.bf16.xpose.msra.mxu0 %v2542
        %2549 = vmatprep.subr.bf16.mxu0 0
        %2550 = vmatpush1.bf16.xpose.msra.mxu0 %v2545
        %2551 = vmatprep.subr.bf16.mxu0 0
        %2552 = vmatpush1.bf16.xpose.msra.mxu0 0
        %2553 = vmatprep.subr.bf16.mxu0 0
        %2554 = vmatpush1.bf16.xpose.msra.mxu0 0
        %2555 = vmatprep.subr.bf16.mxu0 0
        %2556 = vmatpush1.bf16.xpose.msra.mxu0 0
        %2557 = vmatprep.subr.bf16.mxu0 0
        %2558 = vmatpush1.bf16.xpose.msra.mxu0 0
        %2559 = vmatprep.subr.bf16.mxu0 0
        %2560 = vmatpush1.bf16.xpose.msra.mxu0 0
        %2561 = vmatprep.subr.bf16.mxu0 0
        %2562 = vmatpush1.bf16.xpose.msra.mxu0 0
        %2563 = vmatprep.subr.bf16.mxu0 0
        %2564 = vmatpush1.bf16.xpose.msra.mxu0 0
        %2565 = vmatprep.subr.bf16.mxu0 0
        %2566 = vmatpush1.bf16.xpose.msra.mxu0 0
        %2567 = vmatprep.subr.bf16.mxu0 0
        %2568 = vmatpush1.bf16.xpose.msra.mxu0 0
        %2569 = vmatprep.subr.bf16.mxu0 0
        %2570 = vmatpush1.bf16.xpose.msra.mxu0 0
        %2571 = vmatprep.subr.bf16.mxu0 0
        %2572 = vmatpush1.bf16.xpose.msra.mxu0 0
        %2573 = vmatprep.subr.bf16.mxu0 0
        %2574 = vmatpush1.bf16.xpose.msra.mxu0 0
        %2575 = vmatprep.subr.bf16.mxu0 0
        %2576 = vmatpush1.bf16.xpose.msra.mxu0 0
        %2577 = vmatprep.subr.bf16.mxu0 0
        %2578 = vmatpush1.bf16.xpose.msra.mxu0 0
        %2579 = vmatprep.mubr.bf16.mxu0 0
        %2580 = vmatmul.mubr.bf16.gmra.mrb[0].mxu0 %v2539
        %v2581 = vpop.f32.mrb[0].mxu0
        %v2582 = vadd.f32 0.0, %v2581
        %v2583 = vpop.f32.mrb[0].mxu0
        %v2584 = vpop.f32.mrb[0].mxu0
        %v2585 = vadd.f32 0.0, %v2584
        %v2586 = vpop.f32.mrb[0].mxu0
        %2587 = vdwg.mxu0
        %v2588 = vadd.f32 %v2309, %v2582
        %v2589 = vadd.f32 %v2310, %v2585
        %2590 = vrot.lane.b32.xlu0 %v630, 100
        %v2591 = vpop.permute.xlu0 %2590
        %2592 = vrot.lane.b32.xlu0 %v630, 68
        %v2593 = vpop.permute.xlu0 %2592
        %v2595 = vsel %vm638, %v2591, 0
        %v2598 = vsel %vm638, %v2593, 0
        %2600 = vmatprep.subr.bf16.mxu0 0
        %2601 = vmatpush1.bf16.xpose.msra.mxu0 %v2598
        %2602 = vmatprep.subr.bf16.mxu0 0
        %2603 = vmatpush1.bf16.xpose.msra.mxu0 0
        %2604 = vmatprep.subr.bf16.mxu0 0
        %2605 = vmatpush1.bf16.xpose.msra.mxu0 0
        %2606 = vmatprep.subr.bf16.mxu0 0
        %2607 = vmatpush1.bf16.xpose.msra.mxu0 0
        %2608 = vmatprep.subr.bf16.mxu0 0
        %2609 = vmatpush1.bf16.xpose.msra.mxu0 0
        %2610 = vmatprep.subr.bf16.mxu0 0
        %2611 = vmatpush1.bf16.xpose.msra.mxu0 0
        %2612 = vmatprep.subr.bf16.mxu0 0
        %2613 = vmatpush1.bf16.xpose.msra.mxu0 0
        %2614 = vmatprep.subr.bf16.mxu0 0
        %2615 = vmatpush1.bf16.xpose.msra.mxu0 0
        %2616 = vmatprep.subr.bf16.mxu0 0
        %2617 = vmatpush1.bf16.xpose.msra.mxu0 0
        %2618 = vmatprep.subr.bf16.mxu0 0
        %2619 = vmatpush1.bf16.xpose.msra.mxu0 0
        %2620 = vmatprep.subr.bf16.mxu0 0
        %2621 = vmatpush1.bf16.xpose.msra.mxu0 0
        %2622 = vmatprep.subr.bf16.mxu0 0
        %2623 = vmatpush1.bf16.xpose.msra.mxu0 0
        %2624 = vmatprep.subr.bf16.mxu0 0
        %2625 = vmatpush1.bf16.xpose.msra.mxu0 0
        %2626 = vmatprep.subr.bf16.mxu0 0
        %2627 = vmatpush1.bf16.xpose.msra.mxu0 0
        %2628 = vmatprep.subr.bf16.mxu0 0
        %2629 = vmatpush1.bf16.xpose.msra.mxu0 0
        %2630 = vmatprep.subr.bf16.mxu0 0
        %2631 = vmatpush1.bf16.xpose.msra.mxu0 0
        %2632 = vmatprep.mubr.bf16.mxu0 0
        %2633 = vmatmul.mubr.bf16.gmra.mrb[0].mxu0 %v2595
        %v2634 = vpop.f32.mrb[0].mxu0
        %v2635 = vadd.f32 0.0, %v2634
        %v2636 = vpop.f32.mrb[0].mxu0
        %v2637 = vpop.f32.mrb[0].mxu0
        %v2638 = vpop.f32.mrb[0].mxu0
        %2639 = vdwg.mxu0
        %2640 = vrot.lane.b32.xlu0 %v631, 100
        %v2641 = vpop.permute.xlu0 %2640
        %2642 = vrot.lane.b32.xlu0 %v631, 68
        %v2643 = vpop.permute.xlu0 %2642
        %v2645 = vsel %vm638, %v2641, 0
        %v2648 = vsel %vm638, %v2643, 0
        %2650 = vmatprep.subr.bf16.mxu0 0
        %2651 = vmatpush1.bf16.xpose.msra.mxu0 %v2648
        %2652 = vmatprep.subr.bf16.mxu0 0
        %2653 = vmatpush1.bf16.xpose.msra.mxu0 0
        %2654 = vmatprep.subr.bf16.mxu0 0
        %2655 = vmatpush1.bf16.xpose.msra.mxu0 0
        %2656 = vmatprep.subr.bf16.mxu0 0
        %2657 = vmatpush1.bf16.xpose.msra.mxu0 0
        %2658 = vmatprep.subr.bf16.mxu0 0
        %2659 = vmatpush1.bf16.xpose.msra.mxu0 0
        %2660 = vmatprep.subr.bf16.mxu0 0
        %2661 = vmatpush1.bf16.xpose.msra.mxu0 0
        %2662 = vmatprep.subr.bf16.mxu0 0
        %2663 = vmatpush1.bf16.xpose.msra.mxu0 0
        %2664 = vmatprep.subr.bf16.mxu0 0
        %2665 = vmatpush1.bf16.xpose.msra.mxu0 0
        %2666 = vmatprep.subr.bf16.mxu0 0
        %2667 = vmatpush1.bf16.xpose.msra.mxu0 0
        %2668 = vmatprep.subr.bf16.mxu0 0
        %2669 = vmatpush1.bf16.xpose.msra.mxu0 0
        %2670 = vmatprep.subr.bf16.mxu0 0
        %2671 = vmatpush1.bf16.xpose.msra.mxu0 0
        %2672 = vmatprep.subr.bf16.mxu0 0
        %2673 = vmatpush1.bf16.xpose.msra.mxu0 0
        %2674 = vmatprep.subr.bf16.mxu0 0
        %2675 = vmatpush1.bf16.xpose.msra.mxu0 0
        %2676 = vmatprep.subr.bf16.mxu0 0
        %2677 = vmatpush1.bf16.xpose.msra.mxu0 0
        %2678 = vmatprep.subr.bf16.mxu0 0
        %2679 = vmatpush1.bf16.xpose.msra.mxu0 0
        %2680 = vmatprep.subr.bf16.mxu0 0
        %2681 = vmatpush1.bf16.xpose.msra.mxu0 0
        %2682 = vmatprep.mubr.bf16.mxu0 0
        %2683 = vmatmul.mubr.bf16.gmra.mrb[0].mxu0 %v2645
        %v2684 = vpop.f32.mrb[0].mxu0
        %v2685 = vadd.f32 0.0, %v2684
        %v2686 = vpop.f32.mrb[0].mxu0
        %v2687 = vpop.f32.mrb[0].mxu0
        %v2688 = vpop.f32.mrb[0].mxu0
        %2689 = vdwg.mxu0
        %v2690 = vmul.f32 %v2635, 0.5
        %v2691 = vmul.f32 %v2685, 0.5
        %v2692 = vsel %vm735, %v2690, -inf
        %2693 = vmax.xlane.f32.xlu0 %v2692
        %v2694 = vpop.xlane.xlu0 %2693
        %v2695 = vsel %vm735, %v2691, -inf
        %2696 = vmax.xlane.f32.xlu0 %v2695
        %v2697 = vpop.xlane.xlu0 %2696
        %v2698 = vsub.f32 %v2690, %v2694
        %v2699 = vsub.f32 %v2691, %v2697
        %v2700 = vmul.f32 %v2698, 1.442695
        %v2701 = vpow.pop %v2700
        %v2702 = vmul.f32 %v2699, 1.442695
        %v2703 = vpow.pop %v2702
        %v2704 = vsel %vm735, %v2701, 0.0
        %2705 = vadd.xlane.f32.xlu0 %v2704
        %v2706 = vpop.xlane.xlu0 %2705
        %v2707 = vsel %vm735, %v2703, 0.0
        %2708 = vadd.xlane.f32.xlu0 %v2707
        %v2709 = vpop.xlane.xlu0 %2708
        %v2710 = vrcp.pop %v2706
        %v2711 = vrcp.pop %v2709
        %v2712 = vmul.f32 %v2701, %v2710
        %v2713 = vmul.f32 %v2703, %v2711
        %v2714 = vpack.c.bf16 %v2712, %v2712
        %v2715 = vpack.c.bf16 %v2713, %v2713
        %2716 = vrot.lane.b32.xlu0 %v630, 36
        %v2717 = vpop.permute.xlu0 %2716
        %v2719 = vsel %vm735, %v2714, 0
        %v2722 = vsel %vm765, %v2717, 0
        %2724 = vmatprep.subr.bf16.mxu0 0
        %2725 = vmatpush1.bf16.msra.mxu0 %v2722
        %2726 = vmatprep.subr.bf16.mxu0 0
        %2727 = vmatpush1.bf16.msra.mxu0 0
        %2728 = vmatprep.subr.bf16.mxu0 0
        %2729 = vmatpush1.bf16.msra.mxu0 0
        %2730 = vmatprep.subr.bf16.mxu0 0
        %2731 = vmatpush1.bf16.msra.mxu0 0
        %2732 = vmatprep.subr.bf16.mxu0 0
        %2733 = vmatpush1.bf16.msra.mxu0 0
        %2734 = vmatprep.subr.bf16.mxu0 0
        %2735 = vmatpush1.bf16.msra.mxu0 0
        %2736 = vmatprep.subr.bf16.mxu0 0
        %2737 = vmatpush1.bf16.msra.mxu0 0
        %2738 = vmatprep.subr.bf16.mxu0 0
        %2739 = vmatpush1.bf16.msra.mxu0 0
        %2740 = vmatprep.subr.bf16.mxu0 0
        %2741 = vmatpush1.bf16.msra.mxu0 0
        %2742 = vmatprep.subr.bf16.mxu0 0
        %2743 = vmatpush1.bf16.msra.mxu0 0
        %2744 = vmatprep.subr.bf16.mxu0 0
        %2745 = vmatpush1.bf16.msra.mxu0 0
        %2746 = vmatprep.subr.bf16.mxu0 0
        %2747 = vmatpush1.bf16.msra.mxu0 0
        %2748 = vmatprep.subr.bf16.mxu0 0
        %2749 = vmatpush1.bf16.msra.mxu0 0
        %2750 = vmatprep.subr.bf16.mxu0 0
        %2751 = vmatpush1.bf16.msra.mxu0 0
        %2752 = vmatprep.subr.bf16.mxu0 0
        %2753 = vmatpush1.bf16.msra.mxu0 0
        %2754 = vmatprep.subr.bf16.mxu0 0
        %2755 = vmatpush1.bf16.msra.mxu0 0
        %2756 = vmatprep.mubr.bf16.mxu0 0
        %2757 = vmatmul.mubr.bf16.gmra.mrb[0].mxu0 %v2719
        %v2758 = vpop.f32.mrb[0].mxu0
        %v2759 = vadd.f32 0.0, %v2758
        %v2760 = vpop.f32.mrb[0].mxu0
        %v2761 = vpop.f32.mrb[0].mxu0
        %v2762 = vpop.f32.mrb[0].mxu0
        %2763 = vdwg.mxu0
        %2764 = vrot.lane.b32.xlu0 %v631, 36
        %v2765 = vpop.permute.xlu0 %2764
        %v2767 = vsel %vm735, %v2715, 0
        %v2770 = vsel %vm765, %v2765, 0
        %2772 = vmatprep.subr.bf16.mxu0 0
        %2773 = vmatpush1.bf16.msra.mxu0 %v2770
        %2774 = vmatprep.subr.bf16.mxu0 0
        %2775 = vmatpush1.bf16.msra.mxu0 0
        %2776 = vmatprep.subr.bf16.mxu0 0
        %2777 = vmatpush1.bf16.msra.mxu0 0
        %2778 = vmatprep.subr.bf16.mxu0 0
        %2779 = vmatpush1.bf16.msra.mxu0 0
        %2780 = vmatprep.subr.bf16.mxu0 0
        %2781 = vmatpush1.bf16.msra.mxu0 0
        %2782 = vmatprep.subr.bf16.mxu0 0
        %2783 = vmatpush1.bf16.msra.mxu0 0
        %2784 = vmatprep.subr.bf16.mxu0 0
        %2785 = vmatpush1.bf16.msra.mxu0 0
        %2786 = vmatprep.subr.bf16.mxu0 0
        %2787 = vmatpush1.bf16.msra.mxu0 0
        %2788 = vmatprep.subr.bf16.mxu0 0
        %2789 = vmatpush1.bf16.msra.mxu0 0
        %2790 = vmatprep.subr.bf16.mxu0 0
        %2791 = vmatpush1.bf16.msra.mxu0 0
        %2792 = vmatprep.subr.bf16.mxu0 0
        %2793 = vmatpush1.bf16.msra.mxu0 0
        %2794 = vmatprep.subr.bf16.mxu0 0
        %2795 = vmatpush1.bf16.msra.mxu0 0
        %2796 = vmatprep.subr.bf16.mxu0 0
        %2797 = vmatpush1.bf16.msra.mxu0 0
        %2798 = vmatprep.subr.bf16.mxu0 0
        %2799 = vmatpush1.bf16.msra.mxu0 0
        %2800 = vmatprep.subr.bf16.mxu0 0
        %2801 = vmatpush1.bf16.msra.mxu0 0
        %2802 = vmatprep.subr.bf16.mxu0 0
        %2803 = vmatpush1.bf16.msra.mxu0 0
        %2804 = vmatprep.mubr.bf16.mxu0 0
        %2805 = vmatmul.mubr.bf16.gmra.mrb[0].mxu0 %v2767
        %v2806 = vpop.f32.mrb[0].mxu0
        %v2807 = vadd.f32 0.0, %v2806
        %v2808 = vpop.f32.mrb[0].mxu0
        %v2809 = vpop.f32.mrb[0].mxu0
        %v2810 = vpop.f32.mrb[0].mxu0
        %2811 = vdwg.mxu0
        %v2812 = vpack.c.bf16 %v2807, %v2759
        %2813 = vrot.lane.b32.xlu0 %v1089, 100
        %v2814 = vpop.permute.xlu0 %2813
        %2815 = vrot.lane.b32.xlu0 %v1090, 100
        %v2816 = vpop.permute.xlu0 %2815
        %v2818 = vsel %vm638, %v2812, 0
        %v2821 = vsel %vm638, %v2814, 0
        %v2824 = vsel %vm638, %v2816, 0
        %2826 = vmatprep.subr.bf16.mxu0 0
        %2827 = vmatpush1.bf16.xpose.msra.mxu0 %v2821
        %2828 = vmatprep.subr.bf16.mxu0 0
        %2829 = vmatpush1.bf16.xpose.msra.mxu0 %v2824
        %2830 = vmatprep.subr.bf16.mxu0 0
        %2831 = vmatpush1.bf16.xpose.msra.mxu0 0
        %2832 = vmatprep.subr.bf16.mxu0 0
        %2833 = vmatpush1.bf16.xpose.msra.mxu0 0
        %2834 = vmatprep.subr.bf16.mxu0 0
        %2835 = vmatpush1.bf16.xpose.msra.mxu0 0
        %2836 = vmatprep.subr.bf16.mxu0 0
        %2837 = vmatpush1.bf16.xpose.msra.mxu0 0
        %2838 = vmatprep.subr.bf16.mxu0 0
        %2839 = vmatpush1.bf16.xpose.msra.mxu0 0
        %2840 = vmatprep.subr.bf16.mxu0 0
        %2841 = vmatpush1.bf16.xpose.msra.mxu0 0
        %2842 = vmatprep.subr.bf16.mxu0 0
        %2843 = vmatpush1.bf16.xpose.msra.mxu0 0
        %2844 = vmatprep.subr.bf16.mxu0 0
        %2845 = vmatpush1.bf16.xpose.msra.mxu0 0
        %2846 = vmatprep.subr.bf16.mxu0 0
        %2847 = vmatpush1.bf16.xpose.msra.mxu0 0
        %2848 = vmatprep.subr.bf16.mxu0 0
        %2849 = vmatpush1.bf16.xpose.msra.mxu0 0
        %2850 = vmatprep.subr.bf16.mxu0 0
        %2851 = vmatpush1.bf16.xpose.msra.mxu0 0
        %2852 = vmatprep.subr.bf16.mxu0 0
        %2853 = vmatpush1.bf16.xpose.msra.mxu0 0
        %2854 = vmatprep.subr.bf16.mxu0 0
        %2855 = vmatpush1.bf16.xpose.msra.mxu0 0
        %2856 = vmatprep.subr.bf16.mxu0 0
        %2857 = vmatpush1.bf16.xpose.msra.mxu0 0
        %2858 = vmatprep.mubr.bf16.mxu0 0
        %2859 = vmatmul.mubr.bf16.gmra.mrb[0].mxu0 %v2818
        %v2860 = vpop.f32.mrb[0].mxu0
        %v2861 = vadd.f32 0.0, %v2860
        %v2862 = vpop.f32.mrb[0].mxu0
        %v2863 = vpop.f32.mrb[0].mxu0
        %v2864 = vadd.f32 0.0, %v2863
        %v2865 = vpop.f32.mrb[0].mxu0
        %2866 = vdwg.mxu0
        %v2867 = vadd.f32 %v2588, %v2861
        %v2868 = vadd.f32 %v2589, %v2864
        %v2869 = vlaneseq
        %v2870 = vshrl.u32 %v2869, 7
        %v2871 = vsub.s32 0, %v2870
        %v2872 = vrot.slane %v556, %v2871
        %v2873 = vadd.f32 %v2867, %v2872
        %v2874 = vadd.f32 %v2868, %v2872
        %v2875 = vadd.f32 %v554, %v2873
        %v2876 = vadd.f32 %v555, %v2874
        %v2877 = vsel %vm581, %v2875, 0.0
        %2878 = vadd.xlane.f32.xlu0 %v2877
        %v2879 = vpop.xlane.xlu0 %2878
        %v2880 = vsel %vm581, %v2876, 0.0
        %2881 = vadd.xlane.f32.xlu0 %v2880
        %v2882 = vpop.xlane.xlu0 %2881
        %v2883 = vrcp.pop 32.0
        %v2884 = vmul.f32 %v2879, %v2883
        %v2885 = vmul.f32 %v2882, %v2883
        %v2886 = vsub.f32 %v2875, %v2884
        %v2887 = vsub.f32 %v2876, %v2885
        %v2888 = vmul.f32 %v2886, %v2886
        %v2889 = vmul.f32 %v2887, %v2887
        %v2890 = vsel %vm581, %v2888, 0.0
        %2891 = vadd.xlane.f32.xlu0 %v2890
        %v2892 = vpop.xlane.xlu0 %2891
        %v2893 = vsel %vm581, %v2889, 0.0
        %2894 = vadd.xlane.f32.xlu0 %v2893
        %v2895 = vpop.xlane.xlu0 %2894
        %v2896 = vmul.f32 %v2892, %v2883
        %v2897 = vmul.f32 %v2895, %v2883
        %v2898 = vadd.f32 %v2896, 1e-05
        %v2899 = vadd.f32 %v2897, 1e-05
        %v2900 = vrsqrt.pop %v2898
        %v2901 = vrsqrt.pop %v2899
        %v2902 = vmul.f32 %v2886, %v2900
        %v2903 = vmul.f32 %v2887, %v2901
        %v2904 = vlaneseq
        %v2905 = vshrl.u32 %v2904, 7
        %v2906 = vsub.s32 2, %v2905
        %v2907 = vrot.slane %v556, %v2906
        %v2908 = vmul.f32 %v2902, %v2907
        %v2909 = vmul.f32 %v2903, %v2907
        %v2910 = vlaneseq
        %v2911 = vshrl.u32 %v2910, 7
        %v2912 = vsub.s32 3, %v2911
        %v2913 = vrot.slane %v556, %v2912
        %v2914 = vadd.f32 %v2908, %v2913
        %v2915 = vadd.f32 %v2909, %v2913
        %v2916 = vpack.c.bf16 %v2915, %v2914
        %v2917 = vld [vmem:[%s455] sm:$0xff]
        %v2918 = vld [vmem:[%s455 + $0x8] sm:$0xff]
        %v2919 = vld [vmem:[%s455 + $0x10] sm:$0xff]
        %v2920 = vld [vmem:[%s455 + $0x18] sm:$0xff]
        %v2921 = vld [vmem:[%s455 + $0x20] sm:$0xff]
        %v2922 = vld [vmem:[%s455 + $0x28] sm:$0xff]
        %v2923 = vld [vmem:[%s455 + $0x30] sm:$0xff]
        %v2924 = vld [vmem:[%s455 + $0x38] sm:$0xff]
        %v2925 = vld [vmem:[%s455 + $0x40] sm:$0xff]
        %v2926 = vld [vmem:[%s455 + $0x48] sm:$0xff]
        %v2927 = vld [vmem:[%s455 + $0x50] sm:$0xff]
        %v2928 = vld [vmem:[%s455 + $0x58] sm:$0xff]
        %v2929 = vld [vmem:[%s455 + $0x60] sm:$0xff]
        %v2930 = vld [vmem:[%s455 + $0x68] sm:$0xff]
        %v2931 = vld [vmem:[%s455 + $0x70] sm:$0xff]
        %v2932 = vld [vmem:[%s455 + $0x78] sm:$0xff]
        %v2933 = vld [vmem:[%s455 + $0x80] sm:$0xff]
        %v2934 = vld [vmem:[%s455 + $0x88] sm:$0xff]
        %v2935 = vld [vmem:[%s455 + $0x90] sm:$0xff]
        %v2936 = vld [vmem:[%s455 + $0x98] sm:$0xff]
        %v2937 = vld [vmem:[%s455 + $0xa0] sm:$0xff]
        %v2938 = vld [vmem:[%s455 + $0xa8] sm:$0xff]
        %v2939 = vld [vmem:[%s455 + $0xb0] sm:$0xff]
        %v2940 = vld [vmem:[%s455 + $0xb8] sm:$0xff]
        %v2941 = vld [vmem:[%s455 + $0xc0] sm:$0xff]
        %v2942 = vld [vmem:[%s455 + $0xc8] sm:$0xff]
        %v2943 = vld [vmem:[%s455 + $0xd0] sm:$0xff]
        %v2944 = vld [vmem:[%s455 + $0xd8] sm:$0xff]
        %v2945 = vld [vmem:[%s455 + $0xe0] sm:$0xff]
        %v2946 = vld [vmem:[%s455 + $0xe8] sm:$0xff]
        %v2947 = vld [vmem:[%s455 + $0xf0] sm:$0xff]
        %v2948 = vld [vmem:[%s455 + $0xf8] sm:$0xff]
        %v2949 = vld [vmem:[%s464] sm:$0xff]
        %v2950 = vld [vmem:[%s464 + $0x8] sm:$0xff]
        %v2953 = vlaneseq
        %v2954 = vshrl.u32 %v2953, 7
        %v2955 = vsub.s32 0, %v2954
        %v2956 = vrot.slane %v2949, %v2955
        %v2957 = vlaneseq
        %v2958 = vshrl.u32 %v2957, 7
        %v2959 = vsub.s32 1, %v2958
        %v2960 = vrot.slane %v2949, %v2959
        %v2961 = vlaneseq
        %v2962 = vshrl.u32 %v2961, 7
        %v2963 = vsub.s32 2, %v2962
        %v2964 = vrot.slane %v2949, %v2963
        %v2965 = vlaneseq
        %v2966 = vshrl.u32 %v2965, 7
        %v2967 = vsub.s32 3, %v2966
        %v2968 = vrot.slane %v2949, %v2967
        %v2969 = vlaneseq
        %v2970 = vshrl.u32 %v2969, 7
        %v2971 = vsub.s32 4, %v2970
        %v2972 = vrot.slane %v2949, %v2971
        %v2973 = vlaneseq
        %v2974 = vshrl.u32 %v2973, 7
        %v2975 = vsub.s32 5, %v2974
        %v2976 = vrot.slane %v2949, %v2975
        %v2977 = vlaneseq
        %v2978 = vshrl.u32 %v2977, 7
        %v2979 = vsub.s32 6, %v2978
        %v2980 = vrot.slane %v2949, %v2979
        %v2981 = vlaneseq
        %v2982 = vshrl.u32 %v2981, 7
        %v2983 = vsub.s32 7, %v2982
        %v2984 = vrot.slane %v2949, %v2983
        %v2985 = vlaneseq
        %v2986 = vshrl.u32 %v2985, 7
        %v2987 = vsub.s32 0, %v2986
        %v2988 = vrot.slane %v2950, %v2987
        %v2989 = vlaneseq
        %v2990 = vshrl.u32 %v2989, 7
        %v2991 = vsub.s32 1, %v2990
        %v2992 = vrot.slane %v2950, %v2991
        %v2993 = vlaneseq
        %v2994 = vshrl.u32 %v2993, 7
        %v2995 = vsub.s32 2, %v2994
        %v2996 = vrot.slane %v2950, %v2995
        %v2997 = vlaneseq
        %v2998 = vshrl.u32 %v2997, 7
        %v2999 = vsub.s32 3, %v2998
        %v3000 = vrot.slane %v2950, %v2999
        %v3001 = vlaneseq
        %v3002 = vshrl.u32 %v3001, 7
        %v3003 = vsub.s32 4, %v3002
        %v3004 = vrot.slane %v2950, %v3003
        %v3005 = vlaneseq
        %v3006 = vshrl.u32 %v3005, 7
        %v3007 = vsub.s32 5, %v3006
        %v3008 = vrot.slane %v2950, %v3007
        %v3009 = vlaneseq
        %v3010 = vshrl.u32 %v3009, 7
        %v3011 = vsub.s32 6, %v3010
        %v3012 = vrot.slane %v2950, %v3011
        %v3013 = vlaneseq
        %v3014 = vshrl.u32 %v3013, 7
        %v3015 = vsub.s32 7, %v3014
        %v3016 = vrot.slane %v2950, %v3015
        %v3065 = vunpack.c.l.b16 %v2917
        %v3066 = vunpack.c.h.b16 %v2917
        %v3067 = vunpack.c.l.b16 %v2918
        %v3068 = vunpack.c.h.b16 %v2918
        %v3069 = vunpack.c.l.b16 %v2919
        %v3070 = vunpack.c.h.b16 %v2919
        %v3071 = vunpack.c.l.b16 %v2920
        %v3072 = vunpack.c.h.b16 %v2920
        %v3073 = vunpack.c.l.b16 %v2921
        %v3074 = vunpack.c.h.b16 %v2921
        %v3075 = vunpack.c.l.b16 %v2922
        %v3076 = vunpack.c.h.b16 %v2922
        %v3077 = vunpack.c.l.b16 %v2923
        %v3078 = vunpack.c.h.b16 %v2923
        %v3079 = vunpack.c.l.b16 %v2924
        %v3080 = vunpack.c.h.b16 %v2924
        %v3081 = vunpack.c.l.b16 %v2925
        %v3082 = vunpack.c.h.b16 %v2925
        %v3083 = vunpack.c.l.b16 %v2926
        %v3084 = vunpack.c.h.b16 %v2926
        %v3085 = vunpack.c.l.b16 %v2927
        %v3086 = vunpack.c.h.b16 %v2927
        %v3087 = vunpack.c.l.b16 %v2928
        %v3088 = vunpack.c.h.b16 %v2928
        %v3089 = vunpack.c.l.b16 %v2929
        %v3090 = vunpack.c.h.b16 %v2929
        %v3091 = vunpack.c.l.b16 %v2930
        %v3092 = vunpack.c.h.b16 %v2930
        %v3093 = vunpack.c.l.b16 %v2931
        %v3094 = vunpack.c.h.b16 %v2931
        %v3095 = vunpack.c.l.b16 %v2932
        %v3096 = vunpack.c.h.b16 %v2932
        %v3097 = vunpack.c.l.b16 %v2933
        %v3098 = vunpack.c.h.b16 %v2933
        %v3099 = vunpack.c.l.b16 %v2934
        %v3100 = vunpack.c.h.b16 %v2934
        %v3101 = vunpack.c.l.b16 %v2935
        %v3102 = vunpack.c.h.b16 %v2935
        %v3103 = vunpack.c.l.b16 %v2936
        %v3104 = vunpack.c.h.b16 %v2936
        %v3105 = vunpack.c.l.b16 %v2937
        %v3106 = vunpack.c.h.b16 %v2937
        %v3107 = vunpack.c.l.b16 %v2938
        %v3108 = vunpack.c.h.b16 %v2938
        %v3109 = vunpack.c.l.b16 %v2939
        %v3110 = vunpack.c.h.b16 %v2939
        %v3111 = vunpack.c.l.b16 %v2940
        %v3112 = vunpack.c.h.b16 %v2940
        %v3113 = vunpack.c.l.b16 %v2941
        %v3114 = vunpack.c.h.b16 %v2941
        %v3115 = vunpack.c.l.b16 %v2942
        %v3116 = vunpack.c.h.b16 %v2942
        %v3117 = vunpack.c.l.b16 %v2943
        %v3118 = vunpack.c.h.b16 %v2943
        %v3119 = vunpack.c.l.b16 %v2944
        %v3120 = vunpack.c.h.b16 %v2944
        %v3121 = vunpack.c.l.b16 %v2945
        %v3122 = vunpack.c.h.b16 %v2945
        %v3123 = vunpack.c.l.b16 %v2946
        %v3124 = vunpack.c.h.b16 %v2946
        %v3125 = vunpack.c.l.b16 %v2947
        %v3126 = vunpack.c.h.b16 %v2947
        %v3127 = vunpack.c.l.b16 %v2948
        %v3128 = vunpack.c.h.b16 %v2948
        %v3129 = vpack.c.b16 %v3081, %v3065
        %v3130 = vpack.c.b16 %v3082, %v3066
        %v3131 = vpack.c.b16 %v3083, %v3067
        %v3132 = vpack.c.b16 %v3084, %v3068
        %v3133 = vpack.c.b16 %v3085, %v3069
        %v3134 = vpack.c.b16 %v3086, %v3070
        %v3135 = vpack.c.b16 %v3087, %v3071
        %v3136 = vpack.c.b16 %v3088, %v3072
        %v3137 = vpack.c.b16 %v3089, %v3073
        %v3138 = vpack.c.b16 %v3090, %v3074
        %v3139 = vpack.c.b16 %v3091, %v3075
        %v3140 = vpack.c.b16 %v3092, %v3076
        %v3141 = vpack.c.b16 %v3093, %v3077
        %v3142 = vpack.c.b16 %v3094, %v3078
        %v3143 = vpack.c.b16 %v3095, %v3079
        %v3144 = vpack.c.b16 %v3096, %v3080
        %v3145 = vpack.c.b16 %v3113, %v3097
        %v3146 = vpack.c.b16 %v3114, %v3098
        %v3147 = vpack.c.b16 %v3115, %v3099
        %v3148 = vpack.c.b16 %v3116, %v3100
        %v3149 = vpack.c.b16 %v3117, %v3101
        %v3150 = vpack.c.b16 %v3118, %v3102
        %v3151 = vpack.c.b16 %v3119, %v3103
        %v3152 = vpack.c.b16 %v3120, %v3104
        %v3153 = vpack.c.b16 %v3121, %v3105
        %v3154 = vpack.c.b16 %v3122, %v3106
        %v3155 = vpack.c.b16 %v3123, %v3107
        %v3156 = vpack.c.b16 %v3124, %v3108
        %v3157 = vpack.c.b16 %v3125, %v3109
        %v3158 = vpack.c.b16 %v3126, %v3110
        %v3159 = vpack.c.b16 %v3127, %v3111
        %v3160 = vpack.c.b16 %v3128, %v3112
        %v3194 = vsel %vm581, %v2916, 0
        %3196 = vmatprep.subr.bf16.mxu0 %v3130
        %3197 = vmatpush1.bf16.msra.mxu0 %v3129
        %3198 = vmatprep.subr.bf16.mxu0 %v3146
        %3199 = vmatpush1.bf16.msra.mxu0 %v3145
        %3200 = vmatprep.subr.bf16.mxu0 0
        %3201 = vmatpush1.bf16.msra.mxu0 0
        %3202 = vmatprep.subr.bf16.mxu0 0
        %3203 = vmatpush1.bf16.msra.mxu0 0
        %3204 = vmatprep.subr.bf16.mxu0 0
        %3205 = vmatpush1.bf16.msra.mxu0 0
        %3206 = vmatprep.subr.bf16.mxu0 0
        %3207 = vmatpush1.bf16.msra.mxu0 0
        %3208 = vmatprep.subr.bf16.mxu0 0
        %3209 = vmatpush1.bf16.msra.mxu0 0
        %3210 = vmatprep.subr.bf16.mxu0 0
        %3211 = vmatpush1.bf16.msra.mxu0 0
        %3212 = vmatprep.subr.bf16.mxu0 0
        %3213 = vmatpush1.bf16.msra.mxu0 0
        %3214 = vmatprep.subr.bf16.mxu0 0
        %3215 = vmatpush1.bf16.msra.mxu0 0
        %3216 = vmatprep.subr.bf16.mxu0 0
        %3217 = vmatpush1.bf16.msra.mxu0 0
        %3218 = vmatprep.subr.bf16.mxu0 0
        %3219 = vmatpush1.bf16.msra.mxu0 0
        %3220 = vmatprep.subr.bf16.mxu0 0
        %3221 = vmatpush1.bf16.msra.mxu0 0
        %3222 = vmatprep.subr.bf16.mxu0 0
        %3223 = vmatpush1.bf16.msra.mxu0 0
        %3224 = vmatprep.subr.bf16.mxu0 0
        %3225 = vmatpush1.bf16.msra.mxu0 0
        %3226 = vmatprep.subr.bf16.mxu0 0
        %3227 = vmatpush1.bf16.msra.mxu0 0
        %3228 = vmatprep.mubr.bf16.mxu0 0
        %3229 = vmatmul.mubr.bf16.gmra.mrb[0].mxu0 %v3194
        %v3230 = vpop.f32.mrb[0].mxu0
        %v3231 = vadd.f32 %v2956, %v3230
        %v3232 = vpop.f32.mrb[0].mxu0
        %v3233 = vadd.f32 %v2960, %v3232
        %v3234 = vpop.f32.mrb[0].mxu0
        %v3235 = vadd.f32 %v2956, %v3234
        %v3236 = vpop.f32.mrb[0].mxu0
        %v3237 = vadd.f32 %v2960, %v3236
        %3238 = vdwg.mxu0
        %3239 = vmatprep.subr.bf16.mxu0 %v3132
        %3240 = vmatpush1.bf16.msra.mxu0 %v3131
        %3241 = vmatprep.subr.bf16.mxu0 %v3148
        %3242 = vmatpush1.bf16.msra.mxu0 %v3147
        %3243 = vmatprep.subr.bf16.mxu0 0
        %3244 = vmatpush1.bf16.msra.mxu0 0
        %3245 = vmatprep.subr.bf16.mxu0 0
        %3246 = vmatpush1.bf16.msra.mxu0 0
        %3247 = vmatprep.subr.bf16.mxu0 0
        %3248 = vmatpush1.bf16.msra.mxu0 0
        %3249 = vmatprep.subr.bf16.mxu0 0
        %3250 = vmatpush1.bf16.msra.mxu0 0
        %3251 = vmatprep.subr.bf16.mxu0 0
        %3252 = vmatpush1.bf16.msra.mxu0 0
        %3253 = vmatprep.subr.bf16.mxu0 0
        %3254 = vmatpush1.bf16.msra.mxu0 0
        %3255 = vmatprep.subr.bf16.mxu0 0
        %3256 = vmatpush1.bf16.msra.mxu0 0
        %3257 = vmatprep.subr.bf16.mxu0 0
        %3258 = vmatpush1.bf16.msra.mxu0 0
        %3259 = vmatprep.subr.bf16.mxu0 0
        %3260 = vmatpush1.bf16.msra.mxu0 0
        %3261 = vmatprep.subr.bf16.mxu0 0
        %3262 = vmatpush1.bf16.msra.mxu0 0
        %3263 = vmatprep.subr.bf16.mxu0 0
        %3264 = vmatpush1.bf16.msra.mxu0 0
        %3265 = vmatprep.subr.bf16.mxu0 0
        %3266 = vmatpush1.bf16.msra.mxu0 0
        %3267 = vmatprep.subr.bf16.mxu0 0
        %3268 = vmatpush1.bf16.msra.mxu0 0
        %3269 = vmatprep.subr.bf16.mxu0 0
        %3270 = vmatpush1.bf16.msra.mxu0 0
        %3271 = vmatprep.mubr.bf16.mxu0 0
        %3272 = vmatmul.mubr.bf16.gmra.mrb[0].mxu0 %v3194
        %v3273 = vpop.f32.mrb[0].mxu0
        %v3274 = vadd.f32 %v2964, %v3273
        %v3275 = vpop.f32.mrb[0].mxu0
        %v3276 = vadd.f32 %v2968, %v3275
        %v3277 = vpop.f32.mrb[0].mxu0
        %v3278 = vadd.f32 %v2964, %v3277
        %v3279 = vpop.f32.mrb[0].mxu0
        %v3280 = vadd.f32 %v2968, %v3279
        %3281 = vdwg.mxu0
        %3282 = vmatprep.subr.bf16.mxu0 %v3134
        %3283 = vmatpush1.bf16.msra.mxu0 %v3133
        %3284 = vmatprep.subr.bf16.mxu0 %v3150
        %3285 = vmatpush1.bf16.msra.mxu0 %v3149
        %3286 = vmatprep.subr.bf16.mxu0 0
        %3287 = vmatpush1.bf16.msra.mxu0 0
        %3288 = vmatprep.subr.bf16.mxu0 0
        %3289 = vmatpush1.bf16.msra.mxu0 0
        %3290 = vmatprep.subr.bf16.mxu0 0
        %3291 = vmatpush1.bf16.msra.mxu0 0
        %3292 = vmatprep.subr.bf16.mxu0 0
        %3293 = vmatpush1.bf16.msra.mxu0 0
        %3294 = vmatprep.subr.bf16.mxu0 0
        %3295 = vmatpush1.bf16.msra.mxu0 0
        %3296 = vmatprep.subr.bf16.mxu0 0
        %3297 = vmatpush1.bf16.msra.mxu0 0
        %3298 = vmatprep.subr.bf16.mxu0 0
        %3299 = vmatpush1.bf16.msra.mxu0 0
        %3300 = vmatprep.subr.bf16.mxu0 0
        %3301 = vmatpush1.bf16.msra.mxu0 0
        %3302 = vmatprep.subr.bf16.mxu0 0
        %3303 = vmatpush1.bf16.msra.mxu0 0
        %3304 = vmatprep.subr.bf16.mxu0 0
        %3305 = vmatpush1.bf16.msra.mxu0 0
        %3306 = vmatprep.subr.bf16.mxu0 0
        %3307 = vmatpush1.bf16.msra.mxu0 0
        %3308 = vmatprep.subr.bf16.mxu0 0
        %3309 = vmatpush1.bf16.msra.mxu0 0
        %3310 = vmatprep.subr.bf16.mxu0 0
        %3311 = vmatpush1.bf16.msra.mxu0 0
        %3312 = vmatprep.subr.bf16.mxu0 0
        %3313 = vmatpush1.bf16.msra.mxu0 0
        %3314 = vmatprep.mubr.bf16.mxu0 0
        %3315 = vmatmul.mubr.bf16.gmra.mrb[0].mxu0 %v3194
        %v3316 = vpop.f32.mrb[0].mxu0
        %v3317 = vadd.f32 %v2972, %v3316
        %v3318 = vpop.f32.mrb[0].mxu0
        %v3319 = vadd.f32 %v2976, %v3318
        %v3320 = vpop.f32.mrb[0].mxu0
        %v3321 = vadd.f32 %v2972, %v3320
        %v3322 = vpop.f32.mrb[0].mxu0
        %v3323 = vadd.f32 %v2976, %v3322
        %3324 = vdwg.mxu0
        %3325 = vmatprep.subr.bf16.mxu0 %v3136
        %3326 = vmatpush1.bf16.msra.mxu0 %v3135
        %3327 = vmatprep.subr.bf16.mxu0 %v3152
        %3328 = vmatpush1.bf16.msra.mxu0 %v3151
        %3329 = vmatprep.subr.bf16.mxu0 0
        %3330 = vmatpush1.bf16.msra.mxu0 0
        %3331 = vmatprep.subr.bf16.mxu0 0
        %3332 = vmatpush1.bf16.msra.mxu0 0
        %3333 = vmatprep.subr.bf16.mxu0 0
        %3334 = vmatpush1.bf16.msra.mxu0 0
        %3335 = vmatprep.subr.bf16.mxu0 0
        %3336 = vmatpush1.bf16.msra.mxu0 0
        %3337 = vmatprep.subr.bf16.mxu0 0
        %3338 = vmatpush1.bf16.msra.mxu0 0
        %3339 = vmatprep.subr.bf16.mxu0 0
        %3340 = vmatpush1.bf16.msra.mxu0 0
        %3341 = vmatprep.subr.bf16.mxu0 0
        %3342 = vmatpush1.bf16.msra.mxu0 0
        %3343 = vmatprep.subr.bf16.mxu0 0
        %3344 = vmatpush1.bf16.msra.mxu0 0
        %3345 = vmatprep.subr.bf16.mxu0 0
        %3346 = vmatpush1.bf16.msra.mxu0 0
        %3347 = vmatprep.subr.bf16.mxu0 0
        %3348 = vmatpush1.bf16.msra.mxu0 0
        %3349 = vmatprep.subr.bf16.mxu0 0
        %3350 = vmatpush1.bf16.msra.mxu0 0
        %3351 = vmatprep.subr.bf16.mxu0 0
        %3352 = vmatpush1.bf16.msra.mxu0 0
        %3353 = vmatprep.subr.bf16.mxu0 0
        %3354 = vmatpush1.bf16.msra.mxu0 0
        %3355 = vmatprep.subr.bf16.mxu0 0
        %3356 = vmatpush1.bf16.msra.mxu0 0
        %3357 = vmatprep.mubr.bf16.mxu0 0
        %3358 = vmatmul.mubr.bf16.gmra.mrb[0].mxu0 %v3194
        %v3359 = vpop.f32.mrb[0].mxu0
        %v3360 = vadd.f32 %v2980, %v3359
        %v3361 = vpop.f32.mrb[0].mxu0
        %v3362 = vadd.f32 %v2984, %v3361
        %v3363 = vpop.f32.mrb[0].mxu0
        %v3364 = vadd.f32 %v2980, %v3363
        %v3365 = vpop.f32.mrb[0].mxu0
        %v3366 = vadd.f32 %v2984, %v3365
        %3367 = vdwg.mxu0
        %3368 = vmatprep.subr.bf16.mxu0 %v3138
        %3369 = vmatpush1.bf16.msra.mxu0 %v3137
        %3370 = vmatprep.subr.bf16.mxu0 %v3154
        %3371 = vmatpush1.bf16.msra.mxu0 %v3153
        %3372 = vmatprep.subr.bf16.mxu0 0
        %3373 = vmatpush1.bf16.msra.mxu0 0
        %3374 = vmatprep.subr.bf16.mxu0 0
        %3375 = vmatpush1.bf16.msra.mxu0 0
        %3376 = vmatprep.subr.bf16.mxu0 0
        %3377 = vmatpush1.bf16.msra.mxu0 0
        %3378 = vmatprep.subr.bf16.mxu0 0
        %3379 = vmatpush1.bf16.msra.mxu0 0
        %3380 = vmatprep.subr.bf16.mxu0 0
        %3381 = vmatpush1.bf16.msra.mxu0 0
        %3382 = vmatprep.subr.bf16.mxu0 0
        %3383 = vmatpush1.bf16.msra.mxu0 0
        %3384 = vmatprep.subr.bf16.mxu0 0
        %3385 = vmatpush1.bf16.msra.mxu0 0
        %3386 = vmatprep.subr.bf16.mxu0 0
        %3387 = vmatpush1.bf16.msra.mxu0 0
        %3388 = vmatprep.subr.bf16.mxu0 0
        %3389 = vmatpush1.bf16.msra.mxu0 0
        %3390 = vmatprep.subr.bf16.mxu0 0
        %3391 = vmatpush1.bf16.msra.mxu0 0
        %3392 = vmatprep.subr.bf16.mxu0 0
        %3393 = vmatpush1.bf16.msra.mxu0 0
        %3394 = vmatprep.subr.bf16.mxu0 0
        %3395 = vmatpush1.bf16.msra.mxu0 0
        %3396 = vmatprep.subr.bf16.mxu0 0
        %3397 = vmatpush1.bf16.msra.mxu0 0
        %3398 = vmatprep.subr.bf16.mxu0 0
        %3399 = vmatpush1.bf16.msra.mxu0 0
        %3400 = vmatprep.mubr.bf16.mxu0 0
        %3401 = vmatmul.mubr.bf16.gmra.mrb[0].mxu0 %v3194
        %v3402 = vpop.f32.mrb[0].mxu0
        %v3403 = vadd.f32 %v2988, %v3402
        %v3404 = vpop.f32.mrb[0].mxu0
        %v3405 = vadd.f32 %v2992, %v3404
        %v3406 = vpop.f32.mrb[0].mxu0
        %v3407 = vadd.f32 %v2988, %v3406
        %v3408 = vpop.f32.mrb[0].mxu0
        %v3409 = vadd.f32 %v2992, %v3408
        %3410 = vdwg.mxu0
        %3411 = vmatprep.subr.bf16.mxu0 %v3140
        %3412 = vmatpush1.bf16.msra.mxu0 %v3139
        %3413 = vmatprep.subr.bf16.mxu0 %v3156
        %3414 = vmatpush1.bf16.msra.mxu0 %v3155
        %3415 = vmatprep.subr.bf16.mxu0 0
        %3416 = vmatpush1.bf16.msra.mxu0 0
        %3417 = vmatprep.subr.bf16.mxu0 0
        %3418 = vmatpush1.bf16.msra.mxu0 0
        %3419 = vmatprep.subr.bf16.mxu0 0
        %3420 = vmatpush1.bf16.msra.mxu0 0
        %3421 = vmatprep.subr.bf16.mxu0 0
        %3422 = vmatpush1.bf16.msra.mxu0 0
        %3423 = vmatprep.subr.bf16.mxu0 0
        %3424 = vmatpush1.bf16.msra.mxu0 0
        %3425 = vmatprep.subr.bf16.mxu0 0
        %3426 = vmatpush1.bf16.msra.mxu0 0
        %3427 = vmatprep.subr.bf16.mxu0 0
        %3428 = vmatpush1.bf16.msra.mxu0 0
        %3429 = vmatprep.subr.bf16.mxu0 0
        %3430 = vmatpush1.bf16.msra.mxu0 0
        %3431 = vmatprep.subr.bf16.mxu0 0
        %3432 = vmatpush1.bf16.msra.mxu0 0
        %3433 = vmatprep.subr.bf16.mxu0 0
        %3434 = vmatpush1.bf16.msra.mxu0 0
        %3435 = vmatprep.subr.bf16.mxu0 0
        %3436 = vmatpush1.bf16.msra.mxu0 0
        %3437 = vmatprep.subr.bf16.mxu0 0
        %3438 = vmatpush1.bf16.msra.mxu0 0
        %3439 = vmatprep.subr.bf16.mxu0 0
        %3440 = vmatpush1.bf16.msra.mxu0 0
        %3441 = vmatprep.subr.bf16.mxu0 0
        %3442 = vmatpush1.bf16.msra.mxu0 0
        %3443 = vmatprep.mubr.bf16.mxu0 0
        %3444 = vmatmul.mubr.bf16.gmra.mrb[0].mxu0 %v3194
        %v3445 = vpop.f32.mrb[0].mxu0
        %v3446 = vadd.f32 %v2996, %v3445
        %v3447 = vpop.f32.mrb[0].mxu0
        %v3448 = vadd.f32 %v3000, %v3447
        %v3449 = vpop.f32.mrb[0].mxu0
        %v3450 = vadd.f32 %v2996, %v3449
        %v3451 = vpop.f32.mrb[0].mxu0
        %v3452 = vadd.f32 %v3000, %v3451
        %3453 = vdwg.mxu0
        %3454 = vmatprep.subr.bf16.mxu0 %v3142
        %3455 = vmatpush1.bf16.msra.mxu0 %v3141
        %3456 = vmatprep.subr.bf16.mxu0 %v3158
        %3457 = vmatpush1.bf16.msra.mxu0 %v3157
        %3458 = vmatprep.subr.bf16.mxu0 0
        %3459 = vmatpush1.bf16.msra.mxu0 0
        %3460 = vmatprep.subr.bf16.mxu0 0
        %3461 = vmatpush1.bf16.msra.mxu0 0
        %3462 = vmatprep.subr.bf16.mxu0 0
        %3463 = vmatpush1.bf16.msra.mxu0 0
        %3464 = vmatprep.subr.bf16.mxu0 0
        %3465 = vmatpush1.bf16.msra.mxu0 0
        %3466 = vmatprep.subr.bf16.mxu0 0
        %3467 = vmatpush1.bf16.msra.mxu0 0
        %3468 = vmatprep.subr.bf16.mxu0 0
        %3469 = vmatpush1.bf16.msra.mxu0 0
        %3470 = vmatprep.subr.bf16.mxu0 0
        %3471 = vmatpush1.bf16.msra.mxu0 0
        %3472 = vmatprep.subr.bf16.mxu0 0
        %3473 = vmatpush1.bf16.msra.mxu0 0
        %3474 = vmatprep.subr.bf16.mxu0 0
        %3475 = vmatpush1.bf16.msra.mxu0 0
        %3476 = vmatprep.subr.bf16.mxu0 0
        %3477 = vmatpush1.bf16.msra.mxu0 0
        %3478 = vmatprep.subr.bf16.mxu0 0
        %3479 = vmatpush1.bf16.msra.mxu0 0
        %3480 = vmatprep.subr.bf16.mxu0 0
        %3481 = vmatpush1.bf16.msra.mxu0 0
        %3482 = vmatprep.subr.bf16.mxu0 0
        %3483 = vmatpush1.bf16.msra.mxu0 0
        %3484 = vmatprep.subr.bf16.mxu0 0
        %3485 = vmatpush1.bf16.msra.mxu0 0
        %3486 = vmatprep.mubr.bf16.mxu0 0
        %3487 = vmatmul.mubr.bf16.gmra.mrb[0].mxu0 %v3194
        %v3488 = vpop.f32.mrb[0].mxu0
        %v3489 = vadd.f32 %v3004, %v3488
        %v3490 = vpop.f32.mrb[0].mxu0
        %v3491 = vadd.f32 %v3008, %v3490
        %v3492 = vpop.f32.mrb[0].mxu0
        %v3493 = vadd.f32 %v3004, %v3492
        %v3494 = vpop.f32.mrb[0].mxu0
        %v3495 = vadd.f32 %v3008, %v3494
        %3496 = vdwg.mxu0
        %3497 = vmatprep.subr.bf16.mxu0 %v3144
        %3498 = vmatpush1.bf16.msra.mxu0 %v3143
        %3499 = vmatprep.subr.bf16.mxu0 %v3160
        %3500 = vmatpush1.bf16.msra.mxu0 %v3159
        %3501 = vmatprep.subr.bf16.mxu0 0
        %3502 = vmatpush1.bf16.msra.mxu0 0
        %3503 = vmatprep.subr.bf16.mxu0 0
        %3504 = vmatpush1.bf16.msra.mxu0 0
        %3505 = vmatprep.subr.bf16.mxu0 0
        %3506 = vmatpush1.bf16.msra.mxu0 0
        %3507 = vmatprep.subr.bf16.mxu0 0
        %3508 = vmatpush1.bf16.msra.mxu0 0
        %3509 = vmatprep.subr.bf16.mxu0 0
        %3510 = vmatpush1.bf16.msra.mxu0 0
        %3511 = vmatprep.subr.bf16.mxu0 0
        %3512 = vmatpush1.bf16.msra.mxu0 0
        %3513 = vmatprep.subr.bf16.mxu0 0
        %3514 = vmatpush1.bf16.msra.mxu0 0
        %3515 = vmatprep.subr.bf16.mxu0 0
        %3516 = vmatpush1.bf16.msra.mxu0 0
        %3517 = vmatprep.subr.bf16.mxu0 0
        %3518 = vmatpush1.bf16.msra.mxu0 0
        %3519 = vmatprep.subr.bf16.mxu0 0
        %3520 = vmatpush1.bf16.msra.mxu0 0
        %3521 = vmatprep.subr.bf16.mxu0 0
        %3522 = vmatpush1.bf16.msra.mxu0 0
        %3523 = vmatprep.subr.bf16.mxu0 0
        %3524 = vmatpush1.bf16.msra.mxu0 0
        %3525 = vmatprep.subr.bf16.mxu0 0
        %3526 = vmatpush1.bf16.msra.mxu0 0
        %3527 = vmatprep.subr.bf16.mxu0 0
        %3528 = vmatpush1.bf16.msra.mxu0 0
        %3529 = vmatprep.mubr.bf16.mxu0 0
        %3530 = vmatmul.mubr.bf16.gmra.mrb[0].mxu0 %v3194
        %v3531 = vpop.f32.mrb[0].mxu0
        %v3532 = vadd.f32 %v3012, %v3531
        %v3533 = vpop.f32.mrb[0].mxu0
        %v3534 = vadd.f32 %v3016, %v3533
        %v3535 = vpop.f32.mrb[0].mxu0
        %v3536 = vadd.f32 %v3012, %v3535
        %v3537 = vpop.f32.mrb[0].mxu0
        %v3538 = vadd.f32 %v3016, %v3537
        %3539 = vdwg.mxu0
        %v3540 = vmax.f32 %v3231, 0.0
        %v3541 = vmax.f32 %v3233, 0.0
        %v3542 = vmax.f32 %v3274, 0.0
        %v3543 = vmax.f32 %v3276, 0.0
        %v3544 = vmax.f32 %v3317, 0.0
        %v3545 = vmax.f32 %v3319, 0.0
        %v3546 = vmax.f32 %v3360, 0.0
        %v3547 = vmax.f32 %v3362, 0.0
        %v3548 = vmax.f32 %v3403, 0.0
        %v3549 = vmax.f32 %v3405, 0.0
        %v3550 = vmax.f32 %v3446, 0.0
        %v3551 = vmax.f32 %v3448, 0.0
        %v3552 = vmax.f32 %v3489, 0.0
        %v3553 = vmax.f32 %v3491, 0.0
        %v3554 = vmax.f32 %v3532, 0.0
        %v3555 = vmax.f32 %v3534, 0.0
        %v3556 = vmax.f32 %v3235, 0.0
        %v3557 = vmax.f32 %v3237, 0.0
        %v3558 = vmax.f32 %v3278, 0.0
        %v3559 = vmax.f32 %v3280, 0.0
        %v3560 = vmax.f32 %v3321, 0.0
        %v3561 = vmax.f32 %v3323, 0.0
        %v3562 = vmax.f32 %v3364, 0.0
        %v3563 = vmax.f32 %v3366, 0.0
        %v3564 = vmax.f32 %v3407, 0.0
        %v3565 = vmax.f32 %v3409, 0.0
        %v3566 = vmax.f32 %v3450, 0.0
        %v3567 = vmax.f32 %v3452, 0.0
        %v3568 = vmax.f32 %v3493, 0.0
        %v3569 = vmax.f32 %v3495, 0.0
        %v3570 = vmax.f32 %v3536, 0.0
        %v3571 = vmax.f32 %v3538, 0.0
        %v3572 = vpack.c.bf16 %v3556, %v3540
        %v3573 = vpack.c.bf16 %v3557, %v3541
        %v3574 = vpack.c.bf16 %v3558, %v3542
        %v3575 = vpack.c.bf16 %v3559, %v3543
        %v3576 = vpack.c.bf16 %v3560, %v3544
        %v3577 = vpack.c.bf16 %v3561, %v3545
        %v3578 = vpack.c.bf16 %v3562, %v3546
        %v3579 = vpack.c.bf16 %v3563, %v3547
        %v3580 = vpack.c.bf16 %v3564, %v3548
        %v3581 = vpack.c.bf16 %v3565, %v3549
        %v3582 = vpack.c.bf16 %v3566, %v3550
        %v3583 = vpack.c.bf16 %v3567, %v3551
        %v3584 = vpack.c.bf16 %v3568, %v3552
        %v3585 = vpack.c.bf16 %v3569, %v3553
        %v3586 = vpack.c.bf16 %v3570, %v3554
        %v3587 = vpack.c.bf16 %v3571, %v3555
        %v3588 = vld [vmem:[%s473] sm:$0xff]
        %v3589 = vld [vmem:[%s473 + $0x8] sm:$0xff]
        %v3590 = vld [vmem:[%s473 + $0x10] sm:$0xff]
        %v3591 = vld [vmem:[%s473 + $0x18] sm:$0xff]
        %v3592 = vld [vmem:[%s473 + $0x20] sm:$0xff]
        %v3593 = vld [vmem:[%s473 + $0x28] sm:$0xff]
        %v3594 = vld [vmem:[%s473 + $0x30] sm:$0xff]
        %v3595 = vld [vmem:[%s473 + $0x38] sm:$0xff]
        %v3596 = vld [vmem:[%s473 + $0x40] sm:$0xff]
        %v3597 = vld [vmem:[%s473 + $0x48] sm:$0xff]
        %v3598 = vld [vmem:[%s473 + $0x50] sm:$0xff]
        %v3599 = vld [vmem:[%s473 + $0x58] sm:$0xff]
        %v3600 = vld [vmem:[%s473 + $0x60] sm:$0xff]
        %v3601 = vld [vmem:[%s473 + $0x68] sm:$0xff]
        %v3602 = vld [vmem:[%s473 + $0x70] sm:$0xff]
        %v3603 = vld [vmem:[%s473 + $0x78] sm:$0xff]
        %v3604 = vld [vmem:[%s473 + $0x80] sm:$0xff]
        %v3605 = vld [vmem:[%s473 + $0x88] sm:$0xff]
        %v3606 = vld [vmem:[%s473 + $0x90] sm:$0xff]
        %v3607 = vld [vmem:[%s473 + $0x98] sm:$0xff]
        %v3608 = vld [vmem:[%s473 + $0xa0] sm:$0xff]
        %v3609 = vld [vmem:[%s473 + $0xa8] sm:$0xff]
        %v3610 = vld [vmem:[%s473 + $0xb0] sm:$0xff]
        %v3611 = vld [vmem:[%s473 + $0xb8] sm:$0xff]
        %v3612 = vld [vmem:[%s473 + $0xc0] sm:$0xff]
        %v3613 = vld [vmem:[%s473 + $0xc8] sm:$0xff]
        %v3614 = vld [vmem:[%s473 + $0xd0] sm:$0xff]
        %v3615 = vld [vmem:[%s473 + $0xd8] sm:$0xff]
        %v3616 = vld [vmem:[%s473 + $0xe0] sm:$0xff]
        %v3617 = vld [vmem:[%s473 + $0xe8] sm:$0xff]
        %v3618 = vld [vmem:[%s473 + $0xf0] sm:$0xff]
        %v3619 = vld [vmem:[%s473 + $0xf8] sm:$0xff]
        %v3620 = vlaneseq
        %v3621 = vshrl.u32 %v3620, 7
        %v3622 = vsub.s32 1, %v3621
        %v3623 = vrot.slane %v556, %v3622
        %v3656 = vunpack.c.l.b16 %v3588
        %v3657 = vunpack.c.h.b16 %v3588
        %v3658 = vunpack.c.l.b16 %v3589
        %v3659 = vunpack.c.h.b16 %v3589
        %v3660 = vunpack.c.l.b16 %v3590
        %v3661 = vunpack.c.h.b16 %v3590
        %v3662 = vunpack.c.l.b16 %v3591
        %v3663 = vunpack.c.h.b16 %v3591
        %v3664 = vunpack.c.l.b16 %v3592
        %v3665 = vunpack.c.h.b16 %v3592
        %v3666 = vunpack.c.l.b16 %v3593
        %v3667 = vunpack.c.h.b16 %v3593
        %v3668 = vunpack.c.l.b16 %v3594
        %v3669 = vunpack.c.h.b16 %v3594
        %v3670 = vunpack.c.l.b16 %v3595
        %v3671 = vunpack.c.h.b16 %v3595
        %v3672 = vunpack.c.l.b16 %v3596
        %v3673 = vunpack.c.h.b16 %v3596
        %v3674 = vunpack.c.l.b16 %v3597
        %v3675 = vunpack.c.h.b16 %v3597
        %v3676 = vunpack.c.l.b16 %v3598
        %v3677 = vunpack.c.h.b16 %v3598
        %v3678 = vunpack.c.l.b16 %v3599
        %v3679 = vunpack.c.h.b16 %v3599
        %v3680 = vunpack.c.l.b16 %v3600
        %v3681 = vunpack.c.h.b16 %v3600
        %v3682 = vunpack.c.l.b16 %v3601
        %v3683 = vunpack.c.h.b16 %v3601
        %v3684 = vunpack.c.l.b16 %v3602
        %v3685 = vunpack.c.h.b16 %v3602
        %v3686 = vunpack.c.l.b16 %v3603
        %v3687 = vunpack.c.h.b16 %v3603
        %v3688 = vunpack.c.l.b16 %v3604
        %v3689 = vunpack.c.h.b16 %v3604
        %v3690 = vunpack.c.l.b16 %v3605
        %v3691 = vunpack.c.h.b16 %v3605
        %v3692 = vunpack.c.l.b16 %v3606
        %v3693 = vunpack.c.h.b16 %v3606
        %v3694 = vunpack.c.l.b16 %v3607
        %v3695 = vunpack.c.h.b16 %v3607
        %v3696 = vunpack.c.l.b16 %v3608
        %v3697 = vunpack.c.h.b16 %v3608
        %v3698 = vunpack.c.l.b16 %v3609
        %v3699 = vunpack.c.h.b16 %v3609
        %v3700 = vunpack.c.l.b16 %v3610
        %v3701 = vunpack.c.h.b16 %v3610
        %v3702 = vunpack.c.l.b16 %v3611
        %v3703 = vunpack.c.h.b16 %v3611
        %v3704 = vunpack.c.l.b16 %v3612
        %v3705 = vunpack.c.h.b16 %v3612
        %v3706 = vunpack.c.l.b16 %v3613
        %v3707 = vunpack.c.h.b16 %v3613
        %v3708 = vunpack.c.l.b16 %v3614
        %v3709 = vunpack.c.h.b16 %v3614
        %v3710 = vunpack.c.l.b16 %v3615
        %v3711 = vunpack.c.h.b16 %v3615
        %v3712 = vunpack.c.l.b16 %v3616
        %v3713 = vunpack.c.h.b16 %v3616
        %v3714 = vunpack.c.l.b16 %v3617
        %v3715 = vunpack.c.h.b16 %v3617
        %v3716 = vunpack.c.l.b16 %v3618
        %v3717 = vunpack.c.h.b16 %v3618
        %v3718 = vunpack.c.l.b16 %v3619
        %v3719 = vunpack.c.h.b16 %v3619
        %v3720 = vpack.c.b16 %v3672, %v3656
        %v3721 = vpack.c.b16 %v3673, %v3657
        %v3722 = vpack.c.b16 %v3674, %v3658
        %v3723 = vpack.c.b16 %v3675, %v3659
        %v3724 = vpack.c.b16 %v3676, %v3660
        %v3725 = vpack.c.b16 %v3677, %v3661
        %v3726 = vpack.c.b16 %v3678, %v3662
        %v3727 = vpack.c.b16 %v3679, %v3663
        %v3728 = vpack.c.b16 %v3680, %v3664
        %v3729 = vpack.c.b16 %v3681, %v3665
        %v3730 = vpack.c.b16 %v3682, %v3666
        %v3731 = vpack.c.b16 %v3683, %v3667
        %v3732 = vpack.c.b16 %v3684, %v3668
        %v3733 = vpack.c.b16 %v3685, %v3669
        %v3734 = vpack.c.b16 %v3686, %v3670
        %v3735 = vpack.c.b16 %v3687, %v3671
        %v3736 = vpack.c.b16 %v3704, %v3688
        %v3737 = vpack.c.b16 %v3705, %v3689
        %v3738 = vpack.c.b16 %v3706, %v3690
        %v3739 = vpack.c.b16 %v3707, %v3691
        %v3740 = vpack.c.b16 %v3708, %v3692
        %v3741 = vpack.c.b16 %v3709, %v3693
        %v3742 = vpack.c.b16 %v3710, %v3694
        %v3743 = vpack.c.b16 %v3711, %v3695
        %v3744 = vpack.c.b16 %v3712, %v3696
        %v3745 = vpack.c.b16 %v3713, %v3697
        %v3746 = vpack.c.b16 %v3714, %v3698
        %v3747 = vpack.c.b16 %v3715, %v3699
        %v3748 = vpack.c.b16 %v3716, %v3700
        %v3749 = vpack.c.b16 %v3717, %v3701
        %v3750 = vpack.c.b16 %v3718, %v3702
        %v3751 = vpack.c.b16 %v3719, %v3703
        %3784 = vmatprep.subr.bf16.mxu0 %v3721
        %3785 = vmatpush1.bf16.xpose.msra.mxu0 %v3720
        %3786 = vmatprep.subr.bf16.mxu0 %v3737
        %3787 = vmatpush1.bf16.xpose.msra.mxu0 %v3736
        %3788 = vmatprep.subr.bf16.mxu0 0
        %3789 = vmatpush1.bf16.xpose.msra.mxu0 0
        %3790 = vmatprep.subr.bf16.mxu0 0
        %3791 = vmatpush1.bf16.xpose.msra.mxu0 0
        %3792 = vmatprep.subr.bf16.mxu0 0
        %3793 = vmatpush1.bf16.xpose.msra.mxu0 0
        %3794 = vmatprep.subr.bf16.mxu0 0
        %3795 = vmatpush1.bf16.xpose.msra.mxu0 0
        %3796 = vmatprep.subr.bf16.mxu0 0
        %3797 = vmatpush1.bf16.xpose.msra.mxu0 0
        %3798 = vmatprep.subr.bf16.mxu0 0
        %3799 = vmatpush1.bf16.xpose.msra.mxu0 0
        %3800 = vmatprep.subr.bf16.mxu0 0
        %3801 = vmatpush1.bf16.xpose.msra.mxu0 0
        %3802 = vmatprep.subr.bf16.mxu0 0
        %3803 = vmatpush1.bf16.xpose.msra.mxu0 0
        %3804 = vmatprep.subr.bf16.mxu0 0
        %3805 = vmatpush1.bf16.xpose.msra.mxu0 0
        %3806 = vmatprep.subr.bf16.mxu0 0
        %3807 = vmatpush1.bf16.xpose.msra.mxu0 0
        %3808 = vmatprep.subr.bf16.mxu0 0
        %3809 = vmatpush1.bf16.xpose.msra.mxu0 0
        %3810 = vmatprep.subr.bf16.mxu0 0
        %3811 = vmatpush1.bf16.xpose.msra.mxu0 0
        %3812 = vmatprep.subr.bf16.mxu0 0
        %3813 = vmatpush1.bf16.xpose.msra.mxu0 0
        %3814 = vmatprep.subr.bf16.mxu0 0
        %3815 = vmatpush1.bf16.xpose.msra.mxu0 0
        %3816 = vmatprep.mubr.bf16.mxu0 %v3573
        %3817 = vmatmul.mubr.bf16.gmra.mrb[0].mxu0 %v3572
        %v3818 = vpop.f32.mrb[0].mxu0
        %v3819 = vadd.f32 %v3623, %v3818
        %v3820 = vpop.f32.mrb[0].mxu0
        %v3821 = vpop.f32.mrb[0].mxu0
        %v3822 = vadd.f32 %v3623, %v3821
        %v3823 = vpop.f32.mrb[0].mxu0
        %3824 = vdwg.mxu0
        %3825 = vmatprep.subr.bf16.mxu0 %v3723
        %3826 = vmatpush1.bf16.xpose.msra.mxu0 %v3722
        %3827 = vmatprep.subr.bf16.mxu0 %v3739
        %3828 = vmatpush1.bf16.xpose.msra.mxu0 %v3738
        %3829 = vmatprep.subr.bf16.mxu0 0
        %3830 = vmatpush1.bf16.xpose.msra.mxu0 0
        %3831 = vmatprep.subr.bf16.mxu0 0
        %3832 = vmatpush1.bf16.xpose.msra.mxu0 0
        %3833 = vmatprep.subr.bf16.mxu0 0
        %3834 = vmatpush1.bf16.xpose.msra.mxu0 0
        %3835 = vmatprep.subr.bf16.mxu0 0
        %3836 = vmatpush1.bf16.xpose.msra.mxu0 0
        %3837 = vmatprep.subr.bf16.mxu0 0
        %3838 = vmatpush1.bf16.xpose.msra.mxu0 0
        %3839 = vmatprep.subr.bf16.mxu0 0
        %3840 = vmatpush1.bf16.xpose.msra.mxu0 0
        %3841 = vmatprep.subr.bf16.mxu0 0
        %3842 = vmatpush1.bf16.xpose.msra.mxu0 0
        %3843 = vmatprep.subr.bf16.mxu0 0
        %3844 = vmatpush1.bf16.xpose.msra.mxu0 0
        %3845 = vmatprep.subr.bf16.mxu0 0
        %3846 = vmatpush1.bf16.xpose.msra.mxu0 0
        %3847 = vmatprep.subr.bf16.mxu0 0
        %3848 = vmatpush1.bf16.xpose.msra.mxu0 0
        %3849 = vmatprep.subr.bf16.mxu0 0
        %3850 = vmatpush1.bf16.xpose.msra.mxu0 0
        %3851 = vmatprep.subr.bf16.mxu0 0
        %3852 = vmatpush1.bf16.xpose.msra.mxu0 0
        %3853 = vmatprep.subr.bf16.mxu0 0
        %3854 = vmatpush1.bf16.xpose.msra.mxu0 0
        %3855 = vmatprep.subr.bf16.mxu0 0
        %3856 = vmatpush1.bf16.xpose.msra.mxu0 0
        %3857 = vmatprep.mubr.bf16.mxu0 %v3575
        %3858 = vmatmul.mubr.bf16.gmra.mrb[0].mxu0 %v3574
        %v3859 = vpop.f32.mrb[0].mxu0
        %v3860 = vadd.f32 %v3819, %v3859
        %v3861 = vpop.f32.mrb[0].mxu0
        %v3862 = vpop.f32.mrb[0].mxu0
        %v3863 = vadd.f32 %v3822, %v3862
        %v3864 = vpop.f32.mrb[0].mxu0
        %3865 = vdwg.mxu0
        %3866 = vmatprep.subr.bf16.mxu0 %v3725
        %3867 = vmatpush1.bf16.xpose.msra.mxu0 %v3724
        %3868 = vmatprep.subr.bf16.mxu0 %v3741
        %3869 = vmatpush1.bf16.xpose.msra.mxu0 %v3740
        %3870 = vmatprep.subr.bf16.mxu0 0
        %3871 = vmatpush1.bf16.xpose.msra.mxu0 0
        %3872 = vmatprep.subr.bf16.mxu0 0
        %3873 = vmatpush1.bf16.xpose.msra.mxu0 0
        %3874 = vmatprep.subr.bf16.mxu0 0
        %3875 = vmatpush1.bf16.xpose.msra.mxu0 0
        %3876 = vmatprep.subr.bf16.mxu0 0
        %3877 = vmatpush1.bf16.xpose.msra.mxu0 0
        %3878 = vmatprep.subr.bf16.mxu0 0
        %3879 = vmatpush1.bf16.xpose.msra.mxu0 0
        %3880 = vmatprep.subr.bf16.mxu0 0
        %3881 = vmatpush1.bf16.xpose.msra.mxu0 0
        %3882 = vmatprep.subr.bf16.mxu0 0
        %3883 = vmatpush1.bf16.xpose.msra.mxu0 0
        %3884 = vmatprep.subr.bf16.mxu0 0
        %3885 = vmatpush1.bf16.xpose.msra.mxu0 0
        %3886 = vmatprep.subr.bf16.mxu0 0
        %3887 = vmatpush1.bf16.xpose.msra.mxu0 0
        %3888 = vmatprep.subr.bf16.mxu0 0
        %3889 = vmatpush1.bf16.xpose.msra.mxu0 0
        %3890 = vmatprep.subr.bf16.mxu0 0
        %3891 = vmatpush1.bf16.xpose.msra.mxu0 0
        %3892 = vmatprep.subr.bf16.mxu0 0
        %3893 = vmatpush1.bf16.xpose.msra.mxu0 0
        %3894 = vmatprep.subr.bf16.mxu0 0
        %3895 = vmatpush1.bf16.xpose.msra.mxu0 0
        %3896 = vmatprep.subr.bf16.mxu0 0
        %3897 = vmatpush1.bf16.xpose.msra.mxu0 0
        %3898 = vmatprep.mubr.bf16.mxu0 %v3577
        %3899 = vmatmul.mubr.bf16.gmra.mrb[0].mxu0 %v3576
        %v3900 = vpop.f32.mrb[0].mxu0
        %v3901 = vadd.f32 %v3860, %v3900
        %v3902 = vpop.f32.mrb[0].mxu0
        %v3903 = vpop.f32.mrb[0].mxu0
        %v3904 = vadd.f32 %v3863, %v3903
        %v3905 = vpop.f32.mrb[0].mxu0
        %3906 = vdwg.mxu0
        %3907 = vmatprep.subr.bf16.mxu0 %v3727
        %3908 = vmatpush1.bf16.xpose.msra.mxu0 %v3726
        %3909 = vmatprep.subr.bf16.mxu0 %v3743
        %3910 = vmatpush1.bf16.xpose.msra.mxu0 %v3742
        %3911 = vmatprep.subr.bf16.mxu0 0
        %3912 = vmatpush1.bf16.xpose.msra.mxu0 0
        %3913 = vmatprep.subr.bf16.mxu0 0
        %3914 = vmatpush1.bf16.xpose.msra.mxu0 0
        %3915 = vmatprep.subr.bf16.mxu0 0
        %3916 = vmatpush1.bf16.xpose.msra.mxu0 0
        %3917 = vmatprep.subr.bf16.mxu0 0
        %3918 = vmatpush1.bf16.xpose.msra.mxu0 0
        %3919 = vmatprep.subr.bf16.mxu0 0
        %3920 = vmatpush1.bf16.xpose.msra.mxu0 0
        %3921 = vmatprep.subr.bf16.mxu0 0
        %3922 = vmatpush1.bf16.xpose.msra.mxu0 0
        %3923 = vmatprep.subr.bf16.mxu0 0
        %3924 = vmatpush1.bf16.xpose.msra.mxu0 0
        %3925 = vmatprep.subr.bf16.mxu0 0
        %3926 = vmatpush1.bf16.xpose.msra.mxu0 0
        %3927 = vmatprep.subr.bf16.mxu0 0
        %3928 = vmatpush1.bf16.xpose.msra.mxu0 0
        %3929 = vmatprep.subr.bf16.mxu0 0
        %3930 = vmatpush1.bf16.xpose.msra.mxu0 0
        %3931 = vmatprep.subr.bf16.mxu0 0
        %3932 = vmatpush1.bf16.xpose.msra.mxu0 0
        %3933 = vmatprep.subr.bf16.mxu0 0
        %3934 = vmatpush1.bf16.xpose.msra.mxu0 0
        %3935 = vmatprep.subr.bf16.mxu0 0
        %3936 = vmatpush1.bf16.xpose.msra.mxu0 0
        %3937 = vmatprep.subr.bf16.mxu0 0
        %3938 = vmatpush1.bf16.xpose.msra.mxu0 0
        %3939 = vmatprep.mubr.bf16.mxu0 %v3579
        %3940 = vmatmul.mubr.bf16.gmra.mrb[0].mxu0 %v3578
        %v3941 = vpop.f32.mrb[0].mxu0
        %v3942 = vadd.f32 %v3901, %v3941
        %v3943 = vpop.f32.mrb[0].mxu0
        %v3944 = vpop.f32.mrb[0].mxu0
        %v3945 = vadd.f32 %v3904, %v3944
        %v3946 = vpop.f32.mrb[0].mxu0
        %3947 = vdwg.mxu0
        %3948 = vmatprep.subr.bf16.mxu0 %v3729
        %3949 = vmatpush1.bf16.xpose.msra.mxu0 %v3728
        %3950 = vmatprep.subr.bf16.mxu0 %v3745
        %3951 = vmatpush1.bf16.xpose.msra.mxu0 %v3744
        %3952 = vmatprep.subr.bf16.mxu0 0
        %3953 = vmatpush1.bf16.xpose.msra.mxu0 0
        %3954 = vmatprep.subr.bf16.mxu0 0
        %3955 = vmatpush1.bf16.xpose.msra.mxu0 0
        %3956 = vmatprep.subr.bf16.mxu0 0
        %3957 = vmatpush1.bf16.xpose.msra.mxu0 0
        %3958 = vmatprep.subr.bf16.mxu0 0
        %3959 = vmatpush1.bf16.xpose.msra.mxu0 0
        %3960 = vmatprep.subr.bf16.mxu0 0
        %3961 = vmatpush1.bf16.xpose.msra.mxu0 0
        %3962 = vmatprep.subr.bf16.mxu0 0
        %3963 = vmatpush1.bf16.xpose.msra.mxu0 0
        %3964 = vmatprep.subr.bf16.mxu0 0
        %3965 = vmatpush1.bf16.xpose.msra.mxu0 0
        %3966 = vmatprep.subr.bf16.mxu0 0
        %3967 = vmatpush1.bf16.xpose.msra.mxu0 0
        %3968 = vmatprep.subr.bf16.mxu0 0
        %3969 = vmatpush1.bf16.xpose.msra.mxu0 0
        %3970 = vmatprep.subr.bf16.mxu0 0
        %3971 = vmatpush1.bf16.xpose.msra.mxu0 0
        %3972 = vmatprep.subr.bf16.mxu0 0
        %3973 = vmatpush1.bf16.xpose.msra.mxu0 0
        %3974 = vmatprep.subr.bf16.mxu0 0
        %3975 = vmatpush1.bf16.xpose.msra.mxu0 0
        %3976 = vmatprep.subr.bf16.mxu0 0
        %3977 = vmatpush1.bf16.xpose.msra.mxu0 0
        %3978 = vmatprep.subr.bf16.mxu0 0
        %3979 = vmatpush1.bf16.xpose.msra.mxu0 0
        %3980 = vmatprep.mubr.bf16.mxu0 %v3581
        %3981 = vmatmul.mubr.bf16.gmra.mrb[0].mxu0 %v3580
        %v3982 = vpop.f32.mrb[0].mxu0
        %v3983 = vadd.f32 %v3942, %v3982
        %v3984 = vpop.f32.mrb[0].mxu0
        %v3985 = vpop.f32.mrb[0].mxu0
        %v3986 = vadd.f32 %v3945, %v3985
        %v3987 = vpop.f32.mrb[0].mxu0
        %3988 = vdwg.mxu0
        %3989 = vmatprep.subr.bf16.mxu0 %v3731
        %3990 = vmatpush1.bf16.xpose.msra.mxu0 %v3730
        %3991 = vmatprep.subr.bf16.mxu0 %v3747
        %3992 = vmatpush1.bf16.xpose.msra.mxu0 %v3746
        %3993 = vmatprep.subr.bf16.mxu0 0
        %3994 = vmatpush1.bf16.xpose.msra.mxu0 0
        %3995 = vmatprep.subr.bf16.mxu0 0
        %3996 = vmatpush1.bf16.xpose.msra.mxu0 0
        %3997 = vmatprep.subr.bf16.mxu0 0
        %3998 = vmatpush1.bf16.xpose.msra.mxu0 0
        %3999 = vmatprep.subr.bf16.mxu0 0
        %4000 = vmatpush1.bf16.xpose.msra.mxu0 0
        %4001 = vmatprep.subr.bf16.mxu0 0
        %4002 = vmatpush1.bf16.xpose.msra.mxu0 0
        %4003 = vmatprep.subr.bf16.mxu0 0
        %4004 = vmatpush1.bf16.xpose.msra.mxu0 0
        %4005 = vmatprep.subr.bf16.mxu0 0
        %4006 = vmatpush1.bf16.xpose.msra.mxu0 0
        %4007 = vmatprep.subr.bf16.mxu0 0
        %4008 = vmatpush1.bf16.xpose.msra.mxu0 0
        %4009 = vmatprep.subr.bf16.mxu0 0
        %4010 = vmatpush1.bf16.xpose.msra.mxu0 0
        %4011 = vmatprep.subr.bf16.mxu0 0
        %4012 = vmatpush1.bf16.xpose.msra.mxu0 0
        %4013 = vmatprep.subr.bf16.mxu0 0
        %4014 = vmatpush1.bf16.xpose.msra.mxu0 0
        %4015 = vmatprep.subr.bf16.mxu0 0
        %4016 = vmatpush1.bf16.xpose.msra.mxu0 0
        %4017 = vmatprep.subr.bf16.mxu0 0
        %4018 = vmatpush1.bf16.xpose.msra.mxu0 0
        %4019 = vmatprep.subr.bf16.mxu0 0
        %4020 = vmatpush1.bf16.xpose.msra.mxu0 0
        %4021 = vmatprep.mubr.bf16.mxu0 %v3583
        %4022 = vmatmul.mubr.bf16.gmra.mrb[0].mxu0 %v3582
        %v4023 = vpop.f32.mrb[0].mxu0
        %v4024 = vadd.f32 %v3983, %v4023
        %v4025 = vpop.f32.mrb[0].mxu0
        %v4026 = vpop.f32.mrb[0].mxu0
        %v4027 = vadd.f32 %v3986, %v4026
        %v4028 = vpop.f32.mrb[0].mxu0
        %4029 = vdwg.mxu0
        %4030 = vmatprep.subr.bf16.mxu0 %v3733
        %4031 = vmatpush1.bf16.xpose.msra.mxu0 %v3732
        %4032 = vmatprep.subr.bf16.mxu0 %v3749
        %4033 = vmatpush1.bf16.xpose.msra.mxu0 %v3748
        %4034 = vmatprep.subr.bf16.mxu0 0
        %4035 = vmatpush1.bf16.xpose.msra.mxu0 0
        %4036 = vmatprep.subr.bf16.mxu0 0
        %4037 = vmatpush1.bf16.xpose.msra.mxu0 0
        %4038 = vmatprep.subr.bf16.mxu0 0
        %4039 = vmatpush1.bf16.xpose.msra.mxu0 0
        %4040 = vmatprep.subr.bf16.mxu0 0
        %4041 = vmatpush1.bf16.xpose.msra.mxu0 0
        %4042 = vmatprep.subr.bf16.mxu0 0
        %4043 = vmatpush1.bf16.xpose.msra.mxu0 0
        %4044 = vmatprep.subr.bf16.mxu0 0
        %4045 = vmatpush1.bf16.xpose.msra.mxu0 0
        %4046 = vmatprep.subr.bf16.mxu0 0
        %4047 = vmatpush1.bf16.xpose.msra.mxu0 0
        %4048 = vmatprep.subr.bf16.mxu0 0
        %4049 = vmatpush1.bf16.xpose.msra.mxu0 0
        %4050 = vmatprep.subr.bf16.mxu0 0
        %4051 = vmatpush1.bf16.xpose.msra.mxu0 0
        %4052 = vmatprep.subr.bf16.mxu0 0
        %4053 = vmatpush1.bf16.xpose.msra.mxu0 0
        %4054 = vmatprep.subr.bf16.mxu0 0
        %4055 = vmatpush1.bf16.xpose.msra.mxu0 0
        %4056 = vmatprep.subr.bf16.mxu0 0
        %4057 = vmatpush1.bf16.xpose.msra.mxu0 0
        %4058 = vmatprep.subr.bf16.mxu0 0
        %4059 = vmatpush1.bf16.xpose.msra.mxu0 0
        %4060 = vmatprep.subr.bf16.mxu0 0
        %4061 = vmatpush1.bf16.xpose.msra.mxu0 0
        %4062 = vmatprep.mubr.bf16.mxu0 %v3585
        %4063 = vmatmul.mubr.bf16.gmra.mrb[0].mxu0 %v3584
        %v4064 = vpop.f32.mrb[0].mxu0
        %v4065 = vadd.f32 %v4024, %v4064
        %v4066 = vpop.f32.mrb[0].mxu0
        %v4067 = vpop.f32.mrb[0].mxu0
        %v4068 = vadd.f32 %v4027, %v4067
        %v4069 = vpop.f32.mrb[0].mxu0
        %4070 = vdwg.mxu0
        %4071 = vmatprep.subr.bf16.mxu0 %v3735
        %4072 = vmatpush1.bf16.xpose.msra.mxu0 %v3734
        %4073 = vmatprep.subr.bf16.mxu0 %v3751
        %4074 = vmatpush1.bf16.xpose.msra.mxu0 %v3750
        %4075 = vmatprep.subr.bf16.mxu0 0
        %4076 = vmatpush1.bf16.xpose.msra.mxu0 0
        %4077 = vmatprep.subr.bf16.mxu0 0
        %4078 = vmatpush1.bf16.xpose.msra.mxu0 0
        %4079 = vmatprep.subr.bf16.mxu0 0
        %4080 = vmatpush1.bf16.xpose.msra.mxu0 0
        %4081 = vmatprep.subr.bf16.mxu0 0
        %4082 = vmatpush1.bf16.xpose.msra.mxu0 0
        %4083 = vmatprep.subr.bf16.mxu0 0
        %4084 = vmatpush1.bf16.xpose.msra.mxu0 0
        %4085 = vmatprep.subr.bf16.mxu0 0
        %4086 = vmatpush1.bf16.xpose.msra.mxu0 0
        %4087 = vmatprep.subr.bf16.mxu0 0
        %4088 = vmatpush1.bf16.xpose.msra.mxu0 0
        %4089 = vmatprep.subr.bf16.mxu0 0
        %4090 = vmatpush1.bf16.xpose.msra.mxu0 0
        %4091 = vmatprep.subr.bf16.mxu0 0
        %4092 = vmatpush1.bf16.xpose.msra.mxu0 0
        %4093 = vmatprep.subr.bf16.mxu0 0
        %4094 = vmatpush1.bf16.xpose.msra.mxu0 0
        %4095 = vmatprep.subr.bf16.mxu0 0
        %4096 = vmatpush1.bf16.xpose.msra.mxu0 0
        %4097 = vmatprep.subr.bf16.mxu0 0
        %4098 = vmatpush1.bf16.xpose.msra.mxu0 0
        %4099 = vmatprep.subr.bf16.mxu0 0
        %4100 = vmatpush1.bf16.xpose.msra.mxu0 0
        %4101 = vmatprep.subr.bf16.mxu0 0
        %4102 = vmatpush1.bf16.xpose.msra.mxu0 0
        %4103 = vmatprep.mubr.bf16.mxu0 %v3587
        %4104 = vmatmul.mubr.bf16.gmra.mrb[0].mxu0 %v3586
        %v4105 = vpop.f32.mrb[0].mxu0
        %v4106 = vadd.f32 %v4065, %v4105
        %v4107 = vpop.f32.mrb[0].mxu0
        %v4108 = vpop.f32.mrb[0].mxu0
        %v4109 = vadd.f32 %v4068, %v4108
        %v4110 = vpop.f32.mrb[0].mxu0
        %4111 = vdwg.mxu0
        %v4112 = vadd.f32 %v2914, %v4106
        %v4113 = vadd.f32 %v2915, %v4109
        %v4114 = vsel %vm581, %v4112, 0.0
        %4115 = vadd.xlane.f32.xlu0 %v4114
        %v4116 = vpop.xlane.xlu0 %4115
        %v4117 = vsel %vm581, %v4113, 0.0
        %4118 = vadd.xlane.f32.xlu0 %v4117
        %v4119 = vpop.xlane.xlu0 %4118
        %v4120 = vmul.f32 %v4116, %v2883
        %v4121 = vmul.f32 %v4119, %v2883
        %v4122 = vsub.f32 %v4112, %v4120
        %v4123 = vsub.f32 %v4113, %v4121
        %v4124 = vmul.f32 %v4122, %v4122
        %v4125 = vmul.f32 %v4123, %v4123
        %v4126 = vsel %vm581, %v4124, 0.0
        %4127 = vadd.xlane.f32.xlu0 %v4126
        %v4128 = vpop.xlane.xlu0 %4127
        %v4129 = vsel %vm581, %v4125, 0.0
        %4130 = vadd.xlane.f32.xlu0 %v4129
        %v4131 = vpop.xlane.xlu0 %4130
        %v4132 = vmul.f32 %v4128, %v2883
        %v4133 = vmul.f32 %v4131, %v2883
        %v4134 = vadd.f32 %v4132, 1e-05
        %v4135 = vadd.f32 %v4133, 1e-05
        %v4136 = vrsqrt.pop %v4134
        %v4137 = vrsqrt.pop %v4135
        %v4138 = vmul.f32 %v4122, %v4136
        %v4139 = vmul.f32 %v4123, %v4137
        %v4140 = vlaneseq
        %v4141 = vshrl.u32 %v4140, 7
        %v4142 = vsub.s32 4, %v4141
        %v4143 = vrot.slane %v556, %v4142
        %v4144 = vmul.f32 %v4138, %v4143
        %v4145 = vmul.f32 %v4139, %v4143
        %v4146 = vlaneseq
        %v4147 = vshrl.u32 %v4146, 7
        %v4148 = vsub.s32 5, %v4147
        %v4149 = vrot.slane %v556, %v4148
        %v4150 = vadd.f32 %v4144, %v4149
        %v4151 = vadd.f32 %v4145, %v4149
        %p4152 = scmp.lt.s32.totalorder %s33, 1
        // Predicated region
        $region81: #{tpu_custom_call.1} parent=55 // pred_check
          %p4153 = pneg %p4152
        $region82: #{tpu_custom_call.1} parent=55 // pred_check_branch
          %4155 = sbr.rel (%p4153) target = $region84
        $region83: #{tpu_custom_call.1} parent=55 // pred_region
          %4156 = vst.msk [vmem:[#allocation11] sm:$0xff] %vm581, %v4150
          %4157 = vst.msk [vmem:[#allocation11 + $0x8] sm:$0xff] %vm581, %v4151
        $region84: #{tpu_custom_call.1} parent=55 // pred_fallthru
          _
        %p4158 = scmp.eq.s32.totalorder %s33, 1
        // Predicated region
        $region85: #{tpu_custom_call.1} parent=55 // pred_check
          %p4159 = pneg %p4158
        $region86: #{tpu_custom_call.1} parent=55 // pred_check_branch
          %4161 = sbr.rel (%p4159) target = $region88
        $region87: #{tpu_custom_call.1} parent=55 // pred_region
          %v4162 = vld [vmem:[%s8] sm:$0x3]
          %v4163 = vsel %vm581, %v4150, 0.0
          %4164 = vadd.xlane.f32.xlu0 %v4163
          %v4165 = vpop.xlane.xlu0 %4164
          %v4166 = vsel %vm581, %v4151, 0.0
          %4167 = vadd.xlane.f32.xlu0 %v4166
          %v4168 = vpop.xlane.xlu0 %4167
          %v4169 = vmul.f32 %v4165, %v2883
          %v4170 = vmul.f32 %v4168, %v2883
          %v4171 = vsub.f32 %v4150, %v4169
          %v4172 = vsub.f32 %v4151, %v4170
          %v4173 = vmul.f32 %v4171, %v4171
          %v4174 = vmul.f32 %v4172, %v4172
          %v4175 = vsel %vm581, %v4173, 0.0
          %4176 = vadd.xlane.f32.xlu0 %v4175
          %v4177 = vpop.xlane.xlu0 %4176
          %v4178 = vsel %vm581, %v4174, 0.0
          %4179 = vadd.xlane.f32.xlu0 %v4178
          %v4180 = vpop.xlane.xlu0 %4179
          %v4181 = vmul.f32 %v4177, %v2883
          %v4182 = vmul.f32 %v4180, %v2883
          %v4183 = vadd.f32 %v4181, 1e-05
          %v4184 = vadd.f32 %v4182, 1e-05
          %v4185 = vrsqrt.pop %v4183
          %v4186 = vrsqrt.pop %v4184
          %v4187 = vmul.f32 %v4171, %v4185
          %v4188 = vmul.f32 %v4172, %v4186
          %v4189 = vlaneseq
          %v4190 = vshrl.u32 %v4189, 7
          %v4191 = vsub.s32 0, %v4190
          %v4192 = vrot.slane %v4162, %v4191
          %v4193 = vmul.f32 %v4187, %v4192
          %v4194 = vmul.f32 %v4188, %v4192
          %v4195 = vlaneseq
          %v4196 = vshrl.u32 %v4195, 7
          %v4197 = vsub.s32 1, %v4196
          %v4198 = vrot.slane %v4162, %v4197
          %v4199 = vadd.f32 %v4193, %v4198
          %v4200 = vadd.f32 %v4194, %v4198
          %4201 = vst.msk [vmem:[#allocation11] sm:$0xff] %vm581, %v4199
          %4202 = vst.msk [vmem:[#allocation11 + $0x8] sm:$0xff] %vm581, %v4200
        $region88: #{tpu_custom_call.1} parent=55 // pred_fallthru
          _
        // Predicated region
        $region89: #{tpu_custom_call.1} parent=55 // pred_check
          %p4203 = pneg %p287
        $region90: #{tpu_custom_call.1} parent=55 // pred_check_branch
          %4205 = sbr.rel (%p4203) target = $region92
        $region91: #{tpu_custom_call.1} parent=55 // pred_region
          %s4206 = smul.u32 2, %s32
          %s4208 = ssub.s32 256, 256
          %4209 = vsyncadd [#allocation4], %s4208
          %s4210 = smul.addr %s4206, 128
          %s4211 = scalar_lea.hbm %s9, %s4210
          %s4212 = sshll.u32 [#allocation11], 4
          %s4213 = int_to_ptr.vmem [resolvable:$true] %s4212
          %4218 = dma.vmem_to_hbm [thread:$0]  %s4213, 256, %s4211, [#allocation4], 128, 128, 8
        $region92: #{tpu_custom_call.1} parent=55 // pred_fallthru
          _
        // Predicated region
        $region93: #{tpu_custom_call.1} parent=55 // pred_check
          %p4219 = pneg %p287
        $region94: #{tpu_custom_call.1} parent=55 // pred_check_branch
          %4221 = sbr.rel (%p4219) target = $region96
        $region95: #{tpu_custom_call.1} parent=55 // pred_region
          %4222 = dma.done [#allocation4], 256
        $region96: #{tpu_custom_call.1} parent=55 // pred_fallthru
          _
      $region56: #{tpu_custom_call.1} parent=5 // pred_fallthru
        _
      %p4223 = scmp.le.s32.totalorder 2, %s23
      // Predicated region
      $region97: #{tpu_custom_call.1} parent=5 // pred_check
        %p4224 = pneg %p4223
      $region98: #{tpu_custom_call.1} parent=5 // pred_check_branch
        %4226 = sbr.rel (%p4224) target = $region100
      $region99: #{tpu_custom_call.1} parent=5 // pred_region
        %s4227 = ssub.s32 %s23, 2
      $region100: #{tpu_custom_call.1} parent=5 // pred_fallthru
        _
    $region6: #{tpu_custom_call.1} parent=1 // loop_footer
      %s27 = sadd.s32 1, %s23
    $region7: #{tpu_custom_call.1} parent=1 // loop_footer_branch
      %22 = sbr.rel target = $region3
    $region8: #{tpu_custom_call.1} parent=1 // loop_exit
      _
    %4228 = vsyncpa [#allocation3], 1
    %s4229 = scalar_lea.sflag [#allocation3], 1
    %4230 = vsyncpa %s4229, 1
    %4231 = vsyncpa [#allocation6], 1
    %s4232 = scalar_lea.sflag [#allocation6], 1
    %4233 = vsyncpa %s4232, 1
    %4234 = vsyncpa [#allocation9], 1
    %s4235 = scalar_lea.sflag [#allocation9], 1
    %4236 = vsyncpa %s4235, 1
    %4237 = vsyncpa [#allocation4], 1
    %s4238 = scalar_lea.sflag [#allocation4], 1
    %4239 = vsyncpa %s4238, 1

</llo_original>
